<compile_context>
chip_gen: v7x
topology: tpu7x:2x2x1
jax: 0.10.0
libtpu: 0.0.40
codegen_flags: <defaults>
</compile_context>

<pallas_src>
import jax
import jax.numpy as jnp
from jax.experimental import pallas as pl
from jax.experimental.pallas import tpu as pltpu


CONFIG = dict(num_classes=10, embedding_size=64, backbone_features=256)


# ----------------------------------------------------------------------------
# Single fused kernel: whole forward pass for one image per grid step.
# ----------------------------------------------------------------------------

def _net_kernel(xcol_ref, w1_ref, sb1_ref, w2_ref, sb2_ref, w3_ref, sb3_ref,
                w4_ref, sb4_ref, wh_ref, sbh_ref, wfc_ref, sbfc_ref,
                wcls_ref, bcls_ref, o_ref, buf2, buf3, buf4):
    """One image per grid step.

    xcol_ref : (1, ho*wo, 9*3)  bf16  stem im2col patches (built in wrapper)
    w*_ref   : (9*cin, cout)    bf16  tap-packed 3x3 conv weights
    sb*_ref  : (2, cout)        f32   folded BatchNorm (scale, shift)
    wh_ref   : (128, F)         bf16  1x1 conv_head weight
    sbh_ref  : (2, F)           f32   conv_head folded BatchNorm
    wfc_ref  : (F, E)           bf16  fc Linear weight
    sbfc_ref : (3, E)           f32   (fc bias, BN1d scale, BN1d shift)
    wcls_ref : (E, K)           bf16  classifier weight
    bcls_ref : (1, K)           f32   classifier bias
    o_ref    : (1, 1, K)        f32   logits
    buf2/3/4 : VMEM scratch holding zero-padded activations (h+2, w+2, c) f32
    """

    def bn_silu(y, sb_ref):
        y = y * sb_ref[0:1, :] + sb_ref[1:2, :]        # folded BatchNorm (f32)
        return y * jax.nn.sigmoid(y)                   # SiLU (EUP)

    def store_padded(dst_ref, y2d):
        # Write a (h*w, c) activation into the interior of a zero-padded
        # (h+2, w+2, c) scratch buffer (row-wise static stores only).
        hp, wp, _ = dst_ref.shape
        h, w = hp - 2, wp - 2
        dst_ref[...] = jnp.zeros(dst_ref.shape, dst_ref.dtype)
        for i in range(h):
            dst_ref[1 + i, 1:1 + w, :] = y2d[i * w:(i + 1) * w, :]

    def conv3x3_s2(src_ref, w_ref, sb_ref):
        # 3x3 / stride-2 / pad-1 conv as ONE MXU matmul with K = 9*cin.
        hp, wp, cin = src_ref.shape
        ho, wo = (hp - 2) // 2, (wp - 2) // 2
        taps = []
        for dj in range(3):
            # stride-2 column selection directly from the VMEM ref
            cols = src_ref[:, pl.ds(dj, wo, stride=2), :]     # (hp, wo, cin)
            cols = cols.reshape(ho + 1, 2, wo, cin)           # split leading dim
            for di in range(3):
                taps.append(cols[di // 2:di // 2 + ho, di % 2])   # (ho, wo, cin)
        patches = jnp.concatenate(taps, axis=-1)              # (ho, wo, 9*cin)
        patches = patches.reshape(ho * wo, 9 * cin).astype(jnp.bfloat16)
        y = jnp.dot(patches, w_ref[...], preferred_element_type=jnp.float32)
        return bn_silu(y, sb_ref)                              # (ho*wo, cout) f32

    # ---- layer 1 (conv_stem + BN + SiLU); im2col patches come from wrapper --
    y = jnp.dot(xcol_ref[0], w1_ref[...], preferred_element_type=jnp.float32)
    store_padded(buf2, bn_silu(y, sb1_ref))

    # ---- layers 2..3 (strided conv blocks) ----------------------------------
    store_padded(buf3, conv3x3_s2(buf2, w2_ref, sb2_ref))
    store_padded(buf4, conv3x3_s2(buf3, w3_ref, sb3_ref))

    # ---- layer 4 (head block) -----------------------------------------------
    y4 = conv3x3_s2(buf4, w4_ref, sb4_ref)                     # (hw, 128) f32

    # ---- conv_head (1x1) + BN + SiLU ----------------------------------------
    z = jnp.dot(y4.astype(jnp.bfloat16), wh_ref[...],
                preferred_element_type=jnp.float32)            # (hw, F)
    z = bn_silu(z, sbh_ref)

    # ---- global average pool (in-kernel mean, no pool matmul) ---------------
    feat = jnp.mean(z, axis=0, keepdims=True)                  # (1, F)

    # ---- fc: Linear + ReLU + BatchNorm1d ------------------------------------
    e = jnp.dot(feat.astype(jnp.bfloat16), wfc_ref[...],
                preferred_element_type=jnp.float32)            # (1, E)
    e = jnp.maximum(e + sbfc_ref[0:1, :], 0.0)
    e = e * sbfc_ref[1:2, :] + sbfc_ref[2:3, :]

    # ---- classifier ----------------------------------------------------------
    logits = jnp.dot(e.astype(jnp.bfloat16), wcls_ref[...],
                     preferred_element_type=jnp.float32)       # (1, K)
    o_ref[0] = logits + bcls_ref[...]


# ----------------------------------------------------------------------------
# Net: parameters (pre-transposed / pre-folded at init) + forward
# ----------------------------------------------------------------------------

def init_params(key):
    ks = jax.random.split(key, 16)

    def conv3x3_packed(k, cin, cout):
        # PyTorch-style OIHW weight; rows packed (kw, kh, cin) to match the
        # kernel's tap-concatenation order -> (9*cin, cout) bf16.
        w = 0.1 * jax.random.normal(k, (cout, cin, 3, 3), jnp.float32)
        w = jnp.transpose(w, (3, 2, 1, 0)).reshape(9 * cin, cout)
        return w.astype(jnp.bfloat16)

    def bn_sb(k, c):
        k1, k2 = jax.random.split(k)
        scale = 1.0 + 0.05 * jax.random.normal(k1, (c,), jnp.float32)
        shift = 0.05 * jax.random.normal(k2, (c,), jnp.float32)
        return jnp.stack([scale, shift], axis=0)                # (2, c) f32

    F = CONFIG["backbone_features"]
    E = CONFIG["embedding_size"]
    K = CONFIG["num_classes"]

    p = {}
    # back_layers: conv_stem + early blocks (simplified to strided 3x3 convs)
    p["w1"], p["sb1"] = conv3x3_packed(ks[0], 3, 16), bn_sb(ks[1], 16)
    p["w2"], p["sb2"] = conv3x3_packed(ks[2], 16, 32), bn_sb(ks[3], 32)
    p["w3"], p["sb3"] = conv3x3_packed(ks[4], 32, 64), bn_sb(ks[5], 64)
    # head_layers: remaining block (strided 3x3) + conv_head (1x1)
    p["w4"], p["sb4"] = conv3x3_packed(ks[6], 64, 128), bn_sb(ks[7], 128)
    wh = 0.1 * jax.random.normal(ks[8], (F, 128, 1, 1), jnp.float32)   # OIHW
    p["conv_head_w"] = jnp.transpose(wh[:, :, 0, 0], (1, 0)).astype(jnp.bfloat16)
    p["conv_head_sb"] = bn_sb(ks[9], F)

    # fc: Linear(F, E) -> ReLU -> BatchNorm1d
    wfc = 0.1 * jax.random.normal(ks[10], (F, E), jnp.float32)
    bfc = 0.05 * jax.random.normal(ks[11], (E,), jnp.float32)
    bn = bn_sb(ks[12], E)
    p["fc_w"] = wfc.astype(jnp.bfloat16)
    p["fc_sbb"] = jnp.stack([bfc, bn[0], bn[1]], axis=0)        # (3, E) f32

    # classifier: Linear(E, K)
    wcls = 0.1 * jax.random.normal(ks[13], (E, K), jnp.float32)
    bcls = 0.05 * jax.random.normal(ks[14], (K,), jnp.float32)
    p["cls_w"] = wcls.astype(jnp.bfloat16)
    p["cls_b"] = bcls.reshape(1, -1)                            # (1, K) f32
    return p


def net_forward(x_nchw, params):
    # NCHW (PyTorch) -> NHWC internally.
    N, C, H, W = x_nchw.shape
    assert H % 16 == 0 and W % 16 == 0
    x = jnp.transpose(x_nchw, (0, 2, 3, 1)).astype(jnp.float32)

    # Stem im2col in the wrapper: (N, ho*wo, 9*C) bf16, same tap order as the
    # packed weights (dj major, di, ci).  Input is tiny so this costs nothing.
    h1, w1 = H // 2, W // 2
    xp = jnp.pad(x, ((0, 0), (1, 1), (1, 1), (0, 0)))
    cols = [xp[:, di:di + 2 * h1:2, dj:dj + 2 * w1:2, :]
            for dj in range(3) for di in range(3)]
    patches = jnp.concatenate(cols, axis=-1).reshape(N, h1 * w1, 9 * C)
    patches = patches.astype(jnp.bfloat16)

    K = CONFIG["num_classes"]
    weights = (params["w1"], params["sb1"], params["w2"], params["sb2"],
               params["w3"], params["sb3"], params["w4"], params["sb4"],
               params["conv_head_w"], params["conv_head_sb"],
               params["fc_w"], params["fc_sbb"],
               params["cls_w"], params["cls_b"])

    out = pl.pallas_call(
        _net_kernel,
        out_shape=jax.ShapeDtypeStruct((N, 1, K), jnp.float32),
        grid=(N,),   # one image per step; "parallel" -> both v7x TensorCores
        in_specs=[pl.BlockSpec((1, h1 * w1, 9 * C), lambda b: (b, 0, 0))]
                 + [pl.BlockSpec(a.shape, lambda b: (0, 0)) for a in weights],
        out_specs=pl.BlockSpec((1, 1, K), lambda b: (b, 0, 0)),
        scratch_shapes=[
            pltpu.VMEM((H // 2 + 2, W // 2 + 2, 16), jnp.float32),
            pltpu.VMEM((H // 4 + 2, W // 4 + 2, 32), jnp.float32),
            pltpu.VMEM((H // 8 + 2, W // 8 + 2, 64), jnp.float32),
        ],
        compiler_params=pltpu.CompilerParams(
            dimension_semantics=("parallel",)),
    )(patches, *weights)
    return out.reshape(N, K)


if __name__ == "__main__":
    x = jax.random.normal(jax.random.PRNGKey(0), (2, 3, 32, 32), jnp.float32)
    params = init_params(jax.random.PRNGKey(1))

    logits = jax.block_until_ready(jax.jit(net_forward)(x, params))
    assert logits.shape == (2, CONFIG["num_classes"])
    assert bool(jnp.all(jnp.isfinite(logits)))
    print("KERNEL_OK")
</pallas_src>

<mosaic_0001>
module attributes {stable_mosaic.version = 11 : i64} {
  func.func @_net_kernel(%arg0: i32, %arg1: memref<1x256x27xbf16, #tpu.memory_space<vmem>>, %arg2: memref<27x16xbf16, #tpu.memory_space<vmem>>, %arg3: memref<2x16xf32, #tpu.memory_space<vmem>>, %arg4: memref<144x32xbf16, #tpu.memory_space<vmem>>, %arg5: memref<2x32xf32, #tpu.memory_space<vmem>>, %arg6: memref<288x64xbf16, #tpu.memory_space<vmem>>, %arg7: memref<2x64xf32, #tpu.memory_space<vmem>>, %arg8: memref<576x128xbf16, #tpu.memory_space<vmem>>, %arg9: memref<2x128xf32, #tpu.memory_space<vmem>>, %arg10: memref<128x256xbf16, #tpu.memory_space<vmem>>, %arg11: memref<2x256xf32, #tpu.memory_space<vmem>>, %arg12: memref<256x64xbf16, #tpu.memory_space<vmem>>, %arg13: memref<3x64xf32, #tpu.memory_space<vmem>>, %arg14: memref<64x10xbf16, #tpu.memory_space<vmem>>, %arg15: memref<1x10xf32, #tpu.memory_space<vmem>>, %arg16: memref<1x1x10xf32, #tpu.memory_space<vmem>>, %arg17: memref<18x18x16xf32, #tpu.memory_space<vmem>>, %arg18: memref<10x10x32xf32, #tpu.memory_space<vmem>>, %arg19: memref<6x6x64xf32, #tpu.memory_space<vmem>>) attributes {dimension_semantics = [#tpu.dimension_semantics<parallel>], iteration_bounds = array<i64: 2>, scalar_prefetch = 0 : i64, scratch_operands = 3 : i64, tpu.core_type = #tpu.core_type<tc>, window_params = [{transform_indices = @transform_0, window_bounds = array<i64: 1, 256, 27>}, {pipeline_mode = #tpu.pipeline_mode<synchronous>, transform_indices = @transform_1, window_bounds = array<i64: 27, 16>}, {pipeline_mode = #tpu.pipeline_mode<synchronous>, transform_indices = @transform_2, window_bounds = array<i64: 2, 16>}, {pipeline_mode = #tpu.pipeline_mode<synchronous>, transform_indices = @transform_3, window_bounds = array<i64: 144, 32>}, {pipeline_mode = #tpu.pipeline_mode<synchronous>, transform_indices = @transform_4, window_bounds = array<i64: 2, 32>}, {pipeline_mode = #tpu.pipeline_mode<synchronous>, transform_indices = @transform_5, window_bounds = array<i64: 288, 64>}, {pipeline_mode = #tpu.pipeline_mode<synchronous>, transform_indices = @transform_6, window_bounds = array<i64: 2, 64>}, {pipeline_mode = #tpu.pipeline_mode<synchronous>, transform_indices = @transform_7, window_bounds = array<i64: 576, 128>}, {pipeline_mode = #tpu.pipeline_mode<synchronous>, transform_indices = @transform_8, window_bounds = array<i64: 2, 128>}, {pipeline_mode = #tpu.pipeline_mode<synchronous>, transform_indices = @transform_9, window_bounds = array<i64: 128, 256>}, {pipeline_mode = #tpu.pipeline_mode<synchronous>, transform_indices = @transform_10, window_bounds = array<i64: 2, 256>}, {pipeline_mode = #tpu.pipeline_mode<synchronous>, transform_indices = @transform_11, window_bounds = array<i64: 256, 64>}, {pipeline_mode = #tpu.pipeline_mode<synchronous>, transform_indices = @transform_12, window_bounds = array<i64: 3, 64>}, {pipeline_mode = #tpu.pipeline_mode<synchronous>, transform_indices = @transform_13, window_bounds = array<i64: 64, 10>}, {pipeline_mode = #tpu.pipeline_mode<synchronous>, transform_indices = @transform_14, window_bounds = array<i64: 1, 10>}, {transform_indices = @transform_15, window_bounds = array<i64: 1, 1, 10>}]} {
    %c0 = arith.constant 0 : index
    %c0_0 = arith.constant 0 : index
    %c0_1 = arith.constant 0 : index
    %0 = vector.load %arg1[%c0, %c0_0, %c0_1] : memref<1x256x27xbf16, #tpu.memory_space<vmem>>, vector<1x256x27xbf16>
    %1 = vector.shape_cast %0 : vector<1x256x27xbf16> to vector<256x27xbf16>
    %c0_2 = arith.constant 0 : index
    %c0_3 = arith.constant 0 : index
    %2 = vector.load %arg2[%c0_2, %c0_3] : memref<27x16xbf16, #tpu.memory_space<vmem>>, vector<27x16xbf16>
    %cst = arith.constant dense<0.000000e+00> : vector<256x16xf32>
    %3 = tpu.matmul %1, %2, %cst {dimension_numbers = #tpu.dot_dimension_numbers<[1], [0], [0], [1], [0, 0, 1, 1], [], []>} : vector<256x27xbf16>, vector<27x16xbf16>, vector<256x16xf32> -> vector<256x16xf32>
    %c0_4 = arith.constant 0 : index
    %c0_5 = arith.constant 0 : index
    %4 = vector.load %arg3[%c0_4, %c0_5] : memref<2x16xf32, #tpu.memory_space<vmem>>, vector<1x16xf32>
    %5 = vector.broadcast %4 : vector<1x16xf32> to vector<256x16xf32>
    %6 = arith.mulf %3, %5 : vector<256x16xf32>
    %c1 = arith.constant 1 : index
    %c0_6 = arith.constant 0 : index
    %7 = vector.load %arg3[%c1, %c0_6] : memref<2x16xf32, #tpu.memory_space<vmem>>, vector<1x16xf32>
    %8 = vector.broadcast %7 : vector<1x16xf32> to vector<256x16xf32>
    %9 = arith.addf %6, %8 : vector<256x16xf32>
    %10 = arith.negf %9 : vector<256x16xf32>
    %11 = math.exp %10 : vector<256x16xf32>
    %cst_7 = arith.constant 1.000000e+00 : f32
    %12 = vector.broadcast %cst_7 : f32 to vector<256x16xf32>
    %13 = arith.addf %12, %11 : vector<256x16xf32>
    %14 = arith.divf %12, %13 : vector<256x16xf32>
    %15 = arith.mulf %9, %14 : vector<256x16xf32>
    %cst_8 = arith.constant 0.000000e+00 : f32
    %16 = vector.broadcast %cst_8 : f32 to vector<18x18x16xf32>
    %c0_9 = arith.constant 0 : index
    %c0_10 = arith.constant 0 : index
    %c0_11 = arith.constant 0 : index
    %17 = vector.load %arg17[%c0_9, %c0_10, %c0_11] : memref<18x18x16xf32, #tpu.memory_space<vmem>>, vector<18x18x16xf32>
    tpu.vector_store %arg17[%c0_9, %c0_10, %c0_11], %16 {strides = array<i32>} : memref<18x18x16xf32, #tpu.memory_space<vmem>>, vector<18x18x16xf32>,
    %18 = vector.extract_strided_slice %15 {offsets = [0, 0], sizes = [16, 16], strides = [1, 1]} : vector<256x16xf32> to vector<16x16xf32>
    %c1_12 = arith.constant 1 : index
    %c1_13 = arith.constant 1 : index
    %c0_14 = arith.constant 0 : index
    %19 = vector.load %arg17[%c1_12, %c1_13, %c0_14] : memref<18x18x16xf32, #tpu.memory_space<vmem>>, vector<1x16x16xf32>
    %20 = vector.shape_cast %19 : vector<1x16x16xf32> to vector<16x16xf32>
    %21 = vector.shape_cast %18 : vector<16x16xf32> to vector<1x16x16xf32>
    tpu.vector_store %arg17[%c1_12, %c1_13, %c0_14], %21 {strides = array<i32>} : memref<18x18x16xf32, #tpu.memory_space<vmem>>, vector<1x16x16xf32>,
    %22 = vector.extract_strided_slice %15 {offsets = [16, 0], sizes = [16, 16], strides = [1, 1]} : vector<256x16xf32> to vector<16x16xf32>
    %c2 = arith.constant 2 : index
    %c1_15 = arith.constant 1 : index
    %c0_16 = arith.constant 0 : index
    %23 = vector.load %arg17[%c2, %c1_15, %c0_16] : memref<18x18x16xf32, #tpu.memory_space<vmem>>, vector<1x16x16xf32>
    %24 = vector.shape_cast %23 : vector<1x16x16xf32> to vector<16x16xf32>
    %25 = vector.shape_cast %22 : vector<16x16xf32> to vector<1x16x16xf32>
    tpu.vector_store %arg17[%c2, %c1_15, %c0_16], %25 {strides = array<i32>} : memref<18x18x16xf32, #tpu.memory_space<vmem>>, vector<1x16x16xf32>,
    %26 = vector.extract_strided_slice %15 {offsets = [32, 0], sizes = [16, 16], strides = [1, 1]} : vector<256x16xf32> to vector<16x16xf32>
    %c3 = arith.constant 3 : index
    %c1_17 = arith.constant 1 : index
    %c0_18 = arith.constant 0 : index
    %27 = vector.load %arg17[%c3, %c1_17, %c0_18] : memref<18x18x16xf32, #tpu.memory_space<vmem>>, vector<1x16x16xf32>
    %28 = vector.shape_cast %27 : vector<1x16x16xf32> to vector<16x16xf32>
    %29 = vector.shape_cast %26 : vector<16x16xf32> to vector<1x16x16xf32>
    tpu.vector_store %arg17[%c3, %c1_17, %c0_18], %29 {strides = array<i32>} : memref<18x18x16xf32, #tpu.memory_space<vmem>>, vector<1x16x16xf32>,
    %30 = vector.extract_strided_slice %15 {offsets = [48, 0], sizes = [16, 16], strides = [1, 1]} : vector<256x16xf32> to vector<16x16xf32>
    %c4 = arith.constant 4 : index
    %c1_19 = arith.constant 1 : index
    %c0_20 = arith.constant 0 : index
    %31 = vector.load %arg17[%c4, %c1_19, %c0_20] : memref<18x18x16xf32, #tpu.memory_space<vmem>>, vector<1x16x16xf32>
    %32 = vector.shape_cast %31 : vector<1x16x16xf32> to vector<16x16xf32>
    %33 = vector.shape_cast %30 : vector<16x16xf32> to vector<1x16x16xf32>
    tpu.vector_store %arg17[%c4, %c1_19, %c0_20], %33 {strides = array<i32>} : memref<18x18x16xf32, #tpu.memory_space<vmem>>, vector<1x16x16xf32>,
    %34 = vector.extract_strided_slice %15 {offsets = [64, 0], sizes = [16, 16], strides = [1, 1]} : vector<256x16xf32> to vector<16x16xf32>
    %c5 = arith.constant 5 : index
    %c1_21 = arith.constant 1 : index
    %c0_22 = arith.constant 0 : index
    %35 = vector.load %arg17[%c5, %c1_21, %c0_22] : memref<18x18x16xf32, #tpu.memory_space<vmem>>, vector<1x16x16xf32>
    %36 = vector.shape_cast %35 : vector<1x16x16xf32> to vector<16x16xf32>
    %37 = vector.shape_cast %34 : vector<16x16xf32> to vector<1x16x16xf32>
    tpu.vector_store %arg17[%c5, %c1_21, %c0_22], %37 {strides = array<i32>} : memref<18x18x16xf32, #tpu.memory_space<vmem>>, vector<1x16x16xf32>,
    %38 = vector.extract_strided_slice %15 {offsets = [80, 0], sizes = [16, 16], strides = [1, 1]} : vector<256x16xf32> to vector<16x16xf32>
    %c6 = arith.constant 6 : index
    %c1_23 = arith.constant 1 : index
    %c0_24 = arith.constant 0 : index
    %39 = vector.load %arg17[%c6, %c1_23, %c0_24] : memref<18x18x16xf32, #tpu.memory_space<vmem>>, vector<1x16x16xf32>
    %40 = vector.shape_cast %39 : vector<1x16x16xf32> to vector<16x16xf32>
    %41 = vector.shape_cast %38 : vector<16x16xf32> to vector<1x16x16xf32>
    tpu.vector_store %arg17[%c6, %c1_23, %c0_24], %41 {strides = array<i32>} : memref<18x18x16xf32, #tpu.memory_space<vmem>>, vector<1x16x16xf32>,
    %42 = vector.extract_strided_slice %15 {offsets = [96, 0], sizes = [16, 16], strides = [1, 1]} : vector<256x16xf32> to vector<16x16xf32>
    %c7 = arith.constant 7 : index
    %c1_25 = arith.constant 1 : index
    %c0_26 = arith.constant 0 : index
    %43 = vector.load %arg17[%c7, %c1_25, %c0_26] : memref<18x18x16xf32, #tpu.memory_space<vmem>>, vector<1x16x16xf32>
    %44 = vector.shape_cast %43 : vector<1x16x16xf32> to vector<16x16xf32>
    %45 = vector.shape_cast %42 : vector<16x16xf32> to vector<1x16x16xf32>
    tpu.vector_store %arg17[%c7, %c1_25, %c0_26], %45 {strides = array<i32>} : memref<18x18x16xf32, #tpu.memory_space<vmem>>, vector<1x16x16xf32>,
    %46 = vector.extract_strided_slice %15 {offsets = [112, 0], sizes = [16, 16], strides = [1, 1]} : vector<256x16xf32> to vector<16x16xf32>
    %c8 = arith.constant 8 : index
    %c1_27 = arith.constant 1 : index
    %c0_28 = arith.constant 0 : index
    %47 = vector.load %arg17[%c8, %c1_27, %c0_28] : memref<18x18x16xf32, #tpu.memory_space<vmem>>, vector<1x16x16xf32>
    %48 = vector.shape_cast %47 : vector<1x16x16xf32> to vector<16x16xf32>
    %49 = vector.shape_cast %46 : vector<16x16xf32> to vector<1x16x16xf32>
    tpu.vector_store %arg17[%c8, %c1_27, %c0_28], %49 {strides = array<i32>} : memref<18x18x16xf32, #tpu.memory_space<vmem>>, vector<1x16x16xf32>,
    %50 = vector.extract_strided_slice %15 {offsets = [128, 0], sizes = [16, 16], strides = [1, 1]} : vector<256x16xf32> to vector<16x16xf32>
    %c9 = arith.constant 9 : index
    %c1_29 = arith.constant 1 : index
    %c0_30 = arith.constant 0 : index
    %51 = vector.load %arg17[%c9, %c1_29, %c0_30] : memref<18x18x16xf32, #tpu.memory_space<vmem>>, vector<1x16x16xf32>
    %52 = vector.shape_cast %51 : vector<1x16x16xf32> to vector<16x16xf32>
    %53 = vector.shape_cast %50 : vector<16x16xf32> to vector<1x16x16xf32>
    tpu.vector_store %arg17[%c9, %c1_29, %c0_30], %53 {strides = array<i32>} : memref<18x18x16xf32, #tpu.memory_space<vmem>>, vector<1x16x16xf32>,
    %54 = vector.extract_strided_slice %15 {offsets = [144, 0], sizes = [16, 16], strides = [1, 1]} : vector<256x16xf32> to vector<16x16xf32>
    %c10 = arith.constant 10 : index
    %c1_31 = arith.constant 1 : index
    %c0_32 = arith.constant 0 : index
    %55 = vector.load %arg17[%c10, %c1_31, %c0_32] : memref<18x18x16xf32, #tpu.memory_space<vmem>>, vector<1x16x16xf32>
    %56 = vector.shape_cast %55 : vector<1x16x16xf32> to vector<16x16xf32>
    %57 = vector.shape_cast %54 : vector<16x16xf32> to vector<1x16x16xf32>
    tpu.vector_store %arg17[%c10, %c1_31, %c0_32], %57 {strides = array<i32>} : memref<18x18x16xf32, #tpu.memory_space<vmem>>, vector<1x16x16xf32>,
    %58 = vector.extract_strided_slice %15 {offsets = [160, 0], sizes = [16, 16], strides = [1, 1]} : vector<256x16xf32> to vector<16x16xf32>
    %c11 = arith.constant 11 : index
    %c1_33 = arith.constant 1 : index
    %c0_34 = arith.constant 0 : index
    %59 = vector.load %arg17[%c11, %c1_33, %c0_34] : memref<18x18x16xf32, #tpu.memory_space<vmem>>, vector<1x16x16xf32>
    %60 = vector.shape_cast %59 : vector<1x16x16xf32> to vector<16x16xf32>
    %61 = vector.shape_cast %58 : vector<16x16xf32> to vector<1x16x16xf32>
    tpu.vector_store %arg17[%c11, %c1_33, %c0_34], %61 {strides = array<i32>} : memref<18x18x16xf32, #tpu.memory_space<vmem>>, vector<1x16x16xf32>,
    %62 = vector.extract_strided_slice %15 {offsets = [176, 0], sizes = [16, 16], strides = [1, 1]} : vector<256x16xf32> to vector<16x16xf32>
    %c12 = arith.constant 12 : index
    %c1_35 = arith.constant 1 : index
    %c0_36 = arith.constant 0 : index
    %63 = vector.load %arg17[%c12, %c1_35, %c0_36] : memref<18x18x16xf32, #tpu.memory_space<vmem>>, vector<1x16x16xf32>
    %64 = vector.shape_cast %63 : vector<1x16x16xf32> to vector<16x16xf32>
    %65 = vector.shape_cast %62 : vector<16x16xf32> to vector<1x16x16xf32>
    tpu.vector_store %arg17[%c12, %c1_35, %c0_36], %65 {strides = array<i32>} : memref<18x18x16xf32, #tpu.memory_space<vmem>>, vector<1x16x16xf32>,
    %66 = vector.extract_strided_slice %15 {offsets = [192, 0], sizes = [16, 16], strides = [1, 1]} : vector<256x16xf32> to vector<16x16xf32>
    %c13 = arith.constant 13 : index
    %c1_37 = arith.constant 1 : index
    %c0_38 = arith.constant 0 : index
    %67 = vector.load %arg17[%c13, %c1_37, %c0_38] : memref<18x18x16xf32, #tpu.memory_space<vmem>>, vector<1x16x16xf32>
    %68 = vector.shape_cast %67 : vector<1x16x16xf32> to vector<16x16xf32>
    %69 = vector.shape_cast %66 : vector<16x16xf32> to vector<1x16x16xf32>
    tpu.vector_store %arg17[%c13, %c1_37, %c0_38], %69 {strides = array<i32>} : memref<18x18x16xf32, #tpu.memory_space<vmem>>, vector<1x16x16xf32>,
    %70 = vector.extract_strided_slice %15 {offsets = [208, 0], sizes = [16, 16], strides = [1, 1]} : vector<256x16xf32> to vector<16x16xf32>
    %c14 = arith.constant 14 : index
    %c1_39 = arith.constant 1 : index
    %c0_40 = arith.constant 0 : index
    %71 = vector.load %arg17[%c14, %c1_39, %c0_40] : memref<18x18x16xf32, #tpu.memory_space<vmem>>, vector<1x16x16xf32>
    %72 = vector.shape_cast %71 : vector<1x16x16xf32> to vector<16x16xf32>
    %73 = vector.shape_cast %70 : vector<16x16xf32> to vector<1x16x16xf32>
    tpu.vector_store %arg17[%c14, %c1_39, %c0_40], %73 {strides = array<i32>} : memref<18x18x16xf32, #tpu.memory_space<vmem>>, vector<1x16x16xf32>,
    %74 = vector.extract_strided_slice %15 {offsets = [224, 0], sizes = [16, 16], strides = [1, 1]} : vector<256x16xf32> to vector<16x16xf32>
    %c15 = arith.constant 15 : index
    %c1_41 = arith.constant 1 : index
    %c0_42 = arith.constant 0 : index
    %75 = vector.load %arg17[%c15, %c1_41, %c0_42] : memref<18x18x16xf32, #tpu.memory_space<vmem>>, vector<1x16x16xf32>
    %76 = vector.shape_cast %75 : vector<1x16x16xf32> to vector<16x16xf32>
    %77 = vector.shape_cast %74 : vector<16x16xf32> to vector<1x16x16xf32>
    tpu.vector_store %arg17[%c15, %c1_41, %c0_42], %77 {strides = array<i32>} : memref<18x18x16xf32, #tpu.memory_space<vmem>>, vector<1x16x16xf32>,
    %78 = vector.extract_strided_slice %15 {offsets = [240, 0], sizes = [16, 16], strides = [1, 1]} : vector<256x16xf32> to vector<16x16xf32>
    %c16 = arith.constant 16 : index
    %c1_43 = arith.constant 1 : index
    %c0_44 = arith.constant 0 : index
    %79 = vector.load %arg17[%c16, %c1_43, %c0_44] : memref<18x18x16xf32, #tpu.memory_space<vmem>>, vector<1x16x16xf32>
    %80 = vector.shape_cast %79 : vector<1x16x16xf32> to vector<16x16xf32>
    %81 = vector.shape_cast %78 : vector<16x16xf32> to vector<1x16x16xf32>
    tpu.vector_store %arg17[%c16, %c1_43, %c0_44], %81 {strides = array<i32>} : memref<18x18x16xf32, #tpu.memory_space<vmem>>, vector<1x16x16xf32>,
    %c0_45 = arith.constant 0 : index
    %c0_46 = arith.constant 0 : index
    %c0_47 = arith.constant 0 : index
    %82 = tpu.strided_load %arg17[%c0_45, %c0_46, %c0_47] {strides = array<i32: 1, 2, 1>} : memref<18x18x16xf32, #tpu.memory_space<vmem>>, vector<18x8x16xf32>
    %83 = vector.shape_cast %82 : vector<18x8x16xf32> to vector<9x2x8x16xf32>
    %84 = vector.extract_strided_slice %83 {offsets = [0, 0, 0, 0], sizes = [8, 1, 8, 16], strides = [1, 1, 1, 1]} : vector<9x2x8x16xf32> to vector<8x1x8x16xf32>
    %85 = vector.shape_cast %84 : vector<8x1x8x16xf32> to vector<8x8x16xf32>
    %86 = vector.extract_strided_slice %83 {offsets = [0, 1, 0, 0], sizes = [8, 1, 8, 16], strides = [1, 1, 1, 1]} : vector<9x2x8x16xf32> to vector<8x1x8x16xf32>
    %87 = vector.shape_cast %86 : vector<8x1x8x16xf32> to vector<8x8x16xf32>
    %88 = vector.extract_strided_slice %83 {offsets = [1, 0, 0, 0], sizes = [8, 1, 8, 16], strides = [1, 1, 1, 1]} : vector<9x2x8x16xf32> to vector<8x1x8x16xf32>
    %89 = vector.shape_cast %88 : vector<8x1x8x16xf32> to vector<8x8x16xf32>
    %c0_48 = arith.constant 0 : index
    %c1_49 = arith.constant 1 : index
    %c0_50 = arith.constant 0 : index
    %90 = tpu.strided_load %arg17[%c0_48, %c1_49, %c0_50] {strides = array<i32: 1, 2, 1>} : memref<18x18x16xf32, #tpu.memory_space<vmem>>, vector<18x8x16xf32>
    %91 = vector.shape_cast %90 : vector<18x8x16xf32> to vector<9x2x8x16xf32>
    %92 = vector.extract_strided_slice %91 {offsets = [0, 0, 0, 0], sizes = [8, 1, 8, 16], strides = [1, 1, 1, 1]} : vector<9x2x8x16xf32> to vector<8x1x8x16xf32>
    %93 = vector.shape_cast %92 : vector<8x1x8x16xf32> to vector<8x8x16xf32>
    %94 = vector.extract_strided_slice %91 {offsets = [0, 1, 0, 0], sizes = [8, 1, 8, 16], strides = [1, 1, 1, 1]} : vector<9x2x8x16xf32> to vector<8x1x8x16xf32>
    %95 = vector.shape_cast %94 : vector<8x1x8x16xf32> to vector<8x8x16xf32>
    %96 = vector.extract_strided_slice %91 {offsets = [1, 0, 0, 0], sizes = [8, 1, 8, 16], strides = [1, 1, 1, 1]} : vector<9x2x8x16xf32> to vector<8x1x8x16xf32>
    %97 = vector.shape_cast %96 : vector<8x1x8x16xf32> to vector<8x8x16xf32>
    %c0_51 = arith.constant 0 : index
    %c2_52 = arith.constant 2 : index
    %c0_53 = arith.constant 0 : index
    %98 = tpu.strided_load %arg17[%c0_51, %c2_52, %c0_53] {strides = array<i32: 1, 2, 1>} : memref<18x18x16xf32, #tpu.memory_space<vmem>>, vector<18x8x16xf32>
    %99 = vector.shape_cast %98 : vector<18x8x16xf32> to vector<9x2x8x16xf32>
    %100 = vector.extract_strided_slice %99 {offsets = [0, 0, 0, 0], sizes = [8, 1, 8, 16], strides = [1, 1, 1, 1]} : vector<9x2x8x16xf32> to vector<8x1x8x16xf32>
    %101 = vector.shape_cast %100 : vector<8x1x8x16xf32> to vector<8x8x16xf32>
    %102 = vector.extract_strided_slice %99 {offsets = [0, 1, 0, 0], sizes = [8, 1, 8, 16], strides = [1, 1, 1, 1]} : vector<9x2x8x16xf32> to vector<8x1x8x16xf32>
    %103 = vector.shape_cast %102 : vector<8x1x8x16xf32> to vector<8x8x16xf32>
    %104 = vector.extract_strided_slice %99 {offsets = [1, 0, 0, 0], sizes = [8, 1, 8, 16], strides = [1, 1, 1, 1]} : vector<9x2x8x16xf32> to vector<8x1x8x16xf32>
    %105 = vector.shape_cast %104 : vector<8x1x8x16xf32> to vector<8x8x16xf32>
    %106 = tpu.concatenate %85, %87, %89, %93, %95, %97, %101, %103, %105 in 2 : vector<8x8x16xf32>, vector<8x8x16xf32>, vector<8x8x16xf32>, vector<8x8x16xf32>, vector<8x8x16xf32>, vector<8x8x16xf32>, vector<8x8x16xf32>, vector<8x8x16xf32>, vector<8x8x16xf32> -> vector<8x8x144xf32>
    %107 = vector.shape_cast %106 : vector<8x8x144xf32> to vector<64x144xf32>
    %108 = arith.truncf %107 : vector<64x144xf32> to vector<64x144xbf16>
    %c0_54 = arith.constant 0 : index
    %c0_55 = arith.constant 0 : index
    %109 = vector.load %arg4[%c0_54, %c0_55] : memref<144x32xbf16, #tpu.memory_space<vmem>>, vector<144x32xbf16>
    %cst_56 = arith.constant dense<0.000000e+00> : vector<64x32xf32>
    %110 = tpu.matmul %108, %109, %cst_56 {dimension_numbers = #tpu.dot_dimension_numbers<[1], [0], [0], [1], [0, 0, 1, 1], [], []>} : vector<64x144xbf16>, vector<144x32xbf16>, vector<64x32xf32> -> vector<64x32xf32>
    %c0_57 = arith.constant 0 : index
    %c0_58 = arith.constant 0 : index
    %111 = vector.load %arg5[%c0_57, %c0_58] : memref<2x32xf32, #tpu.memory_space<vmem>>, vector<1x32xf32>
    %112 = vector.broadcast %111 : vector<1x32xf32> to vector<64x32xf32>
    %113 = arith.mulf %110, %112 : vector<64x32xf32>
    %c1_59 = arith.constant 1 : index
    %c0_60 = arith.constant 0 : index
    %114 = vector.load %arg5[%c1_59, %c0_60] : memref<2x32xf32, #tpu.memory_space<vmem>>, vector<1x32xf32>
    %115 = vector.broadcast %114 : vector<1x32xf32> to vector<64x32xf32>
    %116 = arith.addf %113, %115 : vector<64x32xf32>
    %117 = arith.negf %116 : vector<64x32xf32>
    %118 = math.exp %117 : vector<64x32xf32>
    %cst_61 = arith.constant 1.000000e+00 : f32
    %119 = vector.broadcast %cst_61 : f32 to vector<64x32xf32>
    %120 = arith.addf %119, %118 : vector<64x32xf32>
    %121 = arith.divf %119, %120 : vector<64x32xf32>
    %122 = arith.mulf %116, %121 : vector<64x32xf32>
    %cst_62 = arith.constant 0.000000e+00 : f32
    %123 = vector.broadcast %cst_62 : f32 to vector<10x10x32xf32>
    %c0_63 = arith.constant 0 : index
    %c0_64 = arith.constant 0 : index
    %c0_65 = arith.constant 0 : index
    %124 = vector.load %arg18[%c0_63, %c0_64, %c0_65] : memref<10x10x32xf32, #tpu.memory_space<vmem>>, vector<10x10x32xf32>
    tpu.vector_store %arg18[%c0_63, %c0_64, %c0_65], %123 {strides = array<i32>} : memref<10x10x32xf32, #tpu.memory_space<vmem>>, vector<10x10x32xf32>,
    %125 = vector.extract_strided_slice %122 {offsets = [0, 0], sizes = [8, 32], strides = [1, 1]} : vector<64x32xf32> to vector<8x32xf32>
    %c1_66 = arith.constant 1 : index
    %c1_67 = arith.constant 1 : index
    %c0_68 = arith.constant 0 : index
    %126 = vector.load %arg18[%c1_66, %c1_67, %c0_68] : memref<10x10x32xf32, #tpu.memory_space<vmem>>, vector<1x8x32xf32>
    %127 = vector.shape_cast %126 : vector<1x8x32xf32> to vector<8x32xf32>
    %128 = vector.shape_cast %125 : vector<8x32xf32> to vector<1x8x32xf32>
    tpu.vector_store %arg18[%c1_66, %c1_67, %c0_68], %128 {strides = array<i32>} : memref<10x10x32xf32, #tpu.memory_space<vmem>>, vector<1x8x32xf32>,
    %129 = vector.extract_strided_slice %122 {offsets = [8, 0], sizes = [8, 32], strides = [1, 1]} : vector<64x32xf32> to vector<8x32xf32>
    %c2_69 = arith.constant 2 : index
    %c1_70 = arith.constant 1 : index
    %c0_71 = arith.constant 0 : index
    %130 = vector.load %arg18[%c2_69, %c1_70, %c0_71] : memref<10x10x32xf32, #tpu.memory_space<vmem>>, vector<1x8x32xf32>
    %131 = vector.shape_cast %130 : vector<1x8x32xf32> to vector<8x32xf32>
    %132 = vector.shape_cast %129 : vector<8x32xf32> to vector<1x8x32xf32>
    tpu.vector_store %arg18[%c2_69, %c1_70, %c0_71], %132 {strides = array<i32>} : memref<10x10x32xf32, #tpu.memory_space<vmem>>, vector<1x8x32xf32>,
    %133 = vector.extract_strided_slice %122 {offsets = [16, 0], sizes = [8, 32], strides = [1, 1]} : vector<64x32xf32> to vector<8x32xf32>
    %c3_72 = arith.constant 3 : index
    %c1_73 = arith.constant 1 : index
    %c0_74 = arith.constant 0 : index
    %134 = vector.load %arg18[%c3_72, %c1_73, %c0_74] : memref<10x10x32xf32, #tpu.memory_space<vmem>>, vector<1x8x32xf32>
    %135 = vector.shape_cast %134 : vector<1x8x32xf32> to vector<8x32xf32>
    %136 = vector.shape_cast %133 : vector<8x32xf32> to vector<1x8x32xf32>
    tpu.vector_store %arg18[%c3_72, %c1_73, %c0_74], %136 {strides = array<i32>} : memref<10x10x32xf32, #tpu.memory_space<vmem>>, vector<1x8x32xf32>,
    %137 = vector.extract_strided_slice %122 {offsets = [24, 0], sizes = [8, 32], strides = [1, 1]} : vector<64x32xf32> to vector<8x32xf32>
    %c4_75 = arith.constant 4 : index
    %c1_76 = arith.constant 1 : index
    %c0_77 = arith.constant 0 : index
    %138 = vector.load %arg18[%c4_75, %c1_76, %c0_77] : memref<10x10x32xf32, #tpu.memory_space<vmem>>, vector<1x8x32xf32>
    %139 = vector.shape_cast %138 : vector<1x8x32xf32> to vector<8x32xf32>
    %140 = vector.shape_cast %137 : vector<8x32xf32> to vector<1x8x32xf32>
    tpu.vector_store %arg18[%c4_75, %c1_76, %c0_77], %140 {strides = array<i32>} : memref<10x10x32xf32, #tpu.memory_space<vmem>>, vector<1x8x32xf32>,
    %141 = vector.extract_strided_slice %122 {offsets = [32, 0], sizes = [8, 32], strides = [1, 1]} : vector<64x32xf32> to vector<8x32xf32>
    %c5_78 = arith.constant 5 : index
    %c1_79 = arith.constant 1 : index
    %c0_80 = arith.constant 0 : index
    %142 = vector.load %arg18[%c5_78, %c1_79, %c0_80] : memref<10x10x32xf32, #tpu.memory_space<vmem>>, vector<1x8x32xf32>
    %143 = vector.shape_cast %142 : vector<1x8x32xf32> to vector<8x32xf32>
    %144 = vector.shape_cast %141 : vector<8x32xf32> to vector<1x8x32xf32>
    tpu.vector_store %arg18[%c5_78, %c1_79, %c0_80], %144 {strides = array<i32>} : memref<10x10x32xf32, #tpu.memory_space<vmem>>, vector<1x8x32xf32>,
    %145 = vector.extract_strided_slice %122 {offsets = [40, 0], sizes = [8, 32], strides = [1, 1]} : vector<64x32xf32> to vector<8x32xf32>
    %c6_81 = arith.constant 6 : index
    %c1_82 = arith.constant 1 : index
    %c0_83 = arith.constant 0 : index
    %146 = vector.load %arg18[%c6_81, %c1_82, %c0_83] : memref<10x10x32xf32, #tpu.memory_space<vmem>>, vector<1x8x32xf32>
    %147 = vector.shape_cast %146 : vector<1x8x32xf32> to vector<8x32xf32>
    %148 = vector.shape_cast %145 : vector<8x32xf32> to vector<1x8x32xf32>
    tpu.vector_store %arg18[%c6_81, %c1_82, %c0_83], %148 {strides = array<i32>} : memref<10x10x32xf32, #tpu.memory_space<vmem>>, vector<1x8x32xf32>,
    %149 = vector.extract_strided_slice %122 {offsets = [48, 0], sizes = [8, 32], strides = [1, 1]} : vector<64x32xf32> to vector<8x32xf32>
    %c7_84 = arith.constant 7 : index
    %c1_85 = arith.constant 1 : index
    %c0_86 = arith.constant 0 : index
    %150 = vector.load %arg18[%c7_84, %c1_85, %c0_86] : memref<10x10x32xf32, #tpu.memory_space<vmem>>, vector<1x8x32xf32>
    %151 = vector.shape_cast %150 : vector<1x8x32xf32> to vector<8x32xf32>
    %152 = vector.shape_cast %149 : vector<8x32xf32> to vector<1x8x32xf32>
    tpu.vector_store %arg18[%c7_84, %c1_85, %c0_86], %152 {strides = array<i32>} : memref<10x10x32xf32, #tpu.memory_space<vmem>>, vector<1x8x32xf32>,
    %153 = vector.extract_strided_slice %122 {offsets = [56, 0], sizes = [8, 32], strides = [1, 1]} : vector<64x32xf32> to vector<8x32xf32>
    %c8_87 = arith.constant 8 : index
    %c1_88 = arith.constant 1 : index
    %c0_89 = arith.constant 0 : index
    %154 = vector.load %arg18[%c8_87, %c1_88, %c0_89] : memref<10x10x32xf32, #tpu.memory_space<vmem>>, vector<1x8x32xf32>
    %155 = vector.shape_cast %154 : vector<1x8x32xf32> to vector<8x32xf32>
    %156 = vector.shape_cast %153 : vector<8x32xf32> to vector<1x8x32xf32>
    tpu.vector_store %arg18[%c8_87, %c1_88, %c0_89], %156 {strides = array<i32>} : memref<10x10x32xf32, #tpu.memory_space<vmem>>, vector<1x8x32xf32>,
    %c0_90 = arith.constant 0 : index
    %c0_91 = arith.constant 0 : index
    %c0_92 = arith.constant 0 : index
    %157 = tpu.strided_load %arg18[%c0_90, %c0_91, %c0_92] {strides = array<i32: 1, 2, 1>} : memref<10x10x32xf32, #tpu.memory_space<vmem>>, vector<10x4x32xf32>
    %158 = vector.shape_cast %157 : vector<10x4x32xf32> to vector<5x2x4x32xf32>
    %159 = vector.extract_strided_slice %158 {offsets = [0, 0, 0, 0], sizes = [4, 1, 4, 32], strides = [1, 1, 1, 1]} : vector<5x2x4x32xf32> to vector<4x1x4x32xf32>
    %160 = vector.shape_cast %159 : vector<4x1x4x32xf32> to vector<4x4x32xf32>
    %161 = vector.extract_strided_slice %158 {offsets = [0, 1, 0, 0], sizes = [4, 1, 4, 32], strides = [1, 1, 1, 1]} : vector<5x2x4x32xf32> to vector<4x1x4x32xf32>
    %162 = vector.shape_cast %161 : vector<4x1x4x32xf32> to vector<4x4x32xf32>
    %163 = vector.extract_strided_slice %158 {offsets = [1, 0, 0, 0], sizes = [4, 1, 4, 32], strides = [1, 1, 1, 1]} : vector<5x2x4x32xf32> to vector<4x1x4x32xf32>
    %164 = vector.shape_cast %163 : vector<4x1x4x32xf32> to vector<4x4x32xf32>
    %c0_93 = arith.constant 0 : index
    %c1_94 = arith.constant 1 : index
    %c0_95 = arith.constant 0 : index
    %165 = tpu.strided_load %arg18[%c0_93, %c1_94, %c0_95] {strides = array<i32: 1, 2, 1>} : memref<10x10x32xf32, #tpu.memory_space<vmem>>, vector<10x4x32xf32>
    %166 = vector.shape_cast %165 : vector<10x4x32xf32> to vector<5x2x4x32xf32>
    %167 = vector.extract_strided_slice %166 {offsets = [0, 0, 0, 0], sizes = [4, 1, 4, 32], strides = [1, 1, 1, 1]} : vector<5x2x4x32xf32> to vector<4x1x4x32xf32>
    %168 = vector.shape_cast %167 : vector<4x1x4x32xf32> to vector<4x4x32xf32>
    %169 = vector.extract_strided_slice %166 {offsets = [0, 1, 0, 0], sizes = [4, 1, 4, 32], strides = [1, 1, 1, 1]} : vector<5x2x4x32xf32> to vector<4x1x4x32xf32>
    %170 = vector.shape_cast %169 : vector<4x1x4x32xf32> to vector<4x4x32xf32>
    %171 = vector.extract_strided_slice %166 {offsets = [1, 0, 0, 0], sizes = [4, 1, 4, 32], strides = [1, 1, 1, 1]} : vector<5x2x4x32xf32> to vector<4x1x4x32xf32>
    %172 = vector.shape_cast %171 : vector<4x1x4x32xf32> to vector<4x4x32xf32>
    %c0_96 = arith.constant 0 : index
    %c2_97 = arith.constant 2 : index
    %c0_98 = arith.constant 0 : index
    %173 = tpu.strided_load %arg18[%c0_96, %c2_97, %c0_98] {strides = array<i32: 1, 2, 1>} : memref<10x10x32xf32, #tpu.memory_space<vmem>>, vector<10x4x32xf32>
    %174 = vector.shape_cast %173 : vector<10x4x32xf32> to vector<5x2x4x32xf32>
    %175 = vector.extract_strided_slice %174 {offsets = [0, 0, 0, 0], sizes = [4, 1, 4, 32], strides = [1, 1, 1, 1]} : vector<5x2x4x32xf32> to vector<4x1x4x32xf32>
    %176 = vector.shape_cast %175 : vector<4x1x4x32xf32> to vector<4x4x32xf32>
    %177 = vector.extract_strided_slice %174 {offsets = [0, 1, 0, 0], sizes = [4, 1, 4, 32], strides = [1, 1, 1, 1]} : vector<5x2x4x32xf32> to vector<4x1x4x32xf32>
    %178 = vector.shape_cast %177 : vector<4x1x4x32xf32> to vector<4x4x32xf32>
    %179 = vector.extract_strided_slice %174 {offsets = [1, 0, 0, 0], sizes = [4, 1, 4, 32], strides = [1, 1, 1, 1]} : vector<5x2x4x32xf32> to vector<4x1x4x32xf32>
    %180 = vector.shape_cast %179 : vector<4x1x4x32xf32> to vector<4x4x32xf32>
    %181 = tpu.concatenate %160, %162, %164, %168, %170, %172, %176, %178, %180 in 2 : vector<4x4x32xf32>, vector<4x4x32xf32>, vector<4x4x32xf32>, vector<4x4x32xf32>, vector<4x4x32xf32>, vector<4x4x32xf32>, vector<4x4x32xf32>, vector<4x4x32xf32>, vector<4x4x32xf32> -> vector<4x4x288xf32>
    %182 = vector.shape_cast %181 : vector<4x4x288xf32> to vector<16x288xf32>
    %183 = arith.truncf %182 : vector<16x288xf32> to vector<16x288xbf16>
    %c0_99 = arith.constant 0 : index
    %c0_100 = arith.constant 0 : index
    %184 = vector.load %arg6[%c0_99, %c0_100] : memref<288x64xbf16, #tpu.memory_space<vmem>>, vector<288x64xbf16>
    %cst_101 = arith.constant dense<0.000000e+00> : vector<16x64xf32>
    %185 = tpu.matmul %183, %184, %cst_101 {dimension_numbers = #tpu.dot_dimension_numbers<[1], [0], [0], [1], [0, 0, 1, 1], [], []>} : vector<16x288xbf16>, vector<288x64xbf16>, vector<16x64xf32> -> vector<16x64xf32>
    %c0_102 = arith.constant 0 : index
    %c0_103 = arith.constant 0 : index
    %186 = vector.load %arg7[%c0_102, %c0_103] : memref<2x64xf32, #tpu.memory_space<vmem>>, vector<1x64xf32>
    %187 = vector.broadcast %186 : vector<1x64xf32> to vector<16x64xf32>
    %188 = arith.mulf %185, %187 : vector<16x64xf32>
    %c1_104 = arith.constant 1 : index
    %c0_105 = arith.constant 0 : index
    %189 = vector.load %arg7[%c1_104, %c0_105] : memref<2x64xf32, #tpu.memory_space<vmem>>, vector<1x64xf32>
    %190 = vector.broadcast %189 : vector<1x64xf32> to vector<16x64xf32>
    %191 = arith.addf %188, %190 : vector<16x64xf32>
    %192 = arith.negf %191 : vector<16x64xf32>
    %193 = math.exp %192 : vector<16x64xf32>
    %cst_106 = arith.constant 1.000000e+00 : f32
    %194 = vector.broadcast %cst_106 : f32 to vector<16x64xf32>
    %195 = arith.addf %194, %193 : vector<16x64xf32>
    %196 = arith.divf %194, %195 : vector<16x64xf32>
    %197 = arith.mulf %191, %196 : vector<16x64xf32>
    %cst_107 = arith.constant 0.000000e+00 : f32
    %198 = vector.broadcast %cst_107 : f32 to vector<6x6x64xf32>
    %c0_108 = arith.constant 0 : index
    %c0_109 = arith.constant 0 : index
    %c0_110 = arith.constant 0 : index
    %199 = vector.load %arg19[%c0_108, %c0_109, %c0_110] : memref<6x6x64xf32, #tpu.memory_space<vmem>>, vector<6x6x64xf32>
    tpu.vector_store %arg19[%c0_108, %c0_109, %c0_110], %198 {strides = array<i32>} : memref<6x6x64xf32, #tpu.memory_space<vmem>>, vector<6x6x64xf32>,
    %200 = vector.extract_strided_slice %197 {offsets = [0, 0], sizes = [4, 64], strides = [1, 1]} : vector<16x64xf32> to vector<4x64xf32>
    %c1_111 = arith.constant 1 : index
    %c1_112 = arith.constant 1 : index
    %c0_113 = arith.constant 0 : index
    %201 = vector.load %arg19[%c1_111, %c1_112, %c0_113] : memref<6x6x64xf32, #tpu.memory_space<vmem>>, vector<1x4x64xf32>
    %202 = vector.shape_cast %201 : vector<1x4x64xf32> to vector<4x64xf32>
    %203 = vector.shape_cast %200 : vector<4x64xf32> to vector<1x4x64xf32>
    tpu.vector_store %arg19[%c1_111, %c1_112, %c0_113], %203 {strides = array<i32>} : memref<6x6x64xf32, #tpu.memory_space<vmem>>, vector<1x4x64xf32>,
    %204 = vector.extract_strided_slice %197 {offsets = [4, 0], sizes = [4, 64], strides = [1, 1]} : vector<16x64xf32> to vector<4x64xf32>
    %c2_114 = arith.constant 2 : index
    %c1_115 = arith.constant 1 : index
    %c0_116 = arith.constant 0 : index
    %205 = vector.load %arg19[%c2_114, %c1_115, %c0_116] : memref<6x6x64xf32, #tpu.memory_space<vmem>>, vector<1x4x64xf32>
    %206 = vector.shape_cast %205 : vector<1x4x64xf32> to vector<4x64xf32>
    %207 = vector.shape_cast %204 : vector<4x64xf32> to vector<1x4x64xf32>
    tpu.vector_store %arg19[%c2_114, %c1_115, %c0_116], %207 {strides = array<i32>} : memref<6x6x64xf32, #tpu.memory_space<vmem>>, vector<1x4x64xf32>,
    %208 = vector.extract_strided_slice %197 {offsets = [8, 0], sizes = [4, 64], strides = [1, 1]} : vector<16x64xf32> to vector<4x64xf32>
    %c3_117 = arith.constant 3 : index
    %c1_118 = arith.constant 1 : index
    %c0_119 = arith.constant 0 : index
    %209 = vector.load %arg19[%c3_117, %c1_118, %c0_119] : memref<6x6x64xf32, #tpu.memory_space<vmem>>, vector<1x4x64xf32>
    %210 = vector.shape_cast %209 : vector<1x4x64xf32> to vector<4x64xf32>
    %211 = vector.shape_cast %208 : vector<4x64xf32> to vector<1x4x64xf32>
    tpu.vector_store %arg19[%c3_117, %c1_118, %c0_119], %211 {strides = array<i32>} : memref<6x6x64xf32, #tpu.memory_space<vmem>>, vector<1x4x64xf32>,
    %212 = vector.extract_strided_slice %197 {offsets = [12, 0], sizes = [4, 64], strides = [1, 1]} : vector<16x64xf32> to vector<4x64xf32>
    %c4_120 = arith.constant 4 : index
    %c1_121 = arith.constant 1 : index
    %c0_122 = arith.constant 0 : index
    %213 = vector.load %arg19[%c4_120, %c1_121, %c0_122] : memref<6x6x64xf32, #tpu.memory_space<vmem>>, vector<1x4x64xf32>
    %214 = vector.shape_cast %213 : vector<1x4x64xf32> to vector<4x64xf32>
    %215 = vector.shape_cast %212 : vector<4x64xf32> to vector<1x4x64xf32>
    tpu.vector_store %arg19[%c4_120, %c1_121, %c0_122], %215 {strides = array<i32>} : memref<6x6x64xf32, #tpu.memory_space<vmem>>, vector<1x4x64xf32>,
    %c0_123 = arith.constant 0 : index
    %c0_124 = arith.constant 0 : index
    %c0_125 = arith.constant 0 : index
    %216 = tpu.strided_load %arg19[%c0_123, %c0_124, %c0_125] {strides = array<i32: 1, 2, 1>} : memref<6x6x64xf32, #tpu.memory_space<vmem>>, vector<6x2x64xf32>
    %217 = vector.shape_cast %216 : vector<6x2x64xf32> to vector<3x2x2x64xf32>
    %218 = vector.extract_strided_slice %217 {offsets = [0, 0, 0, 0], sizes = [2, 1, 2, 64], strides = [1, 1, 1, 1]} : vector<3x2x2x64xf32> to vector<2x1x2x64xf32>
    %219 = vector.shape_cast %218 : vector<2x1x2x64xf32> to vector<2x2x64xf32>
    %220 = vector.extract_strided_slice %217 {offsets = [0, 1, 0, 0], sizes = [2, 1, 2, 64], strides = [1, 1, 1, 1]} : vector<3x2x2x64xf32> to vector<2x1x2x64xf32>
    %221 = vector.shape_cast %220 : vector<2x1x2x64xf32> to vector<2x2x64xf32>
    %222 = vector.extract_strided_slice %217 {offsets = [1, 0, 0, 0], sizes = [2, 1, 2, 64], strides = [1, 1, 1, 1]} : vector<3x2x2x64xf32> to vector<2x1x2x64xf32>
    %223 = vector.shape_cast %222 : vector<2x1x2x64xf32> to vector<2x2x64xf32>
    %c0_126 = arith.constant 0 : index
    %c1_127 = arith.constant 1 : index
    %c0_128 = arith.constant 0 : index
    %224 = tpu.strided_load %arg19[%c0_126, %c1_127, %c0_128] {strides = array<i32: 1, 2, 1>} : memref<6x6x64xf32, #tpu.memory_space<vmem>>, vector<6x2x64xf32>
    %225 = vector.shape_cast %224 : vector<6x2x64xf32> to vector<3x2x2x64xf32>
    %226 = vector.extract_strided_slice %225 {offsets = [0, 0, 0, 0], sizes = [2, 1, 2, 64], strides = [1, 1, 1, 1]} : vector<3x2x2x64xf32> to vector<2x1x2x64xf32>
    %227 = vector.shape_cast %226 : vector<2x1x2x64xf32> to vector<2x2x64xf32>
    %228 = vector.extract_strided_slice %225 {offsets = [0, 1, 0, 0], sizes = [2, 1, 2, 64], strides = [1, 1, 1, 1]} : vector<3x2x2x64xf32> to vector<2x1x2x64xf32>
    %229 = vector.shape_cast %228 : vector<2x1x2x64xf32> to vector<2x2x64xf32>
    %230 = vector.extract_strided_slice %225 {offsets = [1, 0, 0, 0], sizes = [2, 1, 2, 64], strides = [1, 1, 1, 1]} : vector<3x2x2x64xf32> to vector<2x1x2x64xf32>
    %231 = vector.shape_cast %230 : vector<2x1x2x64xf32> to vector<2x2x64xf32>
    %c0_129 = arith.constant 0 : index
    %c2_130 = arith.constant 2 : index
    %c0_131 = arith.constant 0 : index
    %232 = tpu.strided_load %arg19[%c0_129, %c2_130, %c0_131] {strides = array<i32: 1, 2, 1>} : memref<6x6x64xf32, #tpu.memory_space<vmem>>, vector<6x2x64xf32>
    %233 = vector.shape_cast %232 : vector<6x2x64xf32> to vector<3x2x2x64xf32>
    %234 = vector.extract_strided_slice %233 {offsets = [0, 0, 0, 0], sizes = [2, 1, 2, 64], strides = [1, 1, 1, 1]} : vector<3x2x2x64xf32> to vector<2x1x2x64xf32>
    %235 = vector.shape_cast %234 : vector<2x1x2x64xf32> to vector<2x2x64xf32>
    %236 = vector.extract_strided_slice %233 {offsets = [0, 1, 0, 0], sizes = [2, 1, 2, 64], strides = [1, 1, 1, 1]} : vector<3x2x2x64xf32> to vector<2x1x2x64xf32>
    %237 = vector.shape_cast %236 : vector<2x1x2x64xf32> to vector<2x2x64xf32>
    %238 = vector.extract_strided_slice %233 {offsets = [1, 0, 0, 0], sizes = [2, 1, 2, 64], strides = [1, 1, 1, 1]} : vector<3x2x2x64xf32> to vector<2x1x2x64xf32>
    %239 = vector.shape_cast %238 : vector<2x1x2x64xf32> to vector<2x2x64xf32>
    %240 = tpu.concatenate %219, %221, %223, %227, %229, %231, %235, %237, %239 in 2 : vector<2x2x64xf32>, vector<2x2x64xf32>, vector<2x2x64xf32>, vector<2x2x64xf32>, vector<2x2x64xf32>, vector<2x2x64xf32>, vector<2x2x64xf32>, vector<2x2x64xf32>, vector<2x2x64xf32> -> vector<2x2x576xf32>
    %241 = vector.shape_cast %240 : vector<2x2x576xf32> to vector<4x576xf32>
    %242 = arith.truncf %241 : vector<4x576xf32> to vector<4x576xbf16>
    %c0_132 = arith.constant 0 : index
    %c0_133 = arith.constant 0 : index
    %243 = vector.load %arg8[%c0_132, %c0_133] : memref<576x128xbf16, #tpu.memory_space<vmem>>, vector<576x128xbf16>
    %cst_134 = arith.constant dense<0.000000e+00> : vector<4x128xf32>
    %244 = tpu.matmul %242, %243, %cst_134 {dimension_numbers = #tpu.dot_dimension_numbers<[1], [0], [0], [1], [0, 0, 1, 1], [], []>} : vector<4x576xbf16>, vector<576x128xbf16>, vector<4x128xf32> -> vector<4x128xf32>
    %c0_135 = arith.constant 0 : index
    %c0_136 = arith.constant 0 : index
    %245 = vector.load %arg9[%c0_135, %c0_136] : memref<2x128xf32, #tpu.memory_space<vmem>>, vector<1x128xf32>
    %246 = vector.broadcast %245 : vector<1x128xf32> to vector<4x128xf32>
    %247 = arith.mulf %244, %246 : vector<4x128xf32>
    %c1_137 = arith.constant 1 : index
    %c0_138 = arith.constant 0 : index
    %248 = vector.load %arg9[%c1_137, %c0_138] : memref<2x128xf32, #tpu.memory_space<vmem>>, vector<1x128xf32>
    %249 = vector.broadcast %248 : vector<1x128xf32> to vector<4x128xf32>
    %250 = arith.addf %247, %249 : vector<4x128xf32>
    %251 = arith.negf %250 : vector<4x128xf32>
    %252 = math.exp %251 : vector<4x128xf32>
    %cst_139 = arith.constant 1.000000e+00 : f32
    %253 = vector.broadcast %cst_139 : f32 to vector<4x128xf32>
    %254 = arith.addf %253, %252 : vector<4x128xf32>
    %255 = arith.divf %253, %254 : vector<4x128xf32>
    %256 = arith.mulf %250, %255 : vector<4x128xf32>
    %257 = arith.truncf %256 : vector<4x128xf32> to vector<4x128xbf16>
    %c0_140 = arith.constant 0 : index
    %c0_141 = arith.constant 0 : index
    %258 = vector.load %arg10[%c0_140, %c0_141] : memref<128x256xbf16, #tpu.memory_space<vmem>>, vector<128x256xbf16>
    %cst_142 = arith.constant dense<0.000000e+00> : vector<4x256xf32>
    %259 = tpu.matmul %257, %258, %cst_142 {dimension_numbers = #tpu.dot_dimension_numbers<[1], [0], [0], [1], [0, 0, 1, 1], [], []>} : vector<4x128xbf16>, vector<128x256xbf16>, vector<4x256xf32> -> vector<4x256xf32>
    %c0_143 = arith.constant 0 : index
    %c0_144 = arith.constant 0 : index
    %260 = vector.load %arg11[%c0_143, %c0_144] : memref<2x256xf32, #tpu.memory_space<vmem>>, vector<1x256xf32>
    %261 = vector.broadcast %260 : vector<1x256xf32> to vector<4x256xf32>
    %262 = arith.mulf %259, %261 : vector<4x256xf32>
    %c1_145 = arith.constant 1 : index
    %c0_146 = arith.constant 0 : index
    %263 = vector.load %arg11[%c1_145, %c0_146] : memref<2x256xf32, #tpu.memory_space<vmem>>, vector<1x256xf32>
    %264 = vector.broadcast %263 : vector<1x256xf32> to vector<4x256xf32>
    %265 = arith.addf %262, %264 : vector<4x256xf32>
    %266 = arith.negf %265 : vector<4x256xf32>
    %267 = math.exp %266 : vector<4x256xf32>
    %cst_147 = arith.constant 1.000000e+00 : f32
    %268 = vector.broadcast %cst_147 : f32 to vector<4x256xf32>
    %269 = arith.addf %268, %267 : vector<4x256xf32>
    %270 = arith.divf %268, %269 : vector<4x256xf32>
    %271 = arith.mulf %265, %270 : vector<4x256xf32>
    %cst_148 = arith.constant dense<0.000000e+00> : vector<256xf32>
    %272 = vector.multi_reduction <add>, %271, %cst_148 [0] : vector<4x256xf32> to vector<256xf32>
    %273 = vector.shape_cast %272 : vector<256xf32> to vector<1x256xf32>
    %cst_149 = arith.constant 4.000000e+00 : f32
    %274 = vector.broadcast %cst_149 : f32 to vector<1x256xf32>
    %275 = arith.divf %273, %274 : vector<1x256xf32>
    %276 = arith.truncf %275 : vector<1x256xf32> to vector<1x256xbf16>
    %c0_150 = arith.constant 0 : index
    %c0_151 = arith.constant 0 : index
    %277 = vector.load %arg12[%c0_150, %c0_151] : memref<256x64xbf16, #tpu.memory_space<vmem>>, vector<256x64xbf16>
    %cst_152 = arith.constant dense<0.000000e+00> : vector<1x64xf32>
    %278 = tpu.matmul %276, %277, %cst_152 {dimension_numbers = #tpu.dot_dimension_numbers<[1], [0], [0], [1], [0, 0, 1, 1], [], []>} : vector<1x256xbf16>, vector<256x64xbf16>, vector<1x64xf32> -> vector<1x64xf32>
    %c0_153 = arith.constant 0 : index
    %c0_154 = arith.constant 0 : index
    %279 = vector.load %arg13[%c0_153, %c0_154] : memref<3x64xf32, #tpu.memory_space<vmem>>, vector<1x64xf32>
    %280 = arith.addf %278, %279 : vector<1x64xf32>
    %cst_155 = arith.constant 0.000000e+00 : f32
    %281 = vector.broadcast %cst_155 : f32 to vector<1x64xf32>
    %282 = arith.maximumf %280, %281 : vector<1x64xf32>
    %c1_156 = arith.constant 1 : index
    %c0_157 = arith.constant 0 : index
    %283 = vector.load %arg13[%c1_156, %c0_157] : memref<3x64xf32, #tpu.memory_space<vmem>>, vector<1x64xf32>
    %284 = arith.mulf %282, %283 : vector<1x64xf32>
    %c2_158 = arith.constant 2 : index
    %c0_159 = arith.constant 0 : index
    %285 = vector.load %arg13[%c2_158, %c0_159] : memref<3x64xf32, #tpu.memory_space<vmem>>, vector<1x64xf32>
    %286 = arith.addf %284, %285 : vector<1x64xf32>
    %287 = arith.truncf %286 : vector<1x64xf32> to vector<1x64xbf16>
    %c0_160 = arith.constant 0 : index
    %c0_161 = arith.constant 0 : index
    %288 = vector.load %arg14[%c0_160, %c0_161] : memref<64x10xbf16, #tpu.memory_space<vmem>>, vector<64x10xbf16>
    %cst_162 = arith.constant dense<0.000000e+00> : vector<1x10xf32>
    %289 = tpu.matmul %287, %288, %cst_162 {dimension_numbers = #tpu.dot_dimension_numbers<[1], [0], [0], [1], [0, 0, 1, 1], [], []>} : vector<1x64xbf16>, vector<64x10xbf16>, vector<1x10xf32> -> vector<1x10xf32>
    %c0_163 = arith.constant 0 : index
    %c0_164 = arith.constant 0 : index
    %290 = vector.load %arg15[%c0_163, %c0_164] : memref<1x10xf32, #tpu.memory_space<vmem>>, vector<1x10xf32>
    %291 = arith.addf %289, %290 : vector<1x10xf32>
    %c0_165 = arith.constant 0 : index
    %c0_166 = arith.constant 0 : index
    %c0_167 = arith.constant 0 : index
    %292 = vector.load %arg16[%c0_165, %c0_166, %c0_167] : memref<1x1x10xf32, #tpu.memory_space<vmem>>, vector<1x1x10xf32>
    %293 = vector.shape_cast %292 : vector<1x1x10xf32> to vector<1x10xf32>
    %294 = vector.shape_cast %291 : vector<1x10xf32> to vector<1x1x10xf32>
    tpu.vector_store %arg16[%c0_165, %c0_166, %c0_167], %294 {strides = array<i32>} : memref<1x1x10xf32, #tpu.memory_space<vmem>>, vector<1x1x10xf32>,
    return
  }
  func.func @transform_0(%arg0: i32) -> (i32, i32, i32) {
    %c0_i32 = arith.constant 0 : i32
    %c0_i32_0 = arith.constant 0 : i32
    %c0_i32_1 = arith.constant 0 : i32
    return %arg0, %c0_i32, %c0_i32_0 : i32, i32, i32
  }
  func.func @transform_1(%arg0: i32) -> (i32, i32) {
    %c0_i32 = arith.constant 0 : i32
    %c0_i32_0 = arith.constant 0 : i32
    %c0_i32_1 = arith.constant 0 : i32
    return %c0_i32, %c0_i32_0 : i32, i32
  }
  func.func @transform_2(%arg0: i32) -> (i32, i32) {
    %c0_i32 = arith.constant 0 : i32
    %c0_i32_0 = arith.constant 0 : i32
    %c0_i32_1 = arith.constant 0 : i32
    return %c0_i32, %c0_i32_0 : i32, i32
  }
  func.func @transform_3(%arg0: i32) -> (i32, i32) {
    %c0_i32 = arith.constant 0 : i32
    %c0_i32_0 = arith.constant 0 : i32
    %c0_i32_1 = arith.constant 0 : i32
    return %c0_i32, %c0_i32_0 : i32, i32
  }
  func.func @transform_4(%arg0: i32) -> (i32, i32) {
    %c0_i32 = arith.constant 0 : i32
    %c0_i32_0 = arith.constant 0 : i32
    %c0_i32_1 = arith.constant 0 : i32
    return %c0_i32, %c0_i32_0 : i32, i32
  }
  func.func @transform_5(%arg0: i32) -> (i32, i32) {
    %c0_i32 = arith.constant 0 : i32
    %c0_i32_0 = arith.constant 0 : i32
    %c0_i32_1 = arith.constant 0 : i32
    return %c0_i32, %c0_i32_0 : i32, i32
  }
  func.func @transform_6(%arg0: i32) -> (i32, i32) {
    %c0_i32 = arith.constant 0 : i32
    %c0_i32_0 = arith.constant 0 : i32
    %c0_i32_1 = arith.constant 0 : i32
    return %c0_i32, %c0_i32_0 : i32, i32
  }
  func.func @transform_7(%arg0: i32) -> (i32, i32) {
    %c0_i32 = arith.constant 0 : i32
    %c0_i32_0 = arith.constant 0 : i32
    %c0_i32_1 = arith.constant 0 : i32
    return %c0_i32, %c0_i32_0 : i32, i32
  }
  func.func @transform_8(%arg0: i32) -> (i32, i32) {
    %c0_i32 = arith.constant 0 : i32
    %c0_i32_0 = arith.constant 0 : i32
    %c0_i32_1 = arith.constant 0 : i32
    return %c0_i32, %c0_i32_0 : i32, i32
  }
  func.func @transform_9(%arg0: i32) -> (i32, i32) {
    %c0_i32 = arith.constant 0 : i32
    %c0_i32_0 = arith.constant 0 : i32
    %c0_i32_1 = arith.constant 0 : i32
    return %c0_i32, %c0_i32_0 : i32, i32
  }
  func.func @transform_10(%arg0: i32) -> (i32, i32) {
    %c0_i32 = arith.constant 0 : i32
    %c0_i32_0 = arith.constant 0 : i32
    %c0_i32_1 = arith.constant 0 : i32
    return %c0_i32, %c0_i32_0 : i32, i32
  }
  func.func @transform_11(%arg0: i32) -> (i32, i32) {
    %c0_i32 = arith.constant 0 : i32
    %c0_i32_0 = arith.constant 0 : i32
    %c0_i32_1 = arith.constant 0 : i32
    return %c0_i32, %c0_i32_0 : i32, i32
  }
  func.func @transform_12(%arg0: i32) -> (i32, i32) {
    %c0_i32 = arith.constant 0 : i32
    %c0_i32_0 = arith.constant 0 : i32
    %c0_i32_1 = arith.constant 0 : i32
    return %c0_i32, %c0_i32_0 : i32, i32
  }
  func.func @transform_13(%arg0: i32) -> (i32, i32) {
    %c0_i32 = arith.constant 0 : i32
    %c0_i32_0 = arith.constant 0 : i32
    %c0_i32_1 = arith.constant 0 : i32
    return %c0_i32, %c0_i32_0 : i32, i32
  }
  func.func @transform_14(%arg0: i32) -> (i32, i32) {
    %c0_i32 = arith.constant 0 : i32
    %c0_i32_0 = arith.constant 0 : i32
    %c0_i32_1 = arith.constant 0 : i32
    return %c0_i32, %c0_i32_0 : i32, i32
  }
  func.func @transform_15(%arg0: i32) -> (i32, i32, i32) {
    %c0_i32 = arith.constant 0 : i32
    %c0_i32_0 = arith.constant 0 : i32
    %c0_i32_1 = arith.constant 0 : i32
    return %arg0, %c0_i32, %c0_i32_0 : i32, i32, i32
  }
}

</mosaic_0001>

<llo_original>
// kernel: net_forward.1
$region0: #{net_forward.1}
  #allocation0 [shape = 'u32[]', space=smem, size = 0x4, offset = 0x4, fixed_abs, tag = 'smem constant byte address 0x4 - core index']
  #allocation1 [shape = 'u32[144,128]{1,0:T(1,128)}', space=vmem, size = 0x12000, scoped, tag = 'internal scratch']
  #allocation2 [shape = 'f32[18,18,16]{2,1,0:T(8,128)}', space=vmem, size = 0x36000, scoped, tag = 'scratch operand']
  #allocation3 [shape = 'f32[10,10,32]{2,1,0:T(8,128)}', space=vmem, size = 0x14000, scoped, tag = 'scratch operand']
  #allocation4 [shape = 'f32[6,6,64]{2,1,0:T(8,128)}', space=vmem, size = 0x6000, scoped, tag = 'scratch operand']
  %s0 = inlined_call_operand.vmem [shape: bf16[2,256,27], index: 0, kind: input, shape index: {}]
  %s1 = inlined_call_operand.vmem [shape: bf16[27,16], index: 1, kind: input, shape index: {}]
  %s2 = inlined_call_operand.vmem [shape: f32[2,16], index: 2, kind: input, shape index: {}]
  %s3 = inlined_call_operand.vmem [shape: bf16[144,32], index: 3, kind: input, shape index: {}]
  %s4 = inlined_call_operand.vmem [shape: f32[2,32], index: 4, kind: input, shape index: {}]
  %s5 = inlined_call_operand.vmem [shape: bf16[288,64], index: 5, kind: input, shape index: {}]
  %s6 = inlined_call_operand.vmem [shape: f32[2,64], index: 6, kind: input, shape index: {}]
  %s7 = inlined_call_operand.vmem [shape: bf16[576,128], index: 7, kind: input, shape index: {}]
  %s8 = inlined_call_operand.vmem [shape: f32[2,128], index: 8, kind: input, shape index: {}]
  %s9 = inlined_call_operand.vmem [shape: bf16[128,256], index: 9, kind: input, shape index: {}]
  %s10 = inlined_call_operand.vmem [shape: f32[2,256], index: 10, kind: input, shape index: {}]
  %s11 = inlined_call_operand.vmem [shape: bf16[256,64], index: 11, kind: input, shape index: {}]
  %s12 = inlined_call_operand.vmem [shape: f32[3,64], index: 12, kind: input, shape index: {}]
  %s13 = inlined_call_operand.vmem [shape: bf16[64,10], index: 13, kind: input, shape index: {}]
  %s14 = inlined_call_operand.vmem [shape: f32[1,10], index: 14, kind: input, shape index: {}]
  %s15 = inlined_call_operand.hbm [shape: f32[2,1,10], index: 15, kind: output, shape index: {}]
  %s16 = sld [smem:[#allocation0]]
  $region93: #{net_forward.1} parent=0
    _
  %s18 = ssub.s32 1, %s16
  %s19 = scalar_select 0, %s18, %s16
  $region1: #{net_forward.1} parent=0
    #allocation5 [shape = 'u8[1024]{0}', space=vmem, size = 0x400, scoped, tag = 'output window, operand 0']
    #allocation6 [shape = 's32[2]{0}', space=sflag, size = 0x8, scoped, tag = 'scoped memory for net_forward.1']
    %20 = vsyncpa [#allocation6], 0
    %s21 = scalar_lea.sflag [#allocation6], 1
    %22 = vsyncpa %s21, 0
    loop: start=0, step=1, limit=4
    $region2: #{net_forward.1} parent=1 // loop_pre_header
      _
    $region3: #{net_forward.1} parent=1 // loop_header
      %s24 = sphi 0, %s28
      %p25 = scmp.ge.s32.totalorder %s24, 4
      %s34 = sphi 0, %s36
      %s37 = sphi 0, %s34
      %s38 = sphi 0, %s37
      %s54 = sphi 0, %s38
      %s58 = sphi 0, %s58
      %s60 = sphi 0, %s58
      %s61 = sphi 0, %s60
      %s75 = sphi 0, %s61
      %s79 = sphi 0, %s79
      %s81 = sphi 0, %s79
      %s82 = sphi 0, %s81
      %s96 = sphi 0, %s82
      %s100 = sphi 0, %s100
      %s102 = sphi 0, %s100
      %s103 = sphi 0, %s102
      %s117 = sphi 0, %s103
      %s121 = sphi 0, %s121
      %s123 = sphi 0, %s121
      %s124 = sphi 0, %s123
      %s138 = sphi 0, %s124
      %s142 = sphi 0, %s142
      %s144 = sphi 0, %s142
      %s145 = sphi 0, %s144
      %s159 = sphi 0, %s145
      %s163 = sphi 0, %s163
      %s165 = sphi 0, %s163
      %s166 = sphi 0, %s165
      %s180 = sphi 0, %s166
      %s184 = sphi 0, %s184
      %s186 = sphi 0, %s184
      %s187 = sphi 0, %s186
      %s201 = sphi 0, %s187
      %s205 = sphi 0, %s205
      %s207 = sphi 0, %s205
      %s208 = sphi 0, %s207
      %s222 = sphi 0, %s208
      %s226 = sphi 0, %s226
      %s228 = sphi 0, %s226
      %s229 = sphi 0, %s228
      %s243 = sphi 0, %s229
      %s247 = sphi 0, %s247
      %s249 = sphi 0, %s247
      %s250 = sphi 0, %s249
      %s264 = sphi 0, %s250
      %s268 = sphi 0, %s268
      %s270 = sphi 0, %s268
      %s271 = sphi 0, %s270
      %s285 = sphi 0, %s271
      %s289 = sphi 0, %s289
      %s291 = sphi 0, %s289
      %s292 = sphi 0, %s291
      %s306 = sphi 0, %s292
      %s310 = sphi 0, %s310
      %s312 = sphi 0, %s310
      %s313 = sphi 0, %s312
      %s327 = sphi 0, %s313
      %s331 = sphi 0, %s331
      %s333 = sphi 0, %s331
      %s334 = sphi 0, %s333
      %s348 = sphi 0, %s334
      %s354 = sphi 0, %s356
      %s357 = sphi 0, %s354
      %s358 = sphi 0, %s357
      %s374 = sphi 0, %s358
    $region4: #{net_forward.1} parent=1 // loop_header_branch
      %27 = sbr.rel (%p25) target = $region8
    $region5: #{net_forward.1} parent=1 // loop_body
      %s29 = ssub.s32 %s24, 1
      %s30 = ssub.s32 %s24, 2
      %s31 = sadd.s32 %s24, 1
      %s32 = ssub.s32 %s24, %s31
      %p33 = scmp.eq.s32.totalorder %s32, 0
      %s35 = sadd.s32 %s34, 1
      %s36 = scalar_select %p33, %s34, %s35
      %p39 = pneg %p33
      %p40 = scmp.eq.s32.totalorder %s24, 1
      %p41 = por %p39, %p40
      %p42 = scmp.ne.s32.totalorder %s34, %s37
      %p43 = scmp.eq.s32.totalorder %s24, 0
      %p44 = por %p42, %p43
      %p45 = scmp.ne.s32.totalorder %s34, %s37
      %p46 = scmp.eq.s32.totalorder %s29, 1
      %p47 = por %p45, %p46
      %p48 = scmp.ne.s32.totalorder %s37, %s38
      %p49 = scmp.eq.s32.totalorder %s29, 0
      %p50 = por %p48, %p49
      %p51 = scmp.ne.s32.totalorder %s37, %s38
      %p52 = scmp.eq.s32.totalorder %s30, 1
      %p53 = por %p51, %p52
      %p55 = scmp.ne.s32.totalorder %s38, %s54
      %p56 = scmp.eq.s32.totalorder %s30, 0
      %p57 = por %p55, %p56
      %s59 = sadd.s32 %s58, 1
      %p62 = scmp.eq.s32.totalorder %s24, 1
      %p63 = scmp.ne.s32.totalorder %s58, %s60
      %p64 = scmp.eq.s32.totalorder %s24, 0
      %p65 = por %p63, %p64
      %p66 = scmp.ne.s32.totalorder %s58, %s60
      %p67 = scmp.eq.s32.totalorder %s29, 1
      %p68 = por %p66, %p67
      %p69 = scmp.ne.s32.totalorder %s60, %s61
      %p70 = scmp.eq.s32.totalorder %s29, 0
      %p71 = por %p69, %p70
      %p72 = scmp.ne.s32.totalorder %s60, %s61
      %p73 = scmp.eq.s32.totalorder %s30, 1
      %p74 = por %p72, %p73
      %p76 = scmp.ne.s32.totalorder %s61, %s75
      %p77 = scmp.eq.s32.totalorder %s30, 0
      %p78 = por %p76, %p77
      %s80 = sadd.s32 %s79, 1
      %p83 = scmp.eq.s32.totalorder %s24, 1
      %p84 = scmp.ne.s32.totalorder %s79, %s81
      %p85 = scmp.eq.s32.totalorder %s24, 0
      %p86 = por %p84, %p85
      %p87 = scmp.ne.s32.totalorder %s79, %s81
      %p88 = scmp.eq.s32.totalorder %s29, 1
      %p89 = por %p87, %p88
      %p90 = scmp.ne.s32.totalorder %s81, %s82
      %p91 = scmp.eq.s32.totalorder %s29, 0
      %p92 = por %p90, %p91
      %p93 = scmp.ne.s32.totalorder %s81, %s82
      %p94 = scmp.eq.s32.totalorder %s30, 1
      %p95 = por %p93, %p94
      %p97 = scmp.ne.s32.totalorder %s82, %s96
      %p98 = scmp.eq.s32.totalorder %s30, 0
      %p99 = por %p97, %p98
      %s101 = sadd.s32 %s100, 1
      %p104 = scmp.eq.s32.totalorder %s24, 1
      %p105 = scmp.ne.s32.totalorder %s100, %s102
      %p106 = scmp.eq.s32.totalorder %s24, 0
      %p107 = por %p105, %p106
      %p108 = scmp.ne.s32.totalorder %s100, %s102
      %p109 = scmp.eq.s32.totalorder %s29, 1
      %p110 = por %p108, %p109
      %p111 = scmp.ne.s32.totalorder %s102, %s103
      %p112 = scmp.eq.s32.totalorder %s29, 0
      %p113 = por %p111, %p112
      %p114 = scmp.ne.s32.totalorder %s102, %s103
      %p115 = scmp.eq.s32.totalorder %s30, 1
      %p116 = por %p114, %p115
      %p118 = scmp.ne.s32.totalorder %s103, %s117
      %p119 = scmp.eq.s32.totalorder %s30, 0
      %p120 = por %p118, %p119
      %s122 = sadd.s32 %s121, 1
      %p125 = scmp.eq.s32.totalorder %s24, 1
      %p126 = scmp.ne.s32.totalorder %s121, %s123
      %p127 = scmp.eq.s32.totalorder %s24, 0
      %p128 = por %p126, %p127
      %p129 = scmp.ne.s32.totalorder %s121, %s123
      %p130 = scmp.eq.s32.totalorder %s29, 1
      %p131 = por %p129, %p130
      %p132 = scmp.ne.s32.totalorder %s123, %s124
      %p133 = scmp.eq.s32.totalorder %s29, 0
      %p134 = por %p132, %p133
      %p135 = scmp.ne.s32.totalorder %s123, %s124
      %p136 = scmp.eq.s32.totalorder %s30, 1
      %p137 = por %p135, %p136
      %p139 = scmp.ne.s32.totalorder %s124, %s138
      %p140 = scmp.eq.s32.totalorder %s30, 0
      %p141 = por %p139, %p140
      %s143 = sadd.s32 %s142, 1
      %p146 = scmp.eq.s32.totalorder %s24, 1
      %p147 = scmp.ne.s32.totalorder %s142, %s144
      %p148 = scmp.eq.s32.totalorder %s24, 0
      %p149 = por %p147, %p148
      %p150 = scmp.ne.s32.totalorder %s142, %s144
      %p151 = scmp.eq.s32.totalorder %s29, 1
      %p152 = por %p150, %p151
      %p153 = scmp.ne.s32.totalorder %s144, %s145
      %p154 = scmp.eq.s32.totalorder %s29, 0
      %p155 = por %p153, %p154
      %p156 = scmp.ne.s32.totalorder %s144, %s145
      %p157 = scmp.eq.s32.totalorder %s30, 1
      %p158 = por %p156, %p157
      %p160 = scmp.ne.s32.totalorder %s145, %s159
      %p161 = scmp.eq.s32.totalorder %s30, 0
      %p162 = por %p160, %p161
      %s164 = sadd.s32 %s163, 1
      %p167 = scmp.eq.s32.totalorder %s24, 1
      %p168 = scmp.ne.s32.totalorder %s163, %s165
      %p169 = scmp.eq.s32.totalorder %s24, 0
      %p170 = por %p168, %p169
      %p171 = scmp.ne.s32.totalorder %s163, %s165
      %p172 = scmp.eq.s32.totalorder %s29, 1
      %p173 = por %p171, %p172
      %p174 = scmp.ne.s32.totalorder %s165, %s166
      %p175 = scmp.eq.s32.totalorder %s29, 0
      %p176 = por %p174, %p175
      %p177 = scmp.ne.s32.totalorder %s165, %s166
      %p178 = scmp.eq.s32.totalorder %s30, 1
      %p179 = por %p177, %p178
      %p181 = scmp.ne.s32.totalorder %s166, %s180
      %p182 = scmp.eq.s32.totalorder %s30, 0
      %p183 = por %p181, %p182
      %s185 = sadd.s32 %s184, 1
      %p188 = scmp.eq.s32.totalorder %s24, 1
      %p189 = scmp.ne.s32.totalorder %s184, %s186
      %p190 = scmp.eq.s32.totalorder %s24, 0
      %p191 = por %p189, %p190
      %p192 = scmp.ne.s32.totalorder %s184, %s186
      %p193 = scmp.eq.s32.totalorder %s29, 1
      %p194 = por %p192, %p193
      %p195 = scmp.ne.s32.totalorder %s186, %s187
      %p196 = scmp.eq.s32.totalorder %s29, 0
      %p197 = por %p195, %p196
      %p198 = scmp.ne.s32.totalorder %s186, %s187
      %p199 = scmp.eq.s32.totalorder %s30, 1
      %p200 = por %p198, %p199
      %p202 = scmp.ne.s32.totalorder %s187, %s201
      %p203 = scmp.eq.s32.totalorder %s30, 0
      %p204 = por %p202, %p203
      %s206 = sadd.s32 %s205, 1
      %p209 = scmp.eq.s32.totalorder %s24, 1
      %p210 = scmp.ne.s32.totalorder %s205, %s207
      %p211 = scmp.eq.s32.totalorder %s24, 0
      %p212 = por %p210, %p211
      %p213 = scmp.ne.s32.totalorder %s205, %s207
      %p214 = scmp.eq.s32.totalorder %s29, 1
      %p215 = por %p213, %p214
      %p216 = scmp.ne.s32.totalorder %s207, %s208
      %p217 = scmp.eq.s32.totalorder %s29, 0
      %p218 = por %p216, %p217
      %p219 = scmp.ne.s32.totalorder %s207, %s208
      %p220 = scmp.eq.s32.totalorder %s30, 1
      %p221 = por %p219, %p220
      %p223 = scmp.ne.s32.totalorder %s208, %s222
      %p224 = scmp.eq.s32.totalorder %s30, 0
      %p225 = por %p223, %p224
      %s227 = sadd.s32 %s226, 1
      %p230 = scmp.eq.s32.totalorder %s24, 1
      %p231 = scmp.ne.s32.totalorder %s226, %s228
      %p232 = scmp.eq.s32.totalorder %s24, 0
      %p233 = por %p231, %p232
      %p234 = scmp.ne.s32.totalorder %s226, %s228
      %p235 = scmp.eq.s32.totalorder %s29, 1
      %p236 = por %p234, %p235
      %p237 = scmp.ne.s32.totalorder %s228, %s229
      %p238 = scmp.eq.s32.totalorder %s29, 0
      %p239 = por %p237, %p238
      %p240 = scmp.ne.s32.totalorder %s228, %s229
      %p241 = scmp.eq.s32.totalorder %s30, 1
      %p242 = por %p240, %p241
      %p244 = scmp.ne.s32.totalorder %s229, %s243
      %p245 = scmp.eq.s32.totalorder %s30, 0
      %p246 = por %p244, %p245
      %s248 = sadd.s32 %s247, 1
      %p251 = scmp.eq.s32.totalorder %s24, 1
      %p252 = scmp.ne.s32.totalorder %s247, %s249
      %p253 = scmp.eq.s32.totalorder %s24, 0
      %p254 = por %p252, %p253
      %p255 = scmp.ne.s32.totalorder %s247, %s249
      %p256 = scmp.eq.s32.totalorder %s29, 1
      %p257 = por %p255, %p256
      %p258 = scmp.ne.s32.totalorder %s249, %s250
      %p259 = scmp.eq.s32.totalorder %s29, 0
      %p260 = por %p258, %p259
      %p261 = scmp.ne.s32.totalorder %s249, %s250
      %p262 = scmp.eq.s32.totalorder %s30, 1
      %p263 = por %p261, %p262
      %p265 = scmp.ne.s32.totalorder %s250, %s264
      %p266 = scmp.eq.s32.totalorder %s30, 0
      %p267 = por %p265, %p266
      %s269 = sadd.s32 %s268, 1
      %p272 = scmp.eq.s32.totalorder %s24, 1
      %p273 = scmp.ne.s32.totalorder %s268, %s270
      %p274 = scmp.eq.s32.totalorder %s24, 0
      %p275 = por %p273, %p274
      %p276 = scmp.ne.s32.totalorder %s268, %s270
      %p277 = scmp.eq.s32.totalorder %s29, 1
      %p278 = por %p276, %p277
      %p279 = scmp.ne.s32.totalorder %s270, %s271
      %p280 = scmp.eq.s32.totalorder %s29, 0
      %p281 = por %p279, %p280
      %p282 = scmp.ne.s32.totalorder %s270, %s271
      %p283 = scmp.eq.s32.totalorder %s30, 1
      %p284 = por %p282, %p283
      %p286 = scmp.ne.s32.totalorder %s271, %s285
      %p287 = scmp.eq.s32.totalorder %s30, 0
      %p288 = por %p286, %p287
      %s290 = sadd.s32 %s289, 1
      %p293 = scmp.eq.s32.totalorder %s24, 1
      %p294 = scmp.ne.s32.totalorder %s289, %s291
      %p295 = scmp.eq.s32.totalorder %s24, 0
      %p296 = por %p294, %p295
      %p297 = scmp.ne.s32.totalorder %s289, %s291
      %p298 = scmp.eq.s32.totalorder %s29, 1
      %p299 = por %p297, %p298
      %p300 = scmp.ne.s32.totalorder %s291, %s292
      %p301 = scmp.eq.s32.totalorder %s29, 0
      %p302 = por %p300, %p301
      %p303 = scmp.ne.s32.totalorder %s291, %s292
      %p304 = scmp.eq.s32.totalorder %s30, 1
      %p305 = por %p303, %p304
      %p307 = scmp.ne.s32.totalorder %s292, %s306
      %p308 = scmp.eq.s32.totalorder %s30, 0
      %p309 = por %p307, %p308
      %s311 = sadd.s32 %s310, 1
      %p314 = scmp.eq.s32.totalorder %s24, 1
      %p315 = scmp.ne.s32.totalorder %s310, %s312
      %p316 = scmp.eq.s32.totalorder %s24, 0
      %p317 = por %p315, %p316
      %p318 = scmp.ne.s32.totalorder %s310, %s312
      %p319 = scmp.eq.s32.totalorder %s29, 1
      %p320 = por %p318, %p319
      %p321 = scmp.ne.s32.totalorder %s312, %s313
      %p322 = scmp.eq.s32.totalorder %s29, 0
      %p323 = por %p321, %p322
      %p324 = scmp.ne.s32.totalorder %s312, %s313
      %p325 = scmp.eq.s32.totalorder %s30, 1
      %p326 = por %p324, %p325
      %p328 = scmp.ne.s32.totalorder %s313, %s327
      %p329 = scmp.eq.s32.totalorder %s30, 0
      %p330 = por %p328, %p329
      %s332 = sadd.s32 %s331, 1
      %p335 = scmp.eq.s32.totalorder %s24, 1
      %p336 = scmp.ne.s32.totalorder %s331, %s333
      %p337 = scmp.eq.s32.totalorder %s24, 0
      %p338 = por %p336, %p337
      %p339 = scmp.ne.s32.totalorder %s331, %s333
      %p340 = scmp.eq.s32.totalorder %s29, 1
      %p341 = por %p339, %p340
      %p342 = scmp.ne.s32.totalorder %s333, %s334
      %p343 = scmp.eq.s32.totalorder %s29, 0
      %p344 = por %p342, %p343
      %p345 = scmp.ne.s32.totalorder %s333, %s334
      %p346 = scmp.eq.s32.totalorder %s30, 1
      %p347 = por %p345, %p346
      %p349 = scmp.ne.s32.totalorder %s334, %s348
      %p350 = scmp.eq.s32.totalorder %s30, 0
      %p351 = por %p349, %p350
      %s352 = ssub.s32 %s24, %s31
      %p353 = scmp.eq.s32.totalorder %s352, 0
      %s355 = sadd.s32 %s354, 1
      %s356 = scalar_select %p353, %s354, %s355
      %p359 = pneg %p353
      %p360 = scmp.eq.s32.totalorder %s24, 1
      %p361 = por %p359, %p360
      %p362 = scmp.ne.s32.totalorder %s354, %s357
      %p363 = scmp.eq.s32.totalorder %s24, 0
      %p364 = por %p362, %p363
      %p365 = scmp.ne.s32.totalorder %s354, %s357
      %p366 = scmp.eq.s32.totalorder %s29, 1
      %p367 = por %p365, %p366
      %p368 = scmp.ne.s32.totalorder %s357, %s358
      %p369 = scmp.eq.s32.totalorder %s29, 0
      %p370 = por %p368, %p369
      %p371 = scmp.ne.s32.totalorder %s357, %s358
      %p372 = scmp.eq.s32.totalorder %s30, 1
      %p373 = por %p371, %p372
      %p375 = scmp.ne.s32.totalorder %s358, %s374
      %p376 = scmp.eq.s32.totalorder %s30, 0
      %p377 = por %p375, %p376
      %p378 = scmp.le.s32.totalorder 1, %s24
      %p379 = scmp.lt.s32.totalorder %s24, 3
      %p380 = pnand %p378, %p379
      %p381 = pneg %p380
      // Predicated region
      $region9: #{net_forward.1} parent=5 // pred_check
        _
      $region10: #{net_forward.1} parent=5 // pred_check_branch
        %383 = sbr.rel (%p380) target = $region12
      $region11: #{net_forward.1} parent=5 // pred_region
        %s384 = ssub.s32 %s24, 1
        // Predicated region
        $region13: #{net_forward.1} parent=11 // pred_check
          %p385 = pneg %p71
        $region14: #{net_forward.1} parent=11 // pred_check_branch
          %387 = sbr.rel (%p385) target = $region16
        $region15: #{net_forward.1} parent=11 // pred_region
          _
        $region16: #{net_forward.1} parent=11 // pred_fallthru
          _
        // Predicated region
        $region17: #{net_forward.1} parent=11 // pred_check
          %p388 = pneg %p92
        $region18: #{net_forward.1} parent=11 // pred_check_branch
          %390 = sbr.rel (%p388) target = $region20
        $region19: #{net_forward.1} parent=11 // pred_region
          _
        $region20: #{net_forward.1} parent=11 // pred_fallthru
          _
        // Predicated region
        $region21: #{net_forward.1} parent=11 // pred_check
          %p391 = pneg %p113
        $region22: #{net_forward.1} parent=11 // pred_check_branch
          %393 = sbr.rel (%p391) target = $region24
        $region23: #{net_forward.1} parent=11 // pred_region
          _
        $region24: #{net_forward.1} parent=11 // pred_fallthru
          _
        // Predicated region
        $region25: #{net_forward.1} parent=11 // pred_check
          %p394 = pneg %p134
        $region26: #{net_forward.1} parent=11 // pred_check_branch
          %396 = sbr.rel (%p394) target = $region28
        $region27: #{net_forward.1} parent=11 // pred_region
          _
        $region28: #{net_forward.1} parent=11 // pred_fallthru
          _
        // Predicated region
        $region29: #{net_forward.1} parent=11 // pred_check
          %p397 = pneg %p155
        $region30: #{net_forward.1} parent=11 // pred_check_branch
          %399 = sbr.rel (%p397) target = $region32
        $region31: #{net_forward.1} parent=11 // pred_region
          _
        $region32: #{net_forward.1} parent=11 // pred_fallthru
          _
        // Predicated region
        $region33: #{net_forward.1} parent=11 // pred_check
          %p400 = pneg %p176
        $region34: #{net_forward.1} parent=11 // pred_check_branch
          %402 = sbr.rel (%p400) target = $region36
        $region35: #{net_forward.1} parent=11 // pred_region
          _
        $region36: #{net_forward.1} parent=11 // pred_fallthru
          _
        // Predicated region
        $region37: #{net_forward.1} parent=11 // pred_check
          %p403 = pneg %p197
        $region38: #{net_forward.1} parent=11 // pred_check_branch
          %405 = sbr.rel (%p403) target = $region40
        $region39: #{net_forward.1} parent=11 // pred_region
          _
        $region40: #{net_forward.1} parent=11 // pred_fallthru
          _
        // Predicated region
        $region41: #{net_forward.1} parent=11 // pred_check
          %p406 = pneg %p218
        $region42: #{net_forward.1} parent=11 // pred_check_branch
          %408 = sbr.rel (%p406) target = $region44
        $region43: #{net_forward.1} parent=11 // pred_region
          _
        $region44: #{net_forward.1} parent=11 // pred_fallthru
          _
        // Predicated region
        $region45: #{net_forward.1} parent=11 // pred_check
          %p409 = pneg %p239
        $region46: #{net_forward.1} parent=11 // pred_check_branch
          %411 = sbr.rel (%p409) target = $region48
        $region47: #{net_forward.1} parent=11 // pred_region
          _
        $region48: #{net_forward.1} parent=11 // pred_fallthru
          _
        // Predicated region
        $region49: #{net_forward.1} parent=11 // pred_check
          %p412 = pneg %p260
        $region50: #{net_forward.1} parent=11 // pred_check_branch
          %414 = sbr.rel (%p412) target = $region52
        $region51: #{net_forward.1} parent=11 // pred_region
          _
        $region52: #{net_forward.1} parent=11 // pred_fallthru
          _
        // Predicated region
        $region53: #{net_forward.1} parent=11 // pred_check
          %p415 = pneg %p281
        $region54: #{net_forward.1} parent=11 // pred_check_branch
          %417 = sbr.rel (%p415) target = $region56
        $region55: #{net_forward.1} parent=11 // pred_region
          _
        $region56: #{net_forward.1} parent=11 // pred_fallthru
          _
        // Predicated region
        $region57: #{net_forward.1} parent=11 // pred_check
          %p418 = pneg %p302
        $region58: #{net_forward.1} parent=11 // pred_check_branch
          %420 = sbr.rel (%p418) target = $region60
        $region59: #{net_forward.1} parent=11 // pred_region
          _
        $region60: #{net_forward.1} parent=11 // pred_fallthru
          _
        // Predicated region
        $region61: #{net_forward.1} parent=11 // pred_check
          %p421 = pneg %p323
        $region62: #{net_forward.1} parent=11 // pred_check_branch
          %423 = sbr.rel (%p421) target = $region64
        $region63: #{net_forward.1} parent=11 // pred_region
          _
        $region64: #{net_forward.1} parent=11 // pred_fallthru
          _
        // Predicated region
        $region65: #{net_forward.1} parent=11 // pred_check
          %p424 = pneg %p344
        $region66: #{net_forward.1} parent=11 // pred_check_branch
          %426 = sbr.rel (%p424) target = $region68
        $region67: #{net_forward.1} parent=11 // pred_region
          _
        $region68: #{net_forward.1} parent=11 // pred_fallthru
          _
      $region12: #{net_forward.1} parent=5 // pred_fallthru
        _
      %p427 = scmp.lt.s32.totalorder %s24, 2
      // Predicated region
      $region69: #{net_forward.1} parent=5 // pred_check
        %p428 = pneg %p427
      $region70: #{net_forward.1} parent=5 // pred_check_branch
        %430 = sbr.rel (%p428) target = $region72
      $region71: #{net_forward.1} parent=5 // pred_region
        // Predicated region
        $region73: #{net_forward.1} parent=71 // pred_check
          %p431 = pneg %p44
        $region74: #{net_forward.1} parent=71 // pred_check_branch
          %433 = sbr.rel (%p431) target = $region76
        $region75: #{net_forward.1} parent=71 // pred_region
          %p434 = scmp.lt.s32.totalorder %s24, 1
          %s435 = scalar_select %p434, %s24, 1
          %s436 = smul.addr %s435, 32
          %s437 = smul.addr %s436, 4
          %s438 = scalar_lea.vmem %s0, %s437
        $region76: #{net_forward.1} parent=71 // pred_fallthru
          _
      $region72: #{net_forward.1} parent=5 // pred_fallthru
        _
      %p439 = scmp.le.s32.totalorder 1, %s24
      %p440 = scmp.lt.s32.totalorder %s24, 3
      %p441 = pnand %p439, %p440
      %p442 = pneg %p441
      // Predicated region
      $region77: #{net_forward.1} parent=5 // pred_check
        _
      $region78: #{net_forward.1} parent=5 // pred_check_branch
        %444 = sbr.rel (%p441) target = $region80
      $region79: #{net_forward.1} parent=5 // pred_region
        %s445 = ssub.s32 %s24, 1
        %p446 = scmp.lt.s32.totalorder %s29, 1
        %s447 = scalar_select %p446, %s29, 1
        %s448 = smul.addr %s447, 32
        %s449 = smul.addr %s448, 4
        %s450 = scalar_lea.vmem %s0, %s449
        %p451 = pneg %p50
        %p452 = pneg %p47
        %p453 = pneg %p71
        %p454 = pneg %p68
        %p455 = pneg %p92
        %p456 = pneg %p89
        %p457 = pneg %p113
        %p458 = pneg %p110
        %p459 = pneg %p134
        %p460 = pneg %p131
        %p461 = pneg %p155
        %p462 = pneg %p152
        %p463 = pneg %p176
        %p464 = pneg %p173
        %p465 = pneg %p197
        %p466 = pneg %p194
        %p467 = pneg %p218
        %p468 = pneg %p215
        %p469 = pneg %p239
        %p470 = pneg %p236
        %p471 = pneg %p260
        %p472 = pneg %p257
        %p473 = pneg %p281
        %p474 = pneg %p278
        %p475 = pneg %p302
        %p476 = pneg %p299
        %p477 = pneg %p323
        %p478 = pneg %p320
        %p479 = pneg %p344
        %p480 = pneg %p341
        %p481 = pneg %p370
        %p482 = pneg %p367
        %s483 = sand.u32 %s357, 1
        %s484 = scalar_lea.sflag [#allocation6], %s483
        %s485 = sand.u32 %s357, 1
        %s486 = scalar_lea.vmem [#allocation5], %s485
        %p487 = scmp.lt.s32.totalorder %s29, 1
        %s488 = scalar_select %p487, %s29, 1
        %s489 = smul.addr %s488, 32
        %s490 = smul.addr %s489, 4
        %s491 = scalar_lea.vmem %s0, %s490
        %v493 = vld [vmem:[%s491] sm:$0xf]
        %v494 = vld [vmem:[%s491 + $0x4] sm:$0xf]
        %v495 = vld [vmem:[%s491 + $0x8] sm:$0xf]
        %v496 = vld [vmem:[%s491 + $0xc] sm:$0xf]
        %v497 = vld [vmem:[%s491 + $0x10] sm:$0xf]
        %v498 = vld [vmem:[%s491 + $0x14] sm:$0xf]
        %v499 = vld [vmem:[%s491 + $0x18] sm:$0xf]
        %v500 = vld [vmem:[%s491 + $0x1c] sm:$0xf]
        %v501 = vld [vmem:[%s491 + $0x20] sm:$0xf]
        %v502 = vld [vmem:[%s491 + $0x24] sm:$0xf]
        %v503 = vld [vmem:[%s491 + $0x28] sm:$0xf]
        %v504 = vld [vmem:[%s491 + $0x2c] sm:$0xf]
        %v505 = vld [vmem:[%s491 + $0x30] sm:$0xf]
        %v506 = vld [vmem:[%s491 + $0x34] sm:$0xf]
        %v507 = vld [vmem:[%s491 + $0x38] sm:$0xf]
        %v508 = vld [vmem:[%s491 + $0x3c] sm:$0xf]
        %v509 = vld [vmem:[%s491 + $0x40] sm:$0xf]
        %v510 = vld [vmem:[%s491 + $0x44] sm:$0xf]
        %v511 = vld [vmem:[%s491 + $0x48] sm:$0xf]
        %v512 = vld [vmem:[%s491 + $0x4c] sm:$0xf]
        %v513 = vld [vmem:[%s491 + $0x50] sm:$0xf]
        %v514 = vld [vmem:[%s491 + $0x54] sm:$0xf]
        %v515 = vld [vmem:[%s491 + $0x58] sm:$0xf]
        %v516 = vld [vmem:[%s491 + $0x5c] sm:$0xf]
        %v517 = vld [vmem:[%s491 + $0x60] sm:$0xf]
        %v518 = vld [vmem:[%s491 + $0x64] sm:$0xf]
        %v519 = vld [vmem:[%s491 + $0x68] sm:$0xf]
        %v520 = vld [vmem:[%s491 + $0x6c] sm:$0xf]
        %v521 = vld [vmem:[%s491 + $0x70] sm:$0xf]
        %v522 = vld [vmem:[%s491 + $0x74] sm:$0xf]
        %v523 = vld [vmem:[%s491 + $0x78] sm:$0xf]
        %v524 = vld [vmem:[%s491 + $0x7c] sm:$0xf]
        %v525 = vld [vmem:[%s1] sm:$0xf]
        %v526 = vld [vmem:[%s1 + $0x4] sm:$0xf]
        %v527 = vld [vmem:[%s1 + $0x8] sm:$0xf]
        %v528 = vld [vmem:[%s1 + $0xc] sm:$0x3]
        %v561 = vunpack.c.l.b16 %v493
        %v562 = vunpack.c.l.b16 %v494
        %v563 = vunpack.c.l.b16 %v495
        %v564 = vunpack.c.l.b16 %v496
        %v565 = vunpack.c.l.b16 %v497
        %v566 = vunpack.c.l.b16 %v498
        %v567 = vunpack.c.l.b16 %v499
        %v568 = vunpack.c.l.b16 %v500
        %v569 = vunpack.c.l.b16 %v501
        %v570 = vunpack.c.l.b16 %v502
        %v571 = vunpack.c.l.b16 %v503
        %v572 = vunpack.c.l.b16 %v504
        %v573 = vunpack.c.l.b16 %v505
        %v574 = vunpack.c.l.b16 %v506
        %v575 = vunpack.c.l.b16 %v507
        %v576 = vunpack.c.l.b16 %v508
        %v577 = vunpack.c.l.b16 %v509
        %v578 = vunpack.c.l.b16 %v510
        %v579 = vunpack.c.l.b16 %v511
        %v580 = vunpack.c.l.b16 %v512
        %v581 = vunpack.c.l.b16 %v513
        %v582 = vunpack.c.l.b16 %v514
        %v583 = vunpack.c.l.b16 %v515
        %v584 = vunpack.c.l.b16 %v516
        %v585 = vunpack.c.l.b16 %v517
        %v586 = vunpack.c.l.b16 %v518
        %v587 = vunpack.c.l.b16 %v519
        %v588 = vunpack.c.l.b16 %v520
        %v589 = vunpack.c.l.b16 %v521
        %v590 = vunpack.c.l.b16 %v522
        %v591 = vunpack.c.l.b16 %v523
        %v592 = vunpack.c.l.b16 %v524
        %v593 = vpack.c.b16 %v562, %v561
        %v594 = vpack.c.b16 %v564, %v563
        %v595 = vpack.c.b16 %v566, %v565
        %v596 = vpack.c.b16 %v568, %v567
        %v597 = vpack.c.b16 %v570, %v569
        %v598 = vpack.c.b16 %v572, %v571
        %v599 = vpack.c.b16 %v574, %v573
        %v600 = vpack.c.b16 %v576, %v575
        %v601 = vpack.c.b16 %v578, %v577
        %v602 = vpack.c.b16 %v580, %v579
        %v603 = vpack.c.b16 %v582, %v581
        %v604 = vpack.c.b16 %v584, %v583
        %v605 = vpack.c.b16 %v586, %v585
        %v606 = vpack.c.b16 %v588, %v587
        %v607 = vpack.c.b16 %v590, %v589
        %v608 = vpack.c.b16 %v592, %v591
        %v613 = vunpack.c.l.b16 %v525
        %v614 = vunpack.c.l.b16 %v526
        %v615 = vunpack.c.l.b16 %v527
        %v616 = vunpack.c.l.b16 %v528
        %v617 = vpack.c.b16 %v614, %v613
        %v618 = vpack.c.b16 %v616, %v615
        %vm620 = vcmask 220160
        %v622 = vsel %vm620, %v593, 0
        %v625 = vsel %vm620, %v594, 0
        %v628 = vsel %vm620, %v595, 0
        %v631 = vsel %vm620, %v596, 0
        %v634 = vsel %vm620, %v597, 0
        %v637 = vsel %vm620, %v598, 0
        %v640 = vsel %vm620, %v599, 0
        %v643 = vsel %vm620, %v600, 0
        %v646 = vsel %vm620, %v601, 0
        %v649 = vsel %vm620, %v602, 0
        %v652 = vsel %vm620, %v603, 0
        %v655 = vsel %vm620, %v604, 0
        %v658 = vsel %vm620, %v605, 0
        %v661 = vsel %vm620, %v606, 0
        %v664 = vsel %vm620, %v607, 0
        %v667 = vsel %vm620, %v608, 0
        %vm669 = vcmask 1044480
        %vm670 = vcmask 1045504
        %v671 = vsel %vm669, 4294967295, 65535
        %v672 = vsel %vm670, %v671, 0
        %v674 = vand.u32 %v618, %v672
        %676 = vmatprep.subr.bf16.mxu0 0
        %677 = vmatpush1.bf16.msra.mxu0 %v617
        %678 = vmatprep.subr.bf16.mxu0 0
        %679 = vmatpush1.bf16.msra.mxu0 %v674
        %680 = vmatprep.subr.bf16.mxu0 0
        %681 = vmatpush1.bf16.msra.mxu0 0
        %682 = vmatprep.subr.bf16.mxu0 0
        %683 = vmatpush1.bf16.msra.mxu0 0
        %684 = vmatprep.subr.bf16.mxu0 0
        %685 = vmatpush1.bf16.msra.mxu0 0
        %686 = vmatprep.subr.bf16.mxu0 0
        %687 = vmatpush1.bf16.msra.mxu0 0
        %688 = vmatprep.subr.bf16.mxu0 0
        %689 = vmatpush1.bf16.msra.mxu0 0
        %690 = vmatprep.subr.bf16.mxu0 0
        %691 = vmatpush1.bf16.msra.mxu0 0
        %692 = vmatprep.subr.bf16.mxu0 0
        %693 = vmatpush1.bf16.msra.mxu0 0
        %694 = vmatprep.subr.bf16.mxu0 0
        %695 = vmatpush1.bf16.msra.mxu0 0
        %696 = vmatprep.subr.bf16.mxu0 0
        %697 = vmatpush1.bf16.msra.mxu0 0
        %698 = vmatprep.subr.bf16.mxu0 0
        %699 = vmatpush1.bf16.msra.mxu0 0
        %700 = vmatprep.subr.bf16.mxu0 0
        %701 = vmatpush1.bf16.msra.mxu0 0
        %702 = vmatprep.subr.bf16.mxu0 0
        %703 = vmatpush1.bf16.msra.mxu0 0
        %704 = vmatprep.subr.bf16.mxu0 0
        %705 = vmatpush1.bf16.msra.mxu0 0
        %706 = vmatprep.subr.bf16.mxu0 0
        %707 = vmatpush1.bf16.msra.mxu0 0
        %708 = vmatprep.mubr.bf16.mxu0 0
        %709 = vmatmul.mubr.bf16.gmra.mrb[0].mxu0 %v622
        %v710 = vpop.f32.mrb[0].mxu0
        %v711 = vadd.f32 0.0, %v710
        %v712 = vpop.f32.mrb[0].mxu0
        %v713 = vpop.f32.mrb[0].mxu0
        %v714 = vadd.f32 0.0, %v713
        %v715 = vpop.f32.mrb[0].mxu0
        %716 = vmatprep.mubr.bf16.mxu0 0
        %717 = vmatmul.mubr.bf16.gmra.mrb[0].mxu0 %v625
        %v718 = vpop.f32.mrb[0].mxu0
        %v719 = vadd.f32 0.0, %v718
        %v720 = vpop.f32.mrb[0].mxu0
        %v721 = vpop.f32.mrb[0].mxu0
        %v722 = vadd.f32 0.0, %v721
        %v723 = vpop.f32.mrb[0].mxu0
        %724 = vmatprep.mubr.bf16.mxu0 0
        %725 = vmatmul.mubr.bf16.gmra.mrb[0].mxu0 %v628
        %v726 = vpop.f32.mrb[0].mxu0
        %v727 = vadd.f32 0.0, %v726
        %v728 = vpop.f32.mrb[0].mxu0
        %v729 = vpop.f32.mrb[0].mxu0
        %v730 = vadd.f32 0.0, %v729
        %v731 = vpop.f32.mrb[0].mxu0
        %732 = vmatprep.mubr.bf16.mxu0 0
        %733 = vmatmul.mubr.bf16.gmra.mrb[0].mxu0 %v631
        %v734 = vpop.f32.mrb[0].mxu0
        %v735 = vadd.f32 0.0, %v734
        %v736 = vpop.f32.mrb[0].mxu0
        %v737 = vpop.f32.mrb[0].mxu0
        %v738 = vadd.f32 0.0, %v737
        %v739 = vpop.f32.mrb[0].mxu0
        %740 = vmatprep.mubr.bf16.mxu0 0
        %741 = vmatmul.mubr.bf16.gmra.mrb[0].mxu0 %v634
        %v742 = vpop.f32.mrb[0].mxu0
        %v743 = vadd.f32 0.0, %v742
        %v744 = vpop.f32.mrb[0].mxu0
        %v745 = vpop.f32.mrb[0].mxu0
        %v746 = vadd.f32 0.0, %v745
        %v747 = vpop.f32.mrb[0].mxu0
        %748 = vmatprep.mubr.bf16.mxu0 0
        %749 = vmatmul.mubr.bf16.gmra.mrb[0].mxu0 %v637
        %v750 = vpop.f32.mrb[0].mxu0
        %v751 = vadd.f32 0.0, %v750
        %v752 = vpop.f32.mrb[0].mxu0
        %v753 = vpop.f32.mrb[0].mxu0
        %v754 = vadd.f32 0.0, %v753
        %v755 = vpop.f32.mrb[0].mxu0
        %756 = vmatprep.mubr.bf16.mxu0 0
        %757 = vmatmul.mubr.bf16.gmra.mrb[0].mxu0 %v640
        %v758 = vpop.f32.mrb[0].mxu0
        %v759 = vadd.f32 0.0, %v758
        %v760 = vpop.f32.mrb[0].mxu0
        %v761 = vpop.f32.mrb[0].mxu0
        %v762 = vadd.f32 0.0, %v761
        %v763 = vpop.f32.mrb[0].mxu0
        %764 = vmatprep.mubr.bf16.mxu0 0
        %765 = vmatmul.mubr.bf16.gmra.mrb[0].mxu0 %v643
        %v766 = vpop.f32.mrb[0].mxu0
        %v767 = vadd.f32 0.0, %v766
        %v768 = vpop.f32.mrb[0].mxu0
        %v769 = vpop.f32.mrb[0].mxu0
        %v770 = vadd.f32 0.0, %v769
        %v771 = vpop.f32.mrb[0].mxu0
        %772 = vmatprep.mubr.bf16.mxu0 0
        %773 = vmatmul.mubr.bf16.gmra.mrb[0].mxu0 %v646
        %v774 = vpop.f32.mrb[0].mxu0
        %v775 = vadd.f32 0.0, %v774
        %v776 = vpop.f32.mrb[0].mxu0
        %v777 = vpop.f32.mrb[0].mxu0
        %v778 = vadd.f32 0.0, %v777
        %v779 = vpop.f32.mrb[0].mxu0
        %780 = vmatprep.mubr.bf16.mxu0 0
        %781 = vmatmul.mubr.bf16.gmra.mrb[0].mxu0 %v649
        %v782 = vpop.f32.mrb[0].mxu0
        %v783 = vadd.f32 0.0, %v782
        %v784 = vpop.f32.mrb[0].mxu0
        %v785 = vpop.f32.mrb[0].mxu0
        %v786 = vadd.f32 0.0, %v785
        %v787 = vpop.f32.mrb[0].mxu0
        %788 = vmatprep.mubr.bf16.mxu0 0
        %789 = vmatmul.mubr.bf16.gmra.mrb[0].mxu0 %v652
        %v790 = vpop.f32.mrb[0].mxu0
        %v791 = vadd.f32 0.0, %v790
        %v792 = vpop.f32.mrb[0].mxu0
        %v793 = vpop.f32.mrb[0].mxu0
        %v794 = vadd.f32 0.0, %v793
        %v795 = vpop.f32.mrb[0].mxu0
        %796 = vmatprep.mubr.bf16.mxu0 0
        %797 = vmatmul.mubr.bf16.gmra.mrb[0].mxu0 %v655
        %v798 = vpop.f32.mrb[0].mxu0
        %v799 = vadd.f32 0.0, %v798
        %v800 = vpop.f32.mrb[0].mxu0
        %v801 = vpop.f32.mrb[0].mxu0
        %v802 = vadd.f32 0.0, %v801
        %v803 = vpop.f32.mrb[0].mxu0
        %804 = vmatprep.mubr.bf16.mxu0 0
        %805 = vmatmul.mubr.bf16.gmra.mrb[0].mxu0 %v658
        %v806 = vpop.f32.mrb[0].mxu0
        %v807 = vadd.f32 0.0, %v806
        %v808 = vpop.f32.mrb[0].mxu0
        %v809 = vpop.f32.mrb[0].mxu0
        %v810 = vadd.f32 0.0, %v809
        %v811 = vpop.f32.mrb[0].mxu0
        %812 = vmatprep.mubr.bf16.mxu0 0
        %813 = vmatmul.mubr.bf16.gmra.mrb[0].mxu0 %v661
        %v814 = vpop.f32.mrb[0].mxu0
        %v815 = vadd.f32 0.0, %v814
        %v816 = vpop.f32.mrb[0].mxu0
        %v817 = vpop.f32.mrb[0].mxu0
        %v818 = vadd.f32 0.0, %v817
        %v819 = vpop.f32.mrb[0].mxu0
        %820 = vmatprep.mubr.bf16.mxu0 0
        %821 = vmatmul.mubr.bf16.gmra.mrb[0].mxu0 %v664
        %v822 = vpop.f32.mrb[0].mxu0
        %v823 = vadd.f32 0.0, %v822
        %v824 = vpop.f32.mrb[0].mxu0
        %v825 = vpop.f32.mrb[0].mxu0
        %v826 = vadd.f32 0.0, %v825
        %v827 = vpop.f32.mrb[0].mxu0
        %828 = vmatprep.mubr.bf16.mxu0 0
        %829 = vmatmul.mubr.bf16.gmra.mrb[0].mxu0 %v667
        %v830 = vpop.f32.mrb[0].mxu0
        %v831 = vadd.f32 0.0, %v830
        %v832 = vpop.f32.mrb[0].mxu0
        %v833 = vpop.f32.mrb[0].mxu0
        %v834 = vadd.f32 0.0, %v833
        %v835 = vpop.f32.mrb[0].mxu0
        %836 = vdwg.mxu0
        %v837 = vld [vmem:[%s2] sm:$0x1]
        %v838 = vlaneseq
        %v839 = vshrl.u32 %v838, 7
        %v840 = vsub.s32 0, %v839
        %v841 = vrot.slane %v837, %v840
        %v842 = vmul.f32 %v711, %v841
        %v843 = vmul.f32 %v714, %v841
        %v844 = vmul.f32 %v719, %v841
        %v845 = vmul.f32 %v722, %v841
        %v846 = vmul.f32 %v727, %v841
        %v847 = vmul.f32 %v730, %v841
        %v848 = vmul.f32 %v735, %v841
        %v849 = vmul.f32 %v738, %v841
        %v850 = vmul.f32 %v743, %v841
        %v851 = vmul.f32 %v746, %v841
        %v852 = vmul.f32 %v751, %v841
        %v853 = vmul.f32 %v754, %v841
        %v854 = vmul.f32 %v759, %v841
        %v855 = vmul.f32 %v762, %v841
        %v856 = vmul.f32 %v767, %v841
        %v857 = vmul.f32 %v770, %v841
        %v858 = vmul.f32 %v775, %v841
        %v859 = vmul.f32 %v778, %v841
        %v860 = vmul.f32 %v783, %v841
        %v861 = vmul.f32 %v786, %v841
        %v862 = vmul.f32 %v791, %v841
        %v863 = vmul.f32 %v794, %v841
        %v864 = vmul.f32 %v799, %v841
        %v865 = vmul.f32 %v802, %v841
        %v866 = vmul.f32 %v807, %v841
        %v867 = vmul.f32 %v810, %v841
        %v868 = vmul.f32 %v815, %v841
        %v869 = vmul.f32 %v818, %v841
        %v870 = vmul.f32 %v823, %v841
        %v871 = vmul.f32 %v826, %v841
        %v872 = vmul.f32 %v831, %v841
        %v873 = vmul.f32 %v834, %v841
        %v874 = vld [vmem:[%s2 + $0x1] sm:$0x1]
        %v875 = vlaneseq
        %v876 = vshrl.u32 %v875, 7
        %v877 = vsub.s32 0, %v876
        %v878 = vrot.slane %v874, %v877
        %v879 = vadd.f32 %v842, %v878
        %v880 = vadd.f32 %v843, %v878
        %v881 = vadd.f32 %v844, %v878
        %v882 = vadd.f32 %v845, %v878
        %v883 = vadd.f32 %v846, %v878
        %v884 = vadd.f32 %v847, %v878
        %v885 = vadd.f32 %v848, %v878
        %v886 = vadd.f32 %v849, %v878
        %v887 = vadd.f32 %v850, %v878
        %v888 = vadd.f32 %v851, %v878
        %v889 = vadd.f32 %v852, %v878
        %v890 = vadd.f32 %v853, %v878
        %v891 = vadd.f32 %v854, %v878
        %v892 = vadd.f32 %v855, %v878
        %v893 = vadd.f32 %v856, %v878
        %v894 = vadd.f32 %v857, %v878
        %v895 = vadd.f32 %v858, %v878
        %v896 = vadd.f32 %v859, %v878
        %v897 = vadd.f32 %v860, %v878
        %v898 = vadd.f32 %v861, %v878
        %v899 = vadd.f32 %v862, %v878
        %v900 = vadd.f32 %v863, %v878
        %v901 = vadd.f32 %v864, %v878
        %v902 = vadd.f32 %v865, %v878
        %v903 = vadd.f32 %v866, %v878
        %v904 = vadd.f32 %v867, %v878
        %v905 = vadd.f32 %v868, %v878
        %v906 = vadd.f32 %v869, %v878
        %v907 = vadd.f32 %v870, %v878
        %v908 = vadd.f32 %v871, %v878
        %v909 = vadd.f32 %v872, %v878
        %v910 = vadd.f32 %v873, %v878
        %v911 = vxor.u32 %v879, 2147483648
        %v912 = vxor.u32 %v880, 2147483648
        %v913 = vxor.u32 %v881, 2147483648
        %v914 = vxor.u32 %v882, 2147483648
        %v915 = vxor.u32 %v883, 2147483648
        %v916 = vxor.u32 %v884, 2147483648
        %v917 = vxor.u32 %v885, 2147483648
        %v918 = vxor.u32 %v886, 2147483648
        %v919 = vxor.u32 %v887, 2147483648
        %v920 = vxor.u32 %v888, 2147483648
        %v921 = vxor.u32 %v889, 2147483648
        %v922 = vxor.u32 %v890, 2147483648
        %v923 = vxor.u32 %v891, 2147483648
        %v924 = vxor.u32 %v892, 2147483648
        %v925 = vxor.u32 %v893, 2147483648
        %v926 = vxor.u32 %v894, 2147483648
        %v927 = vxor.u32 %v895, 2147483648
        %v928 = vxor.u32 %v896, 2147483648
        %v929 = vxor.u32 %v897, 2147483648
        %v930 = vxor.u32 %v898, 2147483648
        %v931 = vxor.u32 %v899, 2147483648
        %v932 = vxor.u32 %v900, 2147483648
        %v933 = vxor.u32 %v901, 2147483648
        %v934 = vxor.u32 %v902, 2147483648
        %v935 = vxor.u32 %v903, 2147483648
        %v936 = vxor.u32 %v904, 2147483648
        %v937 = vxor.u32 %v905, 2147483648
        %v938 = vxor.u32 %v906, 2147483648
        %v939 = vxor.u32 %v907, 2147483648
        %v940 = vxor.u32 %v908, 2147483648
        %v941 = vxor.u32 %v909, 2147483648
        %v942 = vxor.u32 %v910, 2147483648
        %v943 = vmul.f32 %v911, 1.442695
        %v944 = vpow.pop %v943
        %v945 = vmul.f32 %v912, 1.442695
        %v946 = vpow.pop %v945
        %v947 = vmul.f32 %v913, 1.442695
        %v948 = vpow.pop %v947
        %v949 = vmul.f32 %v914, 1.442695
        %v950 = vpow.pop %v949
        %v951 = vmul.f32 %v915, 1.442695
        %v952 = vpow.pop %v951
        %v953 = vmul.f32 %v916, 1.442695
        %v954 = vpow.pop %v953
        %v955 = vmul.f32 %v917, 1.442695
        %v956 = vpow.pop %v955
        %v957 = vmul.f32 %v918, 1.442695
        %v958 = vpow.pop %v957
        %v959 = vmul.f32 %v919, 1.442695
        %v960 = vpow.pop %v959
        %v961 = vmul.f32 %v920, 1.442695
        %v962 = vpow.pop %v961
        %v963 = vmul.f32 %v921, 1.442695
        %v964 = vpow.pop %v963
        %v965 = vmul.f32 %v922, 1.442695
        %v966 = vpow.pop %v965
        %v967 = vmul.f32 %v923, 1.442695
        %v968 = vpow.pop %v967
        %v969 = vmul.f32 %v924, 1.442695
        %v970 = vpow.pop %v969
        %v971 = vmul.f32 %v925, 1.442695
        %v972 = vpow.pop %v971
        %v973 = vmul.f32 %v926, 1.442695
        %v974 = vpow.pop %v973
        %v975 = vmul.f32 %v927, 1.442695
        %v976 = vpow.pop %v975
        %v977 = vmul.f32 %v928, 1.442695
        %v978 = vpow.pop %v977
        %v979 = vmul.f32 %v929, 1.442695
        %v980 = vpow.pop %v979
        %v981 = vmul.f32 %v930, 1.442695
        %v982 = vpow.pop %v981
        %v983 = vmul.f32 %v931, 1.442695
        %v984 = vpow.pop %v983
        %v985 = vmul.f32 %v932, 1.442695
        %v986 = vpow.pop %v985
        %v987 = vmul.f32 %v933, 1.442695
        %v988 = vpow.pop %v987
        %v989 = vmul.f32 %v934, 1.442695
        %v990 = vpow.pop %v989
        %v991 = vmul.f32 %v935, 1.442695
        %v992 = vpow.pop %v991
        %v993 = vmul.f32 %v936, 1.442695
        %v994 = vpow.pop %v993
        %v995 = vmul.f32 %v937, 1.442695
        %v996 = vpow.pop %v995
        %v997 = vmul.f32 %v938, 1.442695
        %v998 = vpow.pop %v997
        %v999 = vmul.f32 %v939, 1.442695
        %v1000 = vpow.pop %v999
        %v1001 = vmul.f32 %v940, 1.442695
        %v1002 = vpow.pop %v1001
        %v1003 = vmul.f32 %v941, 1.442695
        %v1004 = vpow.pop %v1003
        %v1005 = vmul.f32 %v942, 1.442695
        %v1006 = vpow.pop %v1005
        %v1007 = vadd.f32 %v944, 1.0
        %v1008 = vadd.f32 %v946, 1.0
        %v1009 = vadd.f32 %v948, 1.0
        %v1010 = vadd.f32 %v950, 1.0
        %v1011 = vadd.f32 %v952, 1.0
        %v1012 = vadd.f32 %v954, 1.0
        %v1013 = vadd.f32 %v956, 1.0
        %v1014 = vadd.f32 %v958, 1.0
        %v1015 = vadd.f32 %v960, 1.0
        %v1016 = vadd.f32 %v962, 1.0
        %v1017 = vadd.f32 %v964, 1.0
        %v1018 = vadd.f32 %v966, 1.0
        %v1019 = vadd.f32 %v968, 1.0
        %v1020 = vadd.f32 %v970, 1.0
        %v1021 = vadd.f32 %v972, 1.0
        %v1022 = vadd.f32 %v974, 1.0
        %v1023 = vadd.f32 %v976, 1.0
        %v1024 = vadd.f32 %v978, 1.0
        %v1025 = vadd.f32 %v980, 1.0
        %v1026 = vadd.f32 %v982, 1.0
        %v1027 = vadd.f32 %v984, 1.0
        %v1028 = vadd.f32 %v986, 1.0
        %v1029 = vadd.f32 %v988, 1.0
        %v1030 = vadd.f32 %v990, 1.0
        %v1031 = vadd.f32 %v992, 1.0
        %v1032 = vadd.f32 %v994, 1.0
        %v1033 = vadd.f32 %v996, 1.0
        %v1034 = vadd.f32 %v998, 1.0
        %v1035 = vadd.f32 %v1000, 1.0
        %v1036 = vadd.f32 %v1002, 1.0
        %v1037 = vadd.f32 %v1004, 1.0
        %v1038 = vadd.f32 %v1006, 1.0
        %v1039 = vrcp.pop %v1007
        %v1040 = vmul.f32 1.0, %v1039
        %v1041 = vrcp.pop %v1008
        %v1042 = vmul.f32 1.0, %v1041
        %v1043 = vrcp.pop %v1009
        %v1044 = vmul.f32 1.0, %v1043
        %v1045 = vrcp.pop %v1010
        %v1046 = vmul.f32 1.0, %v1045
        %v1047 = vrcp.pop %v1011
        %v1048 = vmul.f32 1.0, %v1047
        %v1049 = vrcp.pop %v1012
        %v1050 = vmul.f32 1.0, %v1049
        %v1051 = vrcp.pop %v1013
        %v1052 = vmul.f32 1.0, %v1051
        %v1053 = vrcp.pop %v1014
        %v1054 = vmul.f32 1.0, %v1053
        %v1055 = vrcp.pop %v1015
        %v1056 = vmul.f32 1.0, %v1055
        %v1057 = vrcp.pop %v1016
        %v1058 = vmul.f32 1.0, %v1057
        %v1059 = vrcp.pop %v1017
        %v1060 = vmul.f32 1.0, %v1059
        %v1061 = vrcp.pop %v1018
        %v1062 = vmul.f32 1.0, %v1061
        %v1063 = vrcp.pop %v1019
        %v1064 = vmul.f32 1.0, %v1063
        %v1065 = vrcp.pop %v1020
        %v1066 = vmul.f32 1.0, %v1065
        %v1067 = vrcp.pop %v1021
        %v1068 = vmul.f32 1.0, %v1067
        %v1069 = vrcp.pop %v1022
        %v1070 = vmul.f32 1.0, %v1069
        %v1071 = vrcp.pop %v1023
        %v1072 = vmul.f32 1.0, %v1071
        %v1073 = vrcp.pop %v1024
        %v1074 = vmul.f32 1.0, %v1073
        %v1075 = vrcp.pop %v1025
        %v1076 = vmul.f32 1.0, %v1075
        %v1077 = vrcp.pop %v1026
        %v1078 = vmul.f32 1.0, %v1077
        %v1079 = vrcp.pop %v1027
        %v1080 = vmul.f32 1.0, %v1079
        %v1081 = vrcp.pop %v1028
        %v1082 = vmul.f32 1.0, %v1081
        %v1083 = vrcp.pop %v1029
        %v1084 = vmul.f32 1.0, %v1083
        %v1085 = vrcp.pop %v1030
        %v1086 = vmul.f32 1.0, %v1085
        %v1087 = vrcp.pop %v1031
        %v1088 = vmul.f32 1.0, %v1087
        %v1089 = vrcp.pop %v1032
        %v1090 = vmul.f32 1.0, %v1089
        %v1091 = vrcp.pop %v1033
        %v1092 = vmul.f32 1.0, %v1091
        %v1093 = vrcp.pop %v1034
        %v1094 = vmul.f32 1.0, %v1093
        %v1095 = vrcp.pop %v1035
        %v1096 = vmul.f32 1.0, %v1095
        %v1097 = vrcp.pop %v1036
        %v1098 = vmul.f32 1.0, %v1097
        %v1099 = vrcp.pop %v1037
        %v1100 = vmul.f32 1.0, %v1099
        %v1101 = vrcp.pop %v1038
        %v1102 = vmul.f32 1.0, %v1101
        %v1103 = vmul.f32 %v879, %v1040
        %v1104 = vmul.f32 %v880, %v1042
        %v1105 = vmul.f32 %v881, %v1044
        %v1106 = vmul.f32 %v882, %v1046
        %v1107 = vmul.f32 %v883, %v1048
        %v1108 = vmul.f32 %v884, %v1050
        %v1109 = vmul.f32 %v885, %v1052
        %v1110 = vmul.f32 %v886, %v1054
        %v1111 = vmul.f32 %v887, %v1056
        %v1112 = vmul.f32 %v888, %v1058
        %v1113 = vmul.f32 %v889, %v1060
        %v1114 = vmul.f32 %v890, %v1062
        %v1115 = vmul.f32 %v891, %v1064
        %v1116 = vmul.f32 %v892, %v1066
        %v1117 = vmul.f32 %v893, %v1068
        %v1118 = vmul.f32 %v894, %v1070
        %v1119 = vmul.f32 %v895, %v1072
        %v1120 = vmul.f32 %v896, %v1074
        %v1121 = vmul.f32 %v897, %v1076
        %v1122 = vmul.f32 %v898, %v1078
        %v1123 = vmul.f32 %v899, %v1080
        %v1124 = vmul.f32 %v900, %v1082
        %v1125 = vmul.f32 %v901, %v1084
        %v1126 = vmul.f32 %v902, %v1086
        %v1127 = vmul.f32 %v903, %v1088
        %v1128 = vmul.f32 %v904, %v1090
        %v1129 = vmul.f32 %v905, %v1092
        %v1130 = vmul.f32 %v906, %v1094
        %v1131 = vmul.f32 %v907, %v1096
        %v1132 = vmul.f32 %v908, %v1098
        %v1133 = vmul.f32 %v909, %v1100
        %v1134 = vmul.f32 %v910, %v1102
        %vm1135 = vcmask 130048
        %1136 = vst.msk [vmem:[#allocation2] sm:$0xff] %vm1135, 0.0
        %1137 = vst.msk [vmem:[#allocation2 + $0x8] sm:$0xff] %vm1135, 0.0
        %vm1138 = vcmask 123904
        %1139 = vst.msk [vmem:[#allocation2 + $0x10] sm:$0x3] %vm1138, 0.0
        %1140 = vst.msk [vmem:[#allocation2 + $0x18] sm:$0xff] %vm1135, 0.0
        %1141 = vst.msk [vmem:[#allocation2 + $0x20] sm:$0xff] %vm1135, 0.0
        %1142 = vst.msk [vmem:[#allocation2 + $0x28] sm:$0x3] %vm1138, 0.0
        %1143 = vst.msk [vmem:[#allocation2 + $0x30] sm:$0xff] %vm1135, 0.0
        %1144 = vst.msk [vmem:[#allocation2 + $0x38] sm:$0xff] %vm1135, 0.0
        %1145 = vst.msk [vmem:[#allocation2 + $0x40] sm:$0x3] %vm1138, 0.0
        %1146 = vst.msk [vmem:[#allocation2 + $0x48] sm:$0xff] %vm1135, 0.0
        %1147 = vst.msk [vmem:[#allocation2 + $0x50] sm:$0xff] %vm1135, 0.0
        %1148 = vst.msk [vmem:[#allocation2 + $0x58] sm:$0x3] %vm1138, 0.0
        %1149 = vst.msk [vmem:[#allocation2 + $0x60] sm:$0xff] %vm1135, 0.0
        %1150 = vst.msk [vmem:[#allocation2 + $0x68] sm:$0xff] %vm1135, 0.0
        %1151 = vst.msk [vmem:[#allocation2 + $0x70] sm:$0x3] %vm1138, 0.0
        %1152 = vst.msk [vmem:[#allocation2 + $0x78] sm:$0xff] %vm1135, 0.0
        %1153 = vst.msk [vmem:[#allocation2 + $0x80] sm:$0xff] %vm1135, 0.0
        %1154 = vst.msk [vmem:[#allocation2 + $0x88] sm:$0x3] %vm1138, 0.0
        %1155 = vst.msk [vmem:[#allocation2 + $0x90] sm:$0xff] %vm1135, 0.0
        %1156 = vst.msk [vmem:[#allocation2 + $0x98] sm:$0xff] %vm1135, 0.0
        %1157 = vst.msk [vmem:[#allocation2 + $0xa0] sm:$0x3] %vm1138, 0.0
        %1158 = vst.msk [vmem:[#allocation2 + $0xa8] sm:$0xff] %vm1135, 0.0
        %1159 = vst.msk [vmem:[#allocation2 + $0xb0] sm:$0xff] %vm1135, 0.0
        %1160 = vst.msk [vmem:[#allocation2 + $0xb8] sm:$0x3] %vm1138, 0.0
        %1161 = vst.msk [vmem:[#allocation2 + $0xc0] sm:$0xff] %vm1135, 0.0
        %1162 = vst.msk [vmem:[#allocation2 + $0xc8] sm:$0xff] %vm1135, 0.0
        %1163 = vst.msk [vmem:[#allocation2 + $0xd0] sm:$0x3] %vm1138, 0.0
        %1164 = vst.msk [vmem:[#allocation2 + $0xd8] sm:$0xff] %vm1135, 0.0
        %1165 = vst.msk [vmem:[#allocation2 + $0xe0] sm:$0xff] %vm1135, 0.0
        %1166 = vst.msk [vmem:[#allocation2 + $0xe8] sm:$0x3] %vm1138, 0.0
        %1167 = vst.msk [vmem:[#allocation2 + $0xf0] sm:$0xff] %vm1135, 0.0
        %1168 = vst.msk [vmem:[#allocation2 + $0xf8] sm:$0xff] %vm1135, 0.0
        %1169 = vst.msk [vmem:[#allocation2 + $0x100] sm:$0x3] %vm1138, 0.0
        %1170 = vst.msk [vmem:[#allocation2 + $0x108] sm:$0xff] %vm1135, 0.0
        %1171 = vst.msk [vmem:[#allocation2 + $0x110] sm:$0xff] %vm1135, 0.0
        %1172 = vst.msk [vmem:[#allocation2 + $0x118] sm:$0x3] %vm1138, 0.0
        %1173 = vst.msk [vmem:[#allocation2 + $0x120] sm:$0xff] %vm1135, 0.0
        %1174 = vst.msk [vmem:[#allocation2 + $0x128] sm:$0xff] %vm1135, 0.0
        %1175 = vst.msk [vmem:[#allocation2 + $0x130] sm:$0x3] %vm1138, 0.0
        %1176 = vst.msk [vmem:[#allocation2 + $0x138] sm:$0xff] %vm1135, 0.0
        %1177 = vst.msk [vmem:[#allocation2 + $0x140] sm:$0xff] %vm1135, 0.0
        %1178 = vst.msk [vmem:[#allocation2 + $0x148] sm:$0x3] %vm1138, 0.0
        %1179 = vst.msk [vmem:[#allocation2 + $0x150] sm:$0xff] %vm1135, 0.0
        %1180 = vst.msk [vmem:[#allocation2 + $0x158] sm:$0xff] %vm1135, 0.0
        %1181 = vst.msk [vmem:[#allocation2 + $0x160] sm:$0x3] %vm1138, 0.0
        %1182 = vst.msk [vmem:[#allocation2 + $0x168] sm:$0xff] %vm1135, 0.0
        %1183 = vst.msk [vmem:[#allocation2 + $0x170] sm:$0xff] %vm1135, 0.0
        %1184 = vst.msk [vmem:[#allocation2 + $0x178] sm:$0x3] %vm1138, 0.0
        %1185 = vst.msk [vmem:[#allocation2 + $0x180] sm:$0xff] %vm1135, 0.0
        %1186 = vst.msk [vmem:[#allocation2 + $0x188] sm:$0xff] %vm1135, 0.0
        %1187 = vst.msk [vmem:[#allocation2 + $0x190] sm:$0x3] %vm1138, 0.0
        %1188 = vst.msk [vmem:[#allocation2 + $0x198] sm:$0xff] %vm1135, 0.0
        %1189 = vst.msk [vmem:[#allocation2 + $0x1a0] sm:$0xff] %vm1135, 0.0
        %1190 = vst.msk [vmem:[#allocation2 + $0x1a8] sm:$0x3] %vm1138, 0.0
        %s1191 = scalar_lea.vmem [#allocation2], 24
        %1192 = vst.msk [vmem:[%s1191 + $0x1] sm:$0xff] %vm1135, %v1103
        %1193 = vst.msk [vmem:[%s1191 + $0x9] sm:$0xff] %vm1135, %v1104
        %s1194 = scalar_lea.vmem [#allocation2], 48
        %1195 = vst.msk [vmem:[%s1194 + $0x1] sm:$0xff] %vm1135, %v1105
        %1196 = vst.msk [vmem:[%s1194 + $0x9] sm:$0xff] %vm1135, %v1106
        %s1197 = scalar_lea.vmem [#allocation2], 72
        %1198 = vst.msk [vmem:[%s1197 + $0x1] sm:$0xff] %vm1135, %v1107
        %1199 = vst.msk [vmem:[%s1197 + $0x9] sm:$0xff] %vm1135, %v1108
        %s1200 = scalar_lea.vmem [#allocation2], 96
        %1201 = vst.msk [vmem:[%s1200 + $0x1] sm:$0xff] %vm1135, %v1109
        %1202 = vst.msk [vmem:[%s1200 + $0x9] sm:$0xff] %vm1135, %v1110
        %s1203 = scalar_lea.vmem [#allocation2], 120
        %1204 = vst.msk [vmem:[%s1203 + $0x1] sm:$0xff] %vm1135, %v1111
        %1205 = vst.msk [vmem:[%s1203 + $0x9] sm:$0xff] %vm1135, %v1112
        %s1206 = scalar_lea.vmem [#allocation2], 144
        %1207 = vst.msk [vmem:[%s1206 + $0x1] sm:$0xff] %vm1135, %v1113
        %1208 = vst.msk [vmem:[%s1206 + $0x9] sm:$0xff] %vm1135, %v1114
        %s1209 = scalar_lea.vmem [#allocation2], 168
        %1210 = vst.msk [vmem:[%s1209 + $0x1] sm:$0xff] %vm1135, %v1115
        %1211 = vst.msk [vmem:[%s1209 + $0x9] sm:$0xff] %vm1135, %v1116
        %s1212 = scalar_lea.vmem [#allocation2], 192
        %1213 = vst.msk [vmem:[%s1212 + $0x1] sm:$0xff] %vm1135, %v1117
        %1214 = vst.msk [vmem:[%s1212 + $0x9] sm:$0xff] %vm1135, %v1118
        %s1215 = scalar_lea.vmem [#allocation2], 216
        %1216 = vst.msk [vmem:[%s1215 + $0x1] sm:$0xff] %vm1135, %v1119
        %1217 = vst.msk [vmem:[%s1215 + $0x9] sm:$0xff] %vm1135, %v1120
        %s1218 = scalar_lea.vmem [#allocation2], 240
        %1219 = vst.msk [vmem:[%s1218 + $0x1] sm:$0xff] %vm1135, %v1121
        %1220 = vst.msk [vmem:[%s1218 + $0x9] sm:$0xff] %vm1135, %v1122
        %s1221 = scalar_lea.vmem [#allocation2], 264
        %1222 = vst.msk [vmem:[%s1221 + $0x1] sm:$0xff] %vm1135, %v1123
        %1223 = vst.msk [vmem:[%s1221 + $0x9] sm:$0xff] %vm1135, %v1124
        %s1224 = scalar_lea.vmem [#allocation2], 288
        %1225 = vst.msk [vmem:[%s1224 + $0x1] sm:$0xff] %vm1135, %v1125
        %1226 = vst.msk [vmem:[%s1224 + $0x9] sm:$0xff] %vm1135, %v1126
        %s1227 = scalar_lea.vmem [#allocation2], 312
        %1228 = vst.msk [vmem:[%s1227 + $0x1] sm:$0xff] %vm1135, %v1127
        %1229 = vst.msk [vmem:[%s1227 + $0x9] sm:$0xff] %vm1135, %v1128
        %s1230 = scalar_lea.vmem [#allocation2], 336
        %1231 = vst.msk [vmem:[%s1230 + $0x1] sm:$0xff] %vm1135, %v1129
        %1232 = vst.msk [vmem:[%s1230 + $0x9] sm:$0xff] %vm1135, %v1130
        %s1233 = scalar_lea.vmem [#allocation2], 360
        %1234 = vst.msk [vmem:[%s1233 + $0x1] sm:$0xff] %vm1135, %v1131
        %1235 = vst.msk [vmem:[%s1233 + $0x9] sm:$0xff] %vm1135, %v1132
        %s1236 = scalar_lea.vmem [#allocation2], 384
        %1237 = vst.msk [vmem:[%s1236 + $0x1] sm:$0xff] %vm1135, %v1133
        %1238 = vst.msk [vmem:[%s1236 + $0x9] sm:$0xff] %vm1135, %v1134
        %v1239 = vld [vmem:[#allocation2] ss:$2 sm:$0xff]
        %s1240 = scalar_lea.vmem [#allocation2], 24
        %v1241 = vld [vmem:[%s1240] ss:$2 sm:$0xff]
        %s1242 = scalar_lea.vmem [#allocation2], 48
        %v1243 = vld [vmem:[%s1242] ss:$2 sm:$0xff]
        %s1244 = scalar_lea.vmem [#allocation2], 72
        %v1245 = vld [vmem:[%s1244] ss:$2 sm:$0xff]
        %s1246 = scalar_lea.vmem [#allocation2], 96
        %v1247 = vld [vmem:[%s1246] ss:$2 sm:$0xff]
        %s1248 = scalar_lea.vmem [#allocation2], 120
        %v1249 = vld [vmem:[%s1248] ss:$2 sm:$0xff]
        %s1250 = scalar_lea.vmem [#allocation2], 144
        %v1251 = vld [vmem:[%s1250] ss:$2 sm:$0xff]
        %s1252 = scalar_lea.vmem [#allocation2], 168
        %v1253 = vld [vmem:[%s1252] ss:$2 sm:$0xff]
        %s1254 = scalar_lea.vmem [#allocation2], 192
        %v1255 = vld [vmem:[%s1254] ss:$2 sm:$0xff]
        %s1256 = scalar_lea.vmem [#allocation2], 216
        %v1257 = vld [vmem:[%s1256] ss:$2 sm:$0xff]
        %s1258 = scalar_lea.vmem [#allocation2], 240
        %v1259 = vld [vmem:[%s1258] ss:$2 sm:$0xff]
        %s1260 = scalar_lea.vmem [#allocation2], 264
        %v1261 = vld [vmem:[%s1260] ss:$2 sm:$0xff]
        %s1262 = scalar_lea.vmem [#allocation2], 288
        %v1263 = vld [vmem:[%s1262] ss:$2 sm:$0xff]
        %s1264 = scalar_lea.vmem [#allocation2], 312
        %v1265 = vld [vmem:[%s1264] ss:$2 sm:$0xff]
        %s1266 = scalar_lea.vmem [#allocation2], 336
        %v1267 = vld [vmem:[%s1266] ss:$2 sm:$0xff]
        %s1268 = scalar_lea.vmem [#allocation2], 360
        %v1269 = vld [vmem:[%s1268] ss:$2 sm:$0xff]
        %s1270 = scalar_lea.vmem [#allocation2], 384
        %v1271 = vld [vmem:[%s1270] ss:$2 sm:$0xff]
        %s1272 = scalar_lea.vmem [#allocation2], 1
        %v1273 = vld [vmem:[%s1272] ss:$2 sm:$0xff]
        %s1274 = scalar_lea.vmem [#allocation2], 25
        %v1275 = vld [vmem:[%s1274] ss:$2 sm:$0xff]
        %s1276 = scalar_lea.vmem [#allocation2], 49
        %v1277 = vld [vmem:[%s1276] ss:$2 sm:$0xff]
        %s1278 = scalar_lea.vmem [#allocation2], 73
        %v1279 = vld [vmem:[%s1278] ss:$2 sm:$0xff]
        %s1280 = scalar_lea.vmem [#allocation2], 97
        %v1281 = vld [vmem:[%s1280] ss:$2 sm:$0xff]
        %s1282 = scalar_lea.vmem [#allocation2], 121
        %v1283 = vld [vmem:[%s1282] ss:$2 sm:$0xff]
        %s1284 = scalar_lea.vmem [#allocation2], 145
        %v1285 = vld [vmem:[%s1284] ss:$2 sm:$0xff]
        %s1286 = scalar_lea.vmem [#allocation2], 169
        %v1287 = vld [vmem:[%s1286] ss:$2 sm:$0xff]
        %s1288 = scalar_lea.vmem [#allocation2], 193
        %v1289 = vld [vmem:[%s1288] ss:$2 sm:$0xff]
        %s1290 = scalar_lea.vmem [#allocation2], 217
        %v1291 = vld [vmem:[%s1290] ss:$2 sm:$0xff]
        %s1292 = scalar_lea.vmem [#allocation2], 241
        %v1293 = vld [vmem:[%s1292] ss:$2 sm:$0xff]
        %s1294 = scalar_lea.vmem [#allocation2], 265
        %v1295 = vld [vmem:[%s1294] ss:$2 sm:$0xff]
        %s1296 = scalar_lea.vmem [#allocation2], 289
        %v1297 = vld [vmem:[%s1296] ss:$2 sm:$0xff]
        %s1298 = scalar_lea.vmem [#allocation2], 313
        %v1299 = vld [vmem:[%s1298] ss:$2 sm:$0xff]
        %s1300 = scalar_lea.vmem [#allocation2], 337
        %v1301 = vld [vmem:[%s1300] ss:$2 sm:$0xff]
        %s1302 = scalar_lea.vmem [#allocation2], 361
        %v1303 = vld [vmem:[%s1302] ss:$2 sm:$0xff]
        %s1304 = scalar_lea.vmem [#allocation2], 385
        %v1305 = vld [vmem:[%s1304] ss:$2 sm:$0xff]
        %s1306 = scalar_lea.vmem [#allocation2], 2
        %v1307 = vld [vmem:[%s1306] ss:$2 sm:$0xff]
        %s1308 = scalar_lea.vmem [#allocation2], 26
        %v1309 = vld [vmem:[%s1308] ss:$2 sm:$0xff]
        %s1310 = scalar_lea.vmem [#allocation2], 50
        %v1311 = vld [vmem:[%s1310] ss:$2 sm:$0xff]
        %s1312 = scalar_lea.vmem [#allocation2], 74
        %v1313 = vld [vmem:[%s1312] ss:$2 sm:$0xff]
        %s1314 = scalar_lea.vmem [#allocation2], 98
        %v1315 = vld [vmem:[%s1314] ss:$2 sm:$0xff]
        %s1316 = scalar_lea.vmem [#allocation2], 122
        %v1317 = vld [vmem:[%s1316] ss:$2 sm:$0xff]
        %s1318 = scalar_lea.vmem [#allocation2], 146
        %v1319 = vld [vmem:[%s1318] ss:$2 sm:$0xff]
        %s1320 = scalar_lea.vmem [#allocation2], 170
        %v1321 = vld [vmem:[%s1320] ss:$2 sm:$0xff]
        %s1322 = scalar_lea.vmem [#allocation2], 194
        %v1323 = vld [vmem:[%s1322] ss:$2 sm:$0xff]
        %s1324 = scalar_lea.vmem [#allocation2], 218
        %v1325 = vld [vmem:[%s1324] ss:$2 sm:$0xff]
        %s1326 = scalar_lea.vmem [#allocation2], 242
        %v1327 = vld [vmem:[%s1326] ss:$2 sm:$0xff]
        %s1328 = scalar_lea.vmem [#allocation2], 266
        %v1329 = vld [vmem:[%s1328] ss:$2 sm:$0xff]
        %s1330 = scalar_lea.vmem [#allocation2], 290
        %v1331 = vld [vmem:[%s1330] ss:$2 sm:$0xff]
        %s1332 = scalar_lea.vmem [#allocation2], 314
        %v1333 = vld [vmem:[%s1332] ss:$2 sm:$0xff]
        %s1334 = scalar_lea.vmem [#allocation2], 338
        %v1335 = vld [vmem:[%s1334] ss:$2 sm:$0xff]
        %s1336 = scalar_lea.vmem [#allocation2], 362
        %v1337 = vld [vmem:[%s1336] ss:$2 sm:$0xff]
        %s1338 = scalar_lea.vmem [#allocation2], 386
        %v1339 = vld [vmem:[%s1338] ss:$2 sm:$0xff]
        %1348 = vrot.lane.b32.xlu0 %v1241, 16
        %v1349 = vpop.permute.xlu0 %1348
        %1350 = vrot.lane.b32.xlu0 %v1245, 16
        %v1351 = vpop.permute.xlu0 %1350
        %1352 = vrot.lane.b32.xlu0 %v1249, 16
        %v1353 = vpop.permute.xlu0 %1352
        %1354 = vrot.lane.b32.xlu0 %v1253, 16
        %v1355 = vpop.permute.xlu0 %1354
        %1356 = vrot.lane.b32.xlu0 %v1257, 16
        %v1357 = vpop.permute.xlu0 %1356
        %1358 = vrot.lane.b32.xlu0 %v1261, 16
        %v1359 = vpop.permute.xlu0 %1358
        %1360 = vrot.lane.b32.xlu0 %v1265, 16
        %v1361 = vpop.permute.xlu0 %1360
        %1362 = vrot.lane.b32.xlu0 %v1269, 16
        %v1363 = vpop.permute.xlu0 %1362
        %1380 = vrot.lane.b32.xlu0 %v1243, 32
        %v1381 = vpop.permute.xlu0 %1380
        %1382 = vrot.lane.b32.xlu0 %v1247, 32
        %v1383 = vpop.permute.xlu0 %1382
        %1384 = vrot.lane.b32.xlu0 %v1251, 32
        %v1385 = vpop.permute.xlu0 %1384
        %1386 = vrot.lane.b32.xlu0 %v1255, 32
        %v1387 = vpop.permute.xlu0 %1386
        %1388 = vrot.lane.b32.xlu0 %v1259, 32
        %v1389 = vpop.permute.xlu0 %1388
        %1390 = vrot.lane.b32.xlu0 %v1263, 32
        %v1391 = vpop.permute.xlu0 %1390
        %1392 = vrot.lane.b32.xlu0 %v1267, 32
        %v1393 = vpop.permute.xlu0 %1392
        %1394 = vrot.lane.b32.xlu0 %v1271, 32
        %v1395 = vpop.permute.xlu0 %1394
        %1412 = vrot.lane.b32.xlu0 %v1273, 48
        %v1413 = vpop.permute.xlu0 %1412
        %1414 = vrot.lane.b32.xlu0 %v1277, 48
        %v1415 = vpop.permute.xlu0 %1414
        %1416 = vrot.lane.b32.xlu0 %v1281, 48
        %v1417 = vpop.permute.xlu0 %1416
        %1418 = vrot.lane.b32.xlu0 %v1285, 48
        %v1419 = vpop.permute.xlu0 %1418
        %1420 = vrot.lane.b32.xlu0 %v1289, 48
        %v1421 = vpop.permute.xlu0 %1420
        %1422 = vrot.lane.b32.xlu0 %v1293, 48
        %v1423 = vpop.permute.xlu0 %1422
        %1424 = vrot.lane.b32.xlu0 %v1297, 48
        %v1425 = vpop.permute.xlu0 %1424
        %1426 = vrot.lane.b32.xlu0 %v1301, 48
        %v1427 = vpop.permute.xlu0 %1426
        %1444 = vrot.lane.b32.xlu0 %v1275, 64
        %v1445 = vpop.permute.xlu0 %1444
        %1446 = vrot.lane.b32.xlu0 %v1279, 64
        %v1447 = vpop.permute.xlu0 %1446
        %1448 = vrot.lane.b32.xlu0 %v1283, 64
        %v1449 = vpop.permute.xlu0 %1448
        %1450 = vrot.lane.b32.xlu0 %v1287, 64
        %v1451 = vpop.permute.xlu0 %1450
        %1452 = vrot.lane.b32.xlu0 %v1291, 64
        %v1453 = vpop.permute.xlu0 %1452
        %1454 = vrot.lane.b32.xlu0 %v1295, 64
        %v1455 = vpop.permute.xlu0 %1454
        %1456 = vrot.lane.b32.xlu0 %v1299, 64
        %v1457 = vpop.permute.xlu0 %1456
        %1458 = vrot.lane.b32.xlu0 %v1303, 64
        %v1459 = vpop.permute.xlu0 %1458
        %1469 = vrot.lane.b32.xlu0 %v1277, 80
        %v1470 = vpop.permute.xlu0 %1469
        %1471 = vrot.lane.b32.xlu0 %v1281, 80
        %v1472 = vpop.permute.xlu0 %1471
        %1473 = vrot.lane.b32.xlu0 %v1285, 80
        %v1474 = vpop.permute.xlu0 %1473
        %1475 = vrot.lane.b32.xlu0 %v1289, 80
        %v1476 = vpop.permute.xlu0 %1475
        %1477 = vrot.lane.b32.xlu0 %v1293, 80
        %v1478 = vpop.permute.xlu0 %1477
        %1479 = vrot.lane.b32.xlu0 %v1297, 80
        %v1480 = vpop.permute.xlu0 %1479
        %1481 = vrot.lane.b32.xlu0 %v1301, 80
        %v1482 = vpop.permute.xlu0 %1481
        %1483 = vrot.lane.b32.xlu0 %v1305, 80
        %v1484 = vpop.permute.xlu0 %1483
        %1501 = vrot.lane.b32.xlu0 %v1307, 96
        %v1502 = vpop.permute.xlu0 %1501
        %1503 = vrot.lane.b32.xlu0 %v1311, 96
        %v1504 = vpop.permute.xlu0 %1503
        %1505 = vrot.lane.b32.xlu0 %v1315, 96
        %v1506 = vpop.permute.xlu0 %1505
        %1507 = vrot.lane.b32.xlu0 %v1319, 96
        %v1508 = vpop.permute.xlu0 %1507
        %1509 = vrot.lane.b32.xlu0 %v1323, 96
        %v1510 = vpop.permute.xlu0 %1509
        %1511 = vrot.lane.b32.xlu0 %v1327, 96
        %v1512 = vpop.permute.xlu0 %1511
        %1513 = vrot.lane.b32.xlu0 %v1331, 96
        %v1514 = vpop.permute.xlu0 %1513
        %1515 = vrot.lane.b32.xlu0 %v1335, 96
        %v1516 = vpop.permute.xlu0 %1515
        %1533 = vrot.lane.b32.xlu0 %v1309, 112
        %v1534 = vpop.permute.xlu0 %1533
        %1535 = vrot.lane.b32.xlu0 %v1313, 112
        %v1536 = vpop.permute.xlu0 %1535
        %1537 = vrot.lane.b32.xlu0 %v1317, 112
        %v1538 = vpop.permute.xlu0 %1537
        %1539 = vrot.lane.b32.xlu0 %v1321, 112
        %v1540 = vpop.permute.xlu0 %1539
        %1541 = vrot.lane.b32.xlu0 %v1325, 112
        %v1542 = vpop.permute.xlu0 %1541
        %1543 = vrot.lane.b32.xlu0 %v1329, 112
        %v1544 = vpop.permute.xlu0 %1543
        %1545 = vrot.lane.b32.xlu0 %v1333, 112
        %v1546 = vpop.permute.xlu0 %1545
        %1547 = vrot.lane.b32.xlu0 %v1337, 112
        %v1548 = vpop.permute.xlu0 %1547
        %v1557 = vsel %vm1135, %v1239, %v1349
        %v1558 = vsel %vm1135, %v1243, %v1351
        %v1559 = vsel %vm1135, %v1247, %v1353
        %v1560 = vsel %vm1135, %v1251, %v1355
        %v1561 = vsel %vm1135, %v1255, %v1357
        %v1562 = vsel %vm1135, %v1259, %v1359
        %v1563 = vsel %vm1135, %v1263, %v1361
        %v1564 = vsel %vm1135, %v1267, %v1363
        %vm1565 = vcmask 261120
        %v1566 = vsel %vm1565, %v1557, %v1381
        %v1567 = vsel %vm1565, %v1558, %v1383
        %v1568 = vsel %vm1565, %v1559, %v1385
        %v1569 = vsel %vm1565, %v1560, %v1387
        %v1570 = vsel %vm1565, %v1561, %v1389
        %v1571 = vsel %vm1565, %v1562, %v1391
        %v1572 = vsel %vm1565, %v1563, %v1393
        %v1573 = vsel %vm1565, %v1564, %v1395
        %vm1574 = vcmask 392192
        %v1575 = vsel %vm1574, %v1566, %v1413
        %v1576 = vsel %vm1574, %v1567, %v1415
        %v1577 = vsel %vm1574, %v1568, %v1417
        %v1578 = vsel %vm1574, %v1569, %v1419
        %v1579 = vsel %vm1574, %v1570, %v1421
        %v1580 = vsel %vm1574, %v1571, %v1423
        %v1581 = vsel %vm1574, %v1572, %v1425
        %v1582 = vsel %vm1574, %v1573, %v1427
        %vm1583 = vcmask 523264
        %v1584 = vsel %vm1583, %v1575, %v1445
        %v1585 = vsel %vm1583, %v1576, %v1447
        %v1586 = vsel %vm1583, %v1577, %v1449
        %v1587 = vsel %vm1583, %v1578, %v1451
        %v1588 = vsel %vm1583, %v1579, %v1453
        %v1589 = vsel %vm1583, %v1580, %v1455
        %v1590 = vsel %vm1583, %v1581, %v1457
        %v1591 = vsel %vm1583, %v1582, %v1459
        %vm1592 = vcmask 654336
        %v1593 = vsel %vm1592, %v1584, %v1470
        %v1594 = vsel %vm1592, %v1585, %v1472
        %v1595 = vsel %vm1592, %v1586, %v1474
        %v1596 = vsel %vm1592, %v1587, %v1476
        %v1597 = vsel %vm1592, %v1588, %v1478
        %v1598 = vsel %vm1592, %v1589, %v1480
        %v1599 = vsel %vm1592, %v1590, %v1482
        %v1600 = vsel %vm1592, %v1591, %v1484
        %vm1601 = vcmask 785408
        %v1602 = vsel %vm1601, %v1593, %v1502
        %v1603 = vsel %vm1601, %v1594, %v1504
        %v1604 = vsel %vm1601, %v1595, %v1506
        %v1605 = vsel %vm1601, %v1596, %v1508
        %v1606 = vsel %vm1601, %v1597, %v1510
        %v1607 = vsel %vm1601, %v1598, %v1512
        %v1608 = vsel %vm1601, %v1599, %v1514
        %v1609 = vsel %vm1601, %v1600, %v1516
        %vm1610 = vcmask 916480
        %v1611 = vsel %vm1610, %v1602, %v1534
        %v1612 = vsel %vm1610, %v1603, %v1536
        %v1613 = vsel %vm1610, %v1604, %v1538
        %v1614 = vsel %vm1610, %v1605, %v1540
        %v1615 = vsel %vm1610, %v1606, %v1542
        %v1616 = vsel %vm1610, %v1607, %v1544
        %v1617 = vsel %vm1610, %v1608, %v1546
        %v1618 = vsel %vm1610, %v1609, %v1548
        %v1619 = vpack.c.bf16 %v1612, %v1611
        %v1620 = vpack.c.bf16 %v1315, %v1311
        %v1621 = vpack.c.bf16 %v1614, %v1613
        %v1622 = vpack.c.bf16 %v1323, %v1319
        %v1623 = vpack.c.bf16 %v1616, %v1615
        %v1624 = vpack.c.bf16 %v1331, %v1327
        %v1625 = vpack.c.bf16 %v1618, %v1617
        %v1626 = vpack.c.bf16 %v1339, %v1335
        %v1627 = vld [vmem:[%s3] sm:$0xf]
        %v1628 = vld [vmem:[%s3 + $0x4] sm:$0xf]
        %v1629 = vld [vmem:[%s3 + $0x8] sm:$0xf]
        %v1630 = vld [vmem:[%s3 + $0xc] sm:$0xf]
        %v1631 = vld [vmem:[%s3 + $0x10] sm:$0xf]
        %v1632 = vld [vmem:[%s3 + $0x14] sm:$0xf]
        %v1633 = vld [vmem:[%s3 + $0x18] sm:$0xf]
        %v1634 = vld [vmem:[%s3 + $0x1c] sm:$0xf]
        %v1635 = vld [vmem:[%s3 + $0x20] sm:$0xf]
        %v1636 = vld [vmem:[%s3 + $0x24] sm:$0xf]
        %v1637 = vld [vmem:[%s3 + $0x28] sm:$0xf]
        %v1638 = vld [vmem:[%s3 + $0x2c] sm:$0xf]
        %v1639 = vld [vmem:[%s3 + $0x30] sm:$0xf]
        %v1640 = vld [vmem:[%s3 + $0x34] sm:$0xf]
        %v1641 = vld [vmem:[%s3 + $0x38] sm:$0xf]
        %v1642 = vld [vmem:[%s3 + $0x3c] sm:$0xf]
        %v1643 = vld [vmem:[%s3 + $0x40] sm:$0xf]
        %v1644 = vld [vmem:[%s3 + $0x44] sm:$0xf]
        %v1663 = vunpack.c.l.b16 %v1627
        %v1664 = vunpack.c.l.b16 %v1628
        %v1665 = vunpack.c.l.b16 %v1629
        %v1666 = vunpack.c.l.b16 %v1630
        %v1667 = vunpack.c.l.b16 %v1631
        %v1668 = vunpack.c.l.b16 %v1632
        %v1669 = vunpack.c.l.b16 %v1633
        %v1670 = vunpack.c.l.b16 %v1634
        %v1671 = vunpack.c.l.b16 %v1635
        %v1672 = vunpack.c.l.b16 %v1636
        %v1673 = vunpack.c.l.b16 %v1637
        %v1674 = vunpack.c.l.b16 %v1638
        %v1675 = vunpack.c.l.b16 %v1639
        %v1676 = vunpack.c.l.b16 %v1640
        %v1677 = vunpack.c.l.b16 %v1641
        %v1678 = vunpack.c.l.b16 %v1642
        %v1679 = vunpack.c.l.b16 %v1643
        %v1680 = vunpack.c.l.b16 %v1644
        %v1681 = vpack.c.b16 %v1664, %v1663
        %v1682 = vpack.c.b16 %v1666, %v1665
        %v1683 = vpack.c.b16 %v1668, %v1667
        %v1684 = vpack.c.b16 %v1670, %v1669
        %v1685 = vpack.c.b16 %v1672, %v1671
        %v1686 = vpack.c.b16 %v1674, %v1673
        %v1687 = vpack.c.b16 %v1676, %v1675
        %v1688 = vpack.c.b16 %v1678, %v1677
        %v1689 = vpack.c.b16 %v1680, %v1679
        %v1700 = vsel %vm1135, %v1620, 0
        %v1703 = vsel %vm1135, %v1622, 0
        %v1706 = vsel %vm1135, %v1624, 0
        %v1709 = vsel %vm1135, %v1626, 0
        %1711 = vmatprep.subr.bf16.mxu0 0
        %1712 = vmatpush1.bf16.msra.mxu0 %v1681
        %1713 = vmatprep.subr.bf16.mxu0 0
        %1714 = vmatpush1.bf16.msra.mxu0 %v1682
        %1715 = vmatprep.subr.bf16.mxu0 0
        %1716 = vmatpush1.bf16.msra.mxu0 %v1683
        %1717 = vmatprep.subr.bf16.mxu0 0
        %1718 = vmatpush1.bf16.msra.mxu0 %v1684
        %1719 = vmatprep.subr.bf16.mxu0 0
        %1720 = vmatpush1.bf16.msra.mxu0 %v1685
        %1721 = vmatprep.subr.bf16.mxu0 0
        %1722 = vmatpush1.bf16.msra.mxu0 %v1686
        %1723 = vmatprep.subr.bf16.mxu0 0
        %1724 = vmatpush1.bf16.msra.mxu0 %v1687
        %1725 = vmatprep.subr.bf16.mxu0 0
        %1726 = vmatpush1.bf16.msra.mxu0 %v1688
        %1727 = vmatprep.subr.bf16.mxu0 0
        %1728 = vmatpush1.bf16.msra.mxu0 %v1689
        %1729 = vmatprep.subr.bf16.mxu0 0
        %1730 = vmatpush1.bf16.msra.mxu0 0
        %1731 = vmatprep.subr.bf16.mxu0 0
        %1732 = vmatpush1.bf16.msra.mxu0 0
        %1733 = vmatprep.subr.bf16.mxu0 0
        %1734 = vmatpush1.bf16.msra.mxu0 0
        %1735 = vmatprep.subr.bf16.mxu0 0
        %1736 = vmatpush1.bf16.msra.mxu0 0
        %1737 = vmatprep.subr.bf16.mxu0 0
        %1738 = vmatpush1.bf16.msra.mxu0 0
        %1739 = vmatprep.subr.bf16.mxu0 0
        %1740 = vmatpush1.bf16.msra.mxu0 0
        %1741 = vmatprep.subr.bf16.mxu0 0
        %1742 = vmatpush1.bf16.msra.mxu0 0
        %1743 = vmatprep.mubr.bf16.mxu0 %v1700
        %1744 = vmatmul.mubr.bf16.gmra.mrb[0].mxu0 %v1619
        %v1745 = vpop.f32.mrb[0].mxu0
        %v1746 = vadd.f32 0.0, %v1745
        %v1747 = vpop.f32.mrb[0].mxu0
        %v1748 = vpop.f32.mrb[0].mxu0
        %v1749 = vadd.f32 0.0, %v1748
        %v1750 = vpop.f32.mrb[0].mxu0
        %1751 = vmatprep.mubr.bf16.mxu0 %v1703
        %1752 = vmatmul.mubr.bf16.gmra.mrb[0].mxu0 %v1621
        %v1753 = vpop.f32.mrb[0].mxu0
        %v1754 = vadd.f32 0.0, %v1753
        %v1755 = vpop.f32.mrb[0].mxu0
        %v1756 = vpop.f32.mrb[0].mxu0
        %v1757 = vadd.f32 0.0, %v1756
        %v1758 = vpop.f32.mrb[0].mxu0
        %1759 = vmatprep.mubr.bf16.mxu0 %v1706
        %1760 = vmatmul.mubr.bf16.gmra.mrb[0].mxu0 %v1623
        %v1761 = vpop.f32.mrb[0].mxu0
        %v1762 = vadd.f32 0.0, %v1761
        %v1763 = vpop.f32.mrb[0].mxu0
        %v1764 = vpop.f32.mrb[0].mxu0
        %v1765 = vadd.f32 0.0, %v1764
        %v1766 = vpop.f32.mrb[0].mxu0
        %1767 = vmatprep.mubr.bf16.mxu0 %v1709
        %1768 = vmatmul.mubr.bf16.gmra.mrb[0].mxu0 %v1625
        %v1769 = vpop.f32.mrb[0].mxu0
        %v1770 = vadd.f32 0.0, %v1769
        %v1771 = vpop.f32.mrb[0].mxu0
        %v1772 = vpop.f32.mrb[0].mxu0
        %v1773 = vadd.f32 0.0, %v1772
        %v1774 = vpop.f32.mrb[0].mxu0
        %1775 = vdwg.mxu0
        %v1776 = vld [vmem:[%s4] sm:$0x1]
        %v1777 = vlaneseq
        %v1778 = vshrl.u32 %v1777, 7
        %v1779 = vsub.s32 0, %v1778
        %v1780 = vrot.slane %v1776, %v1779
        %v1781 = vmul.f32 %v1746, %v1780
        %v1782 = vmul.f32 %v1749, %v1780
        %v1783 = vmul.f32 %v1754, %v1780
        %v1784 = vmul.f32 %v1757, %v1780
        %v1785 = vmul.f32 %v1762, %v1780
        %v1786 = vmul.f32 %v1765, %v1780
        %v1787 = vmul.f32 %v1770, %v1780
        %v1788 = vmul.f32 %v1773, %v1780
        %v1789 = vld [vmem:[%s4 + $0x1] sm:$0x1]
        %v1790 = vlaneseq
        %v1791 = vshrl.u32 %v1790, 7
        %v1792 = vsub.s32 0, %v1791
        %v1793 = vrot.slane %v1789, %v1792
        %v1794 = vadd.f32 %v1781, %v1793
        %v1795 = vadd.f32 %v1782, %v1793
        %v1796 = vadd.f32 %v1783, %v1793
        %v1797 = vadd.f32 %v1784, %v1793
        %v1798 = vadd.f32 %v1785, %v1793
        %v1799 = vadd.f32 %v1786, %v1793
        %v1800 = vadd.f32 %v1787, %v1793
        %v1801 = vadd.f32 %v1788, %v1793
        %v1802 = vxor.u32 %v1794, 2147483648
        %v1803 = vxor.u32 %v1795, 2147483648
        %v1804 = vxor.u32 %v1796, 2147483648
        %v1805 = vxor.u32 %v1797, 2147483648
        %v1806 = vxor.u32 %v1798, 2147483648
        %v1807 = vxor.u32 %v1799, 2147483648
        %v1808 = vxor.u32 %v1800, 2147483648
        %v1809 = vxor.u32 %v1801, 2147483648
        %v1810 = vmul.f32 %v1802, 1.442695
        %v1811 = vpow.pop %v1810
        %v1812 = vmul.f32 %v1803, 1.442695
        %v1813 = vpow.pop %v1812
        %v1814 = vmul.f32 %v1804, 1.442695
        %v1815 = vpow.pop %v1814
        %v1816 = vmul.f32 %v1805, 1.442695
        %v1817 = vpow.pop %v1816
        %v1818 = vmul.f32 %v1806, 1.442695
        %v1819 = vpow.pop %v1818
        %v1820 = vmul.f32 %v1807, 1.442695
        %v1821 = vpow.pop %v1820
        %v1822 = vmul.f32 %v1808, 1.442695
        %v1823 = vpow.pop %v1822
        %v1824 = vmul.f32 %v1809, 1.442695
        %v1825 = vpow.pop %v1824
        %v1826 = vadd.f32 %v1811, 1.0
        %v1827 = vadd.f32 %v1813, 1.0
        %v1828 = vadd.f32 %v1815, 1.0
        %v1829 = vadd.f32 %v1817, 1.0
        %v1830 = vadd.f32 %v1819, 1.0
        %v1831 = vadd.f32 %v1821, 1.0
        %v1832 = vadd.f32 %v1823, 1.0
        %v1833 = vadd.f32 %v1825, 1.0
        %v1834 = vrcp.pop %v1826
        %v1835 = vmul.f32 1.0, %v1834
        %v1836 = vrcp.pop %v1827
        %v1837 = vmul.f32 1.0, %v1836
        %v1838 = vrcp.pop %v1828
        %v1839 = vmul.f32 1.0, %v1838
        %v1840 = vrcp.pop %v1829
        %v1841 = vmul.f32 1.0, %v1840
        %v1842 = vrcp.pop %v1830
        %v1843 = vmul.f32 1.0, %v1842
        %v1844 = vrcp.pop %v1831
        %v1845 = vmul.f32 1.0, %v1844
        %v1846 = vrcp.pop %v1832
        %v1847 = vmul.f32 1.0, %v1846
        %v1848 = vrcp.pop %v1833
        %v1849 = vmul.f32 1.0, %v1848
        %v1850 = vmul.f32 %v1794, %v1835
        %v1851 = vmul.f32 %v1795, %v1837
        %v1852 = vmul.f32 %v1796, %v1839
        %v1853 = vmul.f32 %v1797, %v1841
        %v1854 = vmul.f32 %v1798, %v1843
        %v1855 = vmul.f32 %v1799, %v1845
        %v1856 = vmul.f32 %v1800, %v1847
        %v1857 = vmul.f32 %v1801, %v1849
        %1858 = vst.msk [vmem:[#allocation3] sm:$0xff] %vm1565, 0.0
        %vm1859 = vcmask 254976
        %1860 = vst.msk [vmem:[#allocation3 + $0x8] sm:$0x3] %vm1859, 0.0
        %1861 = vst.msk [vmem:[#allocation3 + $0x10] sm:$0xff] %vm1565, 0.0
        %1862 = vst.msk [vmem:[#allocation3 + $0x18] sm:$0x3] %vm1859, 0.0
        %1863 = vst.msk [vmem:[#allocation3 + $0x20] sm:$0xff] %vm1565, 0.0
        %1864 = vst.msk [vmem:[#allocation3 + $0x28] sm:$0x3] %vm1859, 0.0
        %1865 = vst.msk [vmem:[#allocation3 + $0x30] sm:$0xff] %vm1565, 0.0
        %1866 = vst.msk [vmem:[#allocation3 + $0x38] sm:$0x3] %vm1859, 0.0
        %1867 = vst.msk [vmem:[#allocation3 + $0x40] sm:$0xff] %vm1565, 0.0
        %1868 = vst.msk [vmem:[#allocation3 + $0x48] sm:$0x3] %vm1859, 0.0
        %1869 = vst.msk [vmem:[#allocation3 + $0x50] sm:$0xff] %vm1565, 0.0
        %1870 = vst.msk [vmem:[#allocation3 + $0x58] sm:$0x3] %vm1859, 0.0
        %1871 = vst.msk [vmem:[#allocation3 + $0x60] sm:$0xff] %vm1565, 0.0
        %1872 = vst.msk [vmem:[#allocation3 + $0x68] sm:$0x3] %vm1859, 0.0
        %1873 = vst.msk [vmem:[#allocation3 + $0x70] sm:$0xff] %vm1565, 0.0
        %1874 = vst.msk [vmem:[#allocation3 + $0x78] sm:$0x3] %vm1859, 0.0
        %1875 = vst.msk [vmem:[#allocation3 + $0x80] sm:$0xff] %vm1565, 0.0
        %1876 = vst.msk [vmem:[#allocation3 + $0x88] sm:$0x3] %vm1859, 0.0
        %1877 = vst.msk [vmem:[#allocation3 + $0x90] sm:$0xff] %vm1565, 0.0
        %1878 = vst.msk [vmem:[#allocation3 + $0x98] sm:$0x3] %vm1859, 0.0
        %s1879 = scalar_lea.vmem [#allocation3], 16
        %1880 = vst.msk [vmem:[%s1879 + $0x1] sm:$0xff] %vm1565, %v1850
        %s1881 = scalar_lea.vmem [#allocation3], 32
        %1882 = vst.msk [vmem:[%s1881 + $0x1] sm:$0xff] %vm1565, %v1851
        %s1883 = scalar_lea.vmem [#allocation3], 48
        %1884 = vst.msk [vmem:[%s1883 + $0x1] sm:$0xff] %vm1565, %v1852
        %s1885 = scalar_lea.vmem [#allocation3], 64
        %1886 = vst.msk [vmem:[%s1885 + $0x1] sm:$0xff] %vm1565, %v1853
        %s1887 = scalar_lea.vmem [#allocation3], 80
        %1888 = vst.msk [vmem:[%s1887 + $0x1] sm:$0xff] %vm1565, %v1854
        %s1889 = scalar_lea.vmem [#allocation3], 96
        %1890 = vst.msk [vmem:[%s1889 + $0x1] sm:$0xff] %vm1565, %v1855
        %s1891 = scalar_lea.vmem [#allocation3], 112
        %1892 = vst.msk [vmem:[%s1891 + $0x1] sm:$0xff] %vm1565, %v1856
        %s1893 = scalar_lea.vmem [#allocation3], 128
        %1894 = vst.msk [vmem:[%s1893 + $0x1] sm:$0xff] %vm1565, %v1857
        %v1895 = vld [vmem:[#allocation3] ss:$2 sm:$0xf]
        %s1896 = scalar_lea.vmem [#allocation3], 16
        %v1897 = vld [vmem:[%s1896] ss:$2 sm:$0xf]
        %s1898 = scalar_lea.vmem [#allocation3], 32
        %v1899 = vld [vmem:[%s1898] ss:$2 sm:$0xf]
        %s1900 = scalar_lea.vmem [#allocation3], 48
        %v1901 = vld [vmem:[%s1900] ss:$2 sm:$0xf]
        %s1902 = scalar_lea.vmem [#allocation3], 64
        %v1903 = vld [vmem:[%s1902] ss:$2 sm:$0xf]
        %s1904 = scalar_lea.vmem [#allocation3], 80
        %v1905 = vld [vmem:[%s1904] ss:$2 sm:$0xf]
        %s1906 = scalar_lea.vmem [#allocation3], 96
        %v1907 = vld [vmem:[%s1906] ss:$2 sm:$0xf]
        %s1908 = scalar_lea.vmem [#allocation3], 112
        %v1909 = vld [vmem:[%s1908] ss:$2 sm:$0xf]
        %s1910 = scalar_lea.vmem [#allocation3], 128
        %v1911 = vld [vmem:[%s1910] ss:$2 sm:$0xf]
        %s1912 = scalar_lea.vmem [#allocation3], 1
        %v1913 = vld [vmem:[%s1912] ss:$2 sm:$0xf]
        %s1914 = scalar_lea.vmem [#allocation3], 17
        %v1915 = vld [vmem:[%s1914] ss:$2 sm:$0xf]
        %s1916 = scalar_lea.vmem [#allocation3], 33
        %v1917 = vld [vmem:[%s1916] ss:$2 sm:$0xf]
        %s1918 = scalar_lea.vmem [#allocation3], 49
        %v1919 = vld [vmem:[%s1918] ss:$2 sm:$0xf]
        %s1920 = scalar_lea.vmem [#allocation3], 65
        %v1921 = vld [vmem:[%s1920] ss:$2 sm:$0xf]
        %s1922 = scalar_lea.vmem [#allocation3], 81
        %v1923 = vld [vmem:[%s1922] ss:$2 sm:$0xf]
        %s1924 = scalar_lea.vmem [#allocation3], 97
        %v1925 = vld [vmem:[%s1924] ss:$2 sm:$0xf]
        %s1926 = scalar_lea.vmem [#allocation3], 113
        %v1927 = vld [vmem:[%s1926] ss:$2 sm:$0xf]
        %s1928 = scalar_lea.vmem [#allocation3], 129
        %v1929 = vld [vmem:[%s1928] ss:$2 sm:$0xf]
        %s1930 = scalar_lea.vmem [#allocation3], 2
        %v1931 = vld [vmem:[%s1930] ss:$2 sm:$0xf]
        %s1932 = scalar_lea.vmem [#allocation3], 18
        %v1933 = vld [vmem:[%s1932] ss:$2 sm:$0xf]
        %s1934 = scalar_lea.vmem [#allocation3], 34
        %v1935 = vld [vmem:[%s1934] ss:$2 sm:$0xf]
        %s1936 = scalar_lea.vmem [#allocation3], 50
        %v1937 = vld [vmem:[%s1936] ss:$2 sm:$0xf]
        %s1938 = scalar_lea.vmem [#allocation3], 66
        %v1939 = vld [vmem:[%s1938] ss:$2 sm:$0xf]
        %s1940 = scalar_lea.vmem [#allocation3], 82
        %v1941 = vld [vmem:[%s1940] ss:$2 sm:$0xf]
        %s1942 = scalar_lea.vmem [#allocation3], 98
        %v1943 = vld [vmem:[%s1942] ss:$2 sm:$0xf]
        %s1944 = scalar_lea.vmem [#allocation3], 114
        %v1945 = vld [vmem:[%s1944] ss:$2 sm:$0xf]
        %s1946 = scalar_lea.vmem [#allocation3], 130
        %v1947 = vld [vmem:[%s1946] ss:$2 sm:$0xf]
        %1952 = vrot.lane.b32.xlu0 %v1897, 32
        %v1953 = vpop.permute.xlu0 %1952
        %1954 = vrot.lane.b32.xlu0 %v1901, 32
        %v1955 = vpop.permute.xlu0 %1954
        %1956 = vrot.lane.b32.xlu0 %v1905, 32
        %v1957 = vpop.permute.xlu0 %1956
        %1958 = vrot.lane.b32.xlu0 %v1909, 32
        %v1959 = vpop.permute.xlu0 %1958
        %1968 = vrot.lane.b32.xlu0 %v1899, 64
        %v1969 = vpop.permute.xlu0 %1968
        %1970 = vrot.lane.b32.xlu0 %v1903, 64
        %v1971 = vpop.permute.xlu0 %1970
        %1972 = vrot.lane.b32.xlu0 %v1907, 64
        %v1973 = vpop.permute.xlu0 %1972
        %1974 = vrot.lane.b32.xlu0 %v1911, 64
        %v1975 = vpop.permute.xlu0 %1974
        %1984 = vrot.lane.b32.xlu0 %v1913, 96
        %v1985 = vpop.permute.xlu0 %1984
        %1986 = vrot.lane.b32.xlu0 %v1917, 96
        %v1987 = vpop.permute.xlu0 %1986
        %1988 = vrot.lane.b32.xlu0 %v1921, 96
        %v1989 = vpop.permute.xlu0 %1988
        %1990 = vrot.lane.b32.xlu0 %v1925, 96
        %v1991 = vpop.permute.xlu0 %1990
        %1997 = vrot.lane.b32.xlu0 %v1917, 32
        %v1998 = vpop.permute.xlu0 %1997
        %1999 = vrot.lane.b32.xlu0 %v1921, 32
        %v2000 = vpop.permute.xlu0 %1999
        %2001 = vrot.lane.b32.xlu0 %v1925, 32
        %v2002 = vpop.permute.xlu0 %2001
        %2003 = vrot.lane.b32.xlu0 %v1929, 32
        %v2004 = vpop.permute.xlu0 %2003
        %2013 = vrot.lane.b32.xlu0 %v1931, 64
        %v2014 = vpop.permute.xlu0 %2013
        %2015 = vrot.lane.b32.xlu0 %v1935, 64
        %v2016 = vpop.permute.xlu0 %2015
        %2017 = vrot.lane.b32.xlu0 %v1939, 64
        %v2018 = vpop.permute.xlu0 %2017
        %2019 = vrot.lane.b32.xlu0 %v1943, 64
        %v2020 = vpop.permute.xlu0 %2019
        %2029 = vrot.lane.b32.xlu0 %v1933, 96
        %v2030 = vpop.permute.xlu0 %2029
        %2031 = vrot.lane.b32.xlu0 %v1937, 96
        %v2032 = vpop.permute.xlu0 %2031
        %2033 = vrot.lane.b32.xlu0 %v1941, 96
        %v2034 = vpop.permute.xlu0 %2033
        %2035 = vrot.lane.b32.xlu0 %v1945, 96
        %v2036 = vpop.permute.xlu0 %2035
        %v2041 = vsel %vm1565, %v1895, %v1953
        %v2042 = vsel %vm1565, %v1899, %v1955
        %v2043 = vsel %vm1565, %v1903, %v1957
        %v2044 = vsel %vm1565, %v1907, %v1959
        %v2045 = vsel %vm1583, %v2041, %v1969
        %v2046 = vsel %vm1583, %v2042, %v1971
        %v2047 = vsel %vm1583, %v2043, %v1973
        %v2048 = vsel %vm1583, %v2044, %v1975
        %v2049 = vsel %vm1601, %v2045, %v1985
        %v2050 = vsel %vm1601, %v2046, %v1987
        %v2051 = vsel %vm1601, %v2047, %v1989
        %v2052 = vsel %vm1601, %v2048, %v1991
        %v2053 = vsel %vm1565, %v1915, %v1998
        %v2054 = vsel %vm1565, %v1919, %v2000
        %v2055 = vsel %vm1565, %v1923, %v2002
        %v2056 = vsel %vm1565, %v1927, %v2004
        %v2057 = vsel %vm1583, %v2053, %v2014
        %v2058 = vsel %vm1583, %v2054, %v2016
        %v2059 = vsel %vm1583, %v2055, %v2018
        %v2060 = vsel %vm1583, %v2056, %v2020
        %v2061 = vsel %vm1601, %v2057, %v2030
        %v2062 = vsel %vm1601, %v2058, %v2032
        %v2063 = vsel %vm1601, %v2059, %v2034
        %v2064 = vsel %vm1601, %v2060, %v2036
        %v2074 = vcombine.low %v2049, %v2061
        %v2075 = vcombine.low %v2050, %v2062
        %v2076 = vcombine.low %v2051, %v2063
        %v2077 = vcombine.low %v2052, %v2064
        %v2078 = vcombine.low %v2074, %v2075
        %v2079 = vcombine.high %v2074, %v2075
        %v2080 = vcombine.low %v1935, %v1939
        %v2081 = vcombine.low %v2076, %v2077
        %v2082 = vcombine.high %v2076, %v2077
        %v2083 = vcombine.low %v1943, %v1947
        %v2090 = vpack.c.bf16 %v2081, %v2078
        %v2091 = vpack.c.bf16 %v2082, %v2079
        %v2092 = vpack.c.bf16 %v2083, %v2080
        %v2093 = vld [vmem:[%s5] sm:$0xf]
        %v2094 = vld [vmem:[%s5 + $0x4] sm:$0xf]
        %v2095 = vld [vmem:[%s5 + $0x8] sm:$0xf]
        %v2096 = vld [vmem:[%s5 + $0xc] sm:$0xf]
        %v2097 = vld [vmem:[%s5 + $0x10] sm:$0xf]
        %v2098 = vld [vmem:[%s5 + $0x14] sm:$0xf]
        %v2099 = vld [vmem:[%s5 + $0x18] sm:$0xf]
        %v2100 = vld [vmem:[%s5 + $0x1c] sm:$0xf]
        %v2101 = vld [vmem:[%s5 + $0x20] sm:$0xf]
        %v2102 = vld [vmem:[%s5 + $0x24] sm:$0xf]
        %v2103 = vld [vmem:[%s5 + $0x28] sm:$0xf]
        %v2104 = vld [vmem:[%s5 + $0x2c] sm:$0xf]
        %v2105 = vld [vmem:[%s5 + $0x30] sm:$0xf]
        %v2106 = vld [vmem:[%s5 + $0x34] sm:$0xf]
        %v2107 = vld [vmem:[%s5 + $0x38] sm:$0xf]
        %v2108 = vld [vmem:[%s5 + $0x3c] sm:$0xf]
        %v2109 = vld [vmem:[%s5 + $0x40] sm:$0xf]
        %v2110 = vld [vmem:[%s5 + $0x44] sm:$0xf]
        %v2111 = vld [vmem:[%s5 + $0x48] sm:$0xf]
        %v2112 = vld [vmem:[%s5 + $0x4c] sm:$0xf]
        %v2113 = vld [vmem:[%s5 + $0x50] sm:$0xf]
        %v2114 = vld [vmem:[%s5 + $0x54] sm:$0xf]
        %v2115 = vld [vmem:[%s5 + $0x58] sm:$0xf]
        %v2116 = vld [vmem:[%s5 + $0x5c] sm:$0xf]
        %v2117 = vld [vmem:[%s5 + $0x60] sm:$0xf]
        %v2118 = vld [vmem:[%s5 + $0x64] sm:$0xf]
        %v2119 = vld [vmem:[%s5 + $0x68] sm:$0xf]
        %v2120 = vld [vmem:[%s5 + $0x6c] sm:$0xf]
        %v2121 = vld [vmem:[%s5 + $0x70] sm:$0xf]
        %v2122 = vld [vmem:[%s5 + $0x74] sm:$0xf]
        %v2123 = vld [vmem:[%s5 + $0x78] sm:$0xf]
        %v2124 = vld [vmem:[%s5 + $0x7c] sm:$0xf]
        %v2125 = vld [vmem:[%s5 + $0x80] sm:$0xf]
        %v2126 = vld [vmem:[%s5 + $0x84] sm:$0xf]
        %v2127 = vld [vmem:[%s5 + $0x88] sm:$0xf]
        %v2128 = vld [vmem:[%s5 + $0x8c] sm:$0xf]
        %v2165 = vunpack.c.l.b16 %v2093
        %v2166 = vunpack.c.l.b16 %v2094
        %v2167 = vunpack.c.l.b16 %v2095
        %v2168 = vunpack.c.l.b16 %v2096
        %v2169 = vunpack.c.l.b16 %v2097
        %v2170 = vunpack.c.l.b16 %v2098
        %v2171 = vunpack.c.l.b16 %v2099
        %v2172 = vunpack.c.l.b16 %v2100
        %v2173 = vunpack.c.l.b16 %v2101
        %v2174 = vunpack.c.l.b16 %v2102
        %v2175 = vunpack.c.l.b16 %v2103
        %v2176 = vunpack.c.l.b16 %v2104
        %v2177 = vunpack.c.l.b16 %v2105
        %v2178 = vunpack.c.l.b16 %v2106
        %v2179 = vunpack.c.l.b16 %v2107
        %v2180 = vunpack.c.l.b16 %v2108
        %v2181 = vunpack.c.l.b16 %v2109
        %v2182 = vunpack.c.l.b16 %v2110
        %v2183 = vunpack.c.l.b16 %v2111
        %v2184 = vunpack.c.l.b16 %v2112
        %v2185 = vunpack.c.l.b16 %v2113
        %v2186 = vunpack.c.l.b16 %v2114
        %v2187 = vunpack.c.l.b16 %v2115
        %v2188 = vunpack.c.l.b16 %v2116
        %v2189 = vunpack.c.l.b16 %v2117
        %v2190 = vunpack.c.l.b16 %v2118
        %v2191 = vunpack.c.l.b16 %v2119
        %v2192 = vunpack.c.l.b16 %v2120
        %v2193 = vunpack.c.l.b16 %v2121
        %v2194 = vunpack.c.l.b16 %v2122
        %v2195 = vunpack.c.l.b16 %v2123
        %v2196 = vunpack.c.l.b16 %v2124
        %v2197 = vunpack.c.l.b16 %v2125
        %v2198 = vunpack.c.l.b16 %v2126
        %v2199 = vunpack.c.l.b16 %v2127
        %v2200 = vunpack.c.l.b16 %v2128
        %v2201 = vpack.c.b16 %v2166, %v2165
        %v2202 = vpack.c.b16 %v2168, %v2167
        %v2203 = vpack.c.b16 %v2170, %v2169
        %v2204 = vpack.c.b16 %v2172, %v2171
        %v2205 = vpack.c.b16 %v2174, %v2173
        %v2206 = vpack.c.b16 %v2176, %v2175
        %v2207 = vpack.c.b16 %v2178, %v2177
        %v2208 = vpack.c.b16 %v2180, %v2179
        %v2209 = vpack.c.b16 %v2182, %v2181
        %v2210 = vpack.c.b16 %v2184, %v2183
        %v2211 = vpack.c.b16 %v2186, %v2185
        %v2212 = vpack.c.b16 %v2188, %v2187
        %v2213 = vpack.c.b16 %v2190, %v2189
        %v2214 = vpack.c.b16 %v2192, %v2191
        %v2215 = vpack.c.b16 %v2194, %v2193
        %v2216 = vpack.c.b16 %v2196, %v2195
        %v2217 = vpack.c.b16 %v2198, %v2197
        %v2218 = vpack.c.b16 %v2200, %v2199
        %v2238 = vsel %vm1565, %v2092, 0
        %2240 = vmatprep.subr.bf16.mxu0 0
        %2241 = vmatpush1.bf16.msra.mxu0 %v2201
        %2242 = vmatprep.subr.bf16.mxu0 0
        %2243 = vmatpush1.bf16.msra.mxu0 %v2202
        %2244 = vmatprep.subr.bf16.mxu0 0
        %2245 = vmatpush1.bf16.msra.mxu0 %v2203
        %2246 = vmatprep.subr.bf16.mxu0 0
        %2247 = vmatpush1.bf16.msra.mxu0 %v2204
        %2248 = vmatprep.subr.bf16.mxu0 0
        %2249 = vmatpush1.bf16.msra.mxu0 %v2205
        %2250 = vmatprep.subr.bf16.mxu0 0
        %2251 = vmatpush1.bf16.msra.mxu0 %v2206
        %2252 = vmatprep.subr.bf16.mxu0 0
        %2253 = vmatpush1.bf16.msra.mxu0 %v2207
        %2254 = vmatprep.subr.bf16.mxu0 0
        %2255 = vmatpush1.bf16.msra.mxu0 %v2208
        %2256 = vmatprep.subr.bf16.mxu0 0
        %2257 = vmatpush1.bf16.msra.mxu0 %v2209
        %2258 = vmatprep.subr.bf16.mxu0 0
        %2259 = vmatpush1.bf16.msra.mxu0 %v2210
        %2260 = vmatprep.subr.bf16.mxu0 0
        %2261 = vmatpush1.bf16.msra.mxu0 %v2211
        %2262 = vmatprep.subr.bf16.mxu0 0
        %2263 = vmatpush1.bf16.msra.mxu0 %v2212
        %2264 = vmatprep.subr.bf16.mxu0 0
        %2265 = vmatpush1.bf16.msra.mxu0 %v2213
        %2266 = vmatprep.subr.bf16.mxu0 0
        %2267 = vmatpush1.bf16.msra.mxu0 %v2214
        %2268 = vmatprep.subr.bf16.mxu0 0
        %2269 = vmatpush1.bf16.msra.mxu0 %v2215
        %2270 = vmatprep.subr.bf16.mxu0 0
        %2271 = vmatpush1.bf16.msra.mxu0 %v2216
        %2272 = vmatprep.mubr.bf16.mxu0 %v2091
        %2273 = vmatmul.mubr.bf16.gmra.mrb[0].mxu0 %v2090
        %v2274 = vpop.f32.mrb[0].mxu0
        %v2275 = vadd.f32 0.0, %v2274
        %v2276 = vpop.f32.mrb[0].mxu0
        %v2277 = vpop.f32.mrb[0].mxu0
        %v2278 = vadd.f32 0.0, %v2277
        %v2279 = vpop.f32.mrb[0].mxu0
        %2280 = vdwg.mxu0
        %2281 = vmatprep.subr.bf16.mxu0 0
        %2282 = vmatpush1.bf16.msra.mxu0 %v2217
        %2283 = vmatprep.subr.bf16.mxu0 0
        %2284 = vmatpush1.bf16.msra.mxu0 %v2218
        %2285 = vmatprep.subr.bf16.mxu0 0
        %2286 = vmatpush1.bf16.msra.mxu0 0
        %2287 = vmatprep.subr.bf16.mxu0 0
        %2288 = vmatpush1.bf16.msra.mxu0 0
        %2289 = vmatprep.subr.bf16.mxu0 0
        %2290 = vmatpush1.bf16.msra.mxu0 0
        %2291 = vmatprep.subr.bf16.mxu0 0
        %2292 = vmatpush1.bf16.msra.mxu0 0
        %2293 = vmatprep.subr.bf16.mxu0 0
        %2294 = vmatpush1.bf16.msra.mxu0 0
        %2295 = vmatprep.subr.bf16.mxu0 0
        %2296 = vmatpush1.bf16.msra.mxu0 0
        %2297 = vmatprep.subr.bf16.mxu0 0
        %2298 = vmatpush1.bf16.msra.mxu0 0
        %2299 = vmatprep.subr.bf16.mxu0 0
        %2300 = vmatpush1.bf16.msra.mxu0 0
        %2301 = vmatprep.subr.bf16.mxu0 0
        %2302 = vmatpush1.bf16.msra.mxu0 0
        %2303 = vmatprep.subr.bf16.mxu0 0
        %2304 = vmatpush1.bf16.msra.mxu0 0
        %2305 = vmatprep.subr.bf16.mxu0 0
        %2306 = vmatpush1.bf16.msra.mxu0 0
        %2307 = vmatprep.subr.bf16.mxu0 0
        %2308 = vmatpush1.bf16.msra.mxu0 0
        %2309 = vmatprep.subr.bf16.mxu0 0
        %2310 = vmatpush1.bf16.msra.mxu0 0
        %2311 = vmatprep.subr.bf16.mxu0 0
        %2312 = vmatpush1.bf16.msra.mxu0 0
        %2313 = vmatprep.mubr.bf16.mxu0 0
        %2314 = vmatmul.mubr.bf16.gmra.mrb[0].mxu0 %v2238
        %v2315 = vpop.f32.mrb[0].mxu0
        %v2316 = vadd.f32 %v2275, %v2315
        %v2317 = vpop.f32.mrb[0].mxu0
        %v2318 = vpop.f32.mrb[0].mxu0
        %v2319 = vadd.f32 %v2278, %v2318
        %v2320 = vpop.f32.mrb[0].mxu0
        %2321 = vdwg.mxu0
        %v2322 = vld [vmem:[%s6] sm:$0x1]
        %v2323 = vlaneseq
        %v2324 = vshrl.u32 %v2323, 7
        %v2325 = vsub.s32 0, %v2324
        %v2326 = vrot.slane %v2322, %v2325
        %v2327 = vmul.f32 %v2316, %v2326
        %v2328 = vmul.f32 %v2319, %v2326
        %v2329 = vld [vmem:[%s6 + $0x1] sm:$0x1]
        %v2330 = vlaneseq
        %v2331 = vshrl.u32 %v2330, 7
        %v2332 = vsub.s32 0, %v2331
        %v2333 = vrot.slane %v2329, %v2332
        %v2334 = vadd.f32 %v2327, %v2333
        %v2335 = vadd.f32 %v2328, %v2333
        %v2336 = vxor.u32 %v2334, 2147483648
        %v2337 = vxor.u32 %v2335, 2147483648
        %v2338 = vmul.f32 %v2336, 1.442695
        %v2339 = vpow.pop %v2338
        %v2340 = vmul.f32 %v2337, 1.442695
        %v2341 = vpow.pop %v2340
        %v2342 = vadd.f32 %v2339, 1.0
        %v2343 = vadd.f32 %v2341, 1.0
        %v2344 = vrcp.pop %v2342
        %v2345 = vmul.f32 1.0, %v2344
        %v2346 = vrcp.pop %v2343
        %v2347 = vmul.f32 1.0, %v2346
        %v2348 = vmul.f32 %v2334, %v2345
        %v2349 = vmul.f32 %v2335, %v2347
        %vm2350 = vcmask 521216
        %2351 = vst.msk [vmem:[#allocation4] sm:$0x3f] %vm2350, 0.0
        %2352 = vst.msk [vmem:[#allocation4 + $0x8] sm:$0x3f] %vm2350, 0.0
        %2353 = vst.msk [vmem:[#allocation4 + $0x10] sm:$0x3f] %vm2350, 0.0
        %2354 = vst.msk [vmem:[#allocation4 + $0x18] sm:$0x3f] %vm2350, 0.0
        %2355 = vst.msk [vmem:[#allocation4 + $0x20] sm:$0x3f] %vm2350, 0.0
        %2356 = vst.msk [vmem:[#allocation4 + $0x28] sm:$0x3f] %vm2350, 0.0
        %s2357 = scalar_lea.vmem [#allocation4], 8
        %vm2358 = vcmask 519168
        %2359 = vst.msk [vmem:[%s2357 + $0x1] sm:$0xf] %vm2358, %v2348
        %s2360 = scalar_lea.vmem [#allocation4], 16
        %vm2361 = vcmask 523268
        %2362 = vst.msk [vmem:[%s2360 - $0x3] sm:$0xf0] %vm2361, %v2348
        %s2363 = scalar_lea.vmem [#allocation4], 24
        %2364 = vst.msk [vmem:[%s2363 + $0x1] sm:$0xf] %vm2358, %v2349
        %s2365 = scalar_lea.vmem [#allocation4], 32
        %2366 = vst.msk [vmem:[%s2365 - $0x3] sm:$0xf0] %vm2361, %v2349
        %v2367 = vld [vmem:[#allocation4] ss:$2 sm:$0x3]
        %s2368 = scalar_lea.vmem [#allocation4], 8
        %v2369 = vld [vmem:[%s2368] ss:$2 sm:$0x3]
        %s2370 = scalar_lea.vmem [#allocation4], 16
        %v2371 = vld [vmem:[%s2370] ss:$2 sm:$0x3]
        %s2372 = scalar_lea.vmem [#allocation4], 24
        %v2373 = vld [vmem:[%s2372] ss:$2 sm:$0x3]
        %s2374 = scalar_lea.vmem [#allocation4], 32
        %v2375 = vld [vmem:[%s2374] ss:$2 sm:$0x3]
        %s2376 = scalar_lea.vmem [#allocation4], 1
        %v2377 = vld [vmem:[%s2376] ss:$2 sm:$0x3]
        %s2378 = scalar_lea.vmem [#allocation4], 9
        %v2379 = vld [vmem:[%s2378] ss:$2 sm:$0x3]
        %s2380 = scalar_lea.vmem [#allocation4], 17
        %v2381 = vld [vmem:[%s2380] ss:$2 sm:$0x3]
        %s2382 = scalar_lea.vmem [#allocation4], 25
        %v2383 = vld [vmem:[%s2382] ss:$2 sm:$0x3]
        %s2384 = scalar_lea.vmem [#allocation4], 33
        %v2385 = vld [vmem:[%s2384] ss:$2 sm:$0x3]
        %s2386 = scalar_lea.vmem [#allocation4], 2
        %v2387 = vld [vmem:[%s2386] ss:$2 sm:$0x3]
        %s2388 = scalar_lea.vmem [#allocation4], 10
        %v2389 = vld [vmem:[%s2388] ss:$2 sm:$0x3]
        %s2390 = scalar_lea.vmem [#allocation4], 18
        %v2391 = vld [vmem:[%s2390] ss:$2 sm:$0x3]
        %s2392 = scalar_lea.vmem [#allocation4], 26
        %v2393 = vld [vmem:[%s2392] ss:$2 sm:$0x3]
        %s2394 = scalar_lea.vmem [#allocation4], 34
        %v2395 = vld [vmem:[%s2394] ss:$2 sm:$0x3]
        %2398 = vrot.lane.b32.xlu0 %v2369, 64
        %v2399 = vpop.permute.xlu0 %2398
        %2400 = vrot.lane.b32.xlu0 %v2373, 64
        %v2401 = vpop.permute.xlu0 %2400
        %2406 = vrot.lane.b32.xlu0 %v2377, 64
        %v2407 = vpop.permute.xlu0 %2406
        %2408 = vrot.lane.b32.xlu0 %v2381, 64
        %v2409 = vpop.permute.xlu0 %2408
        %2413 = vrot.lane.b32.xlu0 %v2385, 64
        %v2414 = vpop.permute.xlu0 %2413
        %2418 = vrot.lane.b32.xlu0 %v2389, 64
        %v2419 = vpop.permute.xlu0 %2418
        %2420 = vrot.lane.b32.xlu0 %v2393, 64
        %v2421 = vpop.permute.xlu0 %2420
        %v2424 = vsel %vm1583, %v2367, %v2399
        %v2425 = vsel %vm1583, %v2371, %v2401
        %v2426 = vsel %vm1583, %v2371, %v2407
        %v2427 = vsel %vm1583, %v2375, %v2409
        %v2428 = vsel %vm1583, %v2379, %v2409
        %v2429 = vsel %vm1583, %v2383, %v2414
        %v2430 = vsel %vm1583, %v2387, %v2419
        %v2431 = vsel %vm1583, %v2391, %v2421
        %v2442 = vcombine.low %v2424, %v2426
        %v2443 = vcombine.low %v2428, %v2430
        %v2445 = vunpack.c.l.s4 1983009808
        %v2446 = vunpack.c.0.s8 %v2445
        %v2447 = vlaneseq
        %v2448 = vshrl.u32 %v2447, 7
        %v2449 = vsub.s32 %v2446, %v2448
        %v2450 = vrot.slane %v2442, %v2449
        %v2452 = vunpack.c.l.s4 1983009808
        %v2453 = vunpack.c.0.s8 %v2452
        %v2454 = vlaneseq
        %v2455 = vshrl.u32 %v2454, 7
        %v2456 = vsub.s32 %v2453, %v2455
        %v2457 = vrot.slane %v2443, %v2456
        %v2458 = vcombine.low %v2450, %v2457
        %v2460 = vunpack.c.l.s4 1983009808
        %v2461 = vunpack.c.0.s8 %v2460
        %v2462 = vlaneseq
        %v2463 = vshrl.u32 %v2462, 7
        %v2464 = vsub.s32 %v2461, %v2463
        %v2465 = vrot.slane %v2391, %v2464
        %v2466 = vcombine.low %v2425, %v2427
        %v2467 = vcombine.low %v2429, %v2431
        %v2469 = vunpack.c.l.s4 1983009808
        %v2470 = vunpack.c.0.s8 %v2469
        %v2471 = vlaneseq
        %v2472 = vshrl.u32 %v2471, 7
        %v2473 = vsub.s32 %v2470, %v2472
        %v2474 = vrot.slane %v2466, %v2473
        %v2476 = vunpack.c.l.s4 1983009808
        %v2477 = vunpack.c.0.s8 %v2476
        %v2478 = vlaneseq
        %v2479 = vshrl.u32 %v2478, 7
        %v2480 = vsub.s32 %v2477, %v2479
        %v2481 = vrot.slane %v2467, %v2480
        %v2482 = vcombine.low %v2474, %v2481
        %v2484 = vunpack.c.l.s4 1983009808
        %v2485 = vunpack.c.0.s8 %v2484
        %v2486 = vlaneseq
        %v2487 = vshrl.u32 %v2486, 7
        %v2488 = vsub.s32 %v2485, %v2487
        %v2489 = vrot.slane %v2395, %v2488
        %v2490 = vcombine.low %v2458, %v2482
        %v2491 = vcombine.high %v2458, %v2482
        %v2493 = vunpack.c.l.s4 1983009808
        %v2494 = vunpack.c.0.s8 %v2493
        %v2495 = vlaneseq
        %v2496 = vshrl.u32 %v2495, 7
        %v2497 = vsub.s32 %v2494, %v2496
        %v2498 = vrot.slane %v2490, %v2497
        %v2500 = vunpack.c.l.s4 1983009808
        %v2501 = vunpack.c.0.s8 %v2500
        %v2502 = vlaneseq
        %v2503 = vshrl.u32 %v2502, 7
        %v2504 = vsub.s32 %v2501, %v2503
        %v2505 = vrot.slane %v2491, %v2504
        %v2506 = vcombine.high %v2498, %v2498
        %v2507 = vcombine.high %v2505, %v2505
        %v2508 = vcombine.low %v2465, %v2489
        %v2510 = vunpack.c.l.s4 1983009808
        %v2511 = vunpack.c.0.s8 %v2510
        %v2512 = vlaneseq
        %v2513 = vshrl.u32 %v2512, 7
        %v2514 = vsub.s32 %v2511, %v2513
        %v2515 = vrot.slane %v2508, %v2514
        %v2521 = vpack.c.bf16 %v2498, %v2498
        %v2522 = vpack.c.bf16 %v2506, %v2506
        %v2523 = vpack.c.bf16 %v2505, %v2505
        %v2524 = vpack.c.bf16 %v2507, %v2507
        %v2525 = vpack.c.bf16 %v2515, %v2515
        %v2526 = vld [vmem:[%s7] sm:$0xf]
        %v2527 = vld [vmem:[%s7 + $0x4] sm:$0xf]
        %v2528 = vld [vmem:[%s7 + $0x8] sm:$0xf]
        %v2529 = vld [vmem:[%s7 + $0xc] sm:$0xf]
        %v2530 = vld [vmem:[%s7 + $0x10] sm:$0xf]
        %v2531 = vld [vmem:[%s7 + $0x14] sm:$0xf]
        %v2532 = vld [vmem:[%s7 + $0x18] sm:$0xf]
        %v2533 = vld [vmem:[%s7 + $0x1c] sm:$0xf]
        %v2534 = vld [vmem:[%s7 + $0x20] sm:$0xf]
        %v2535 = vld [vmem:[%s7 + $0x24] sm:$0xf]
        %v2536 = vld [vmem:[%s7 + $0x28] sm:$0xf]
        %v2537 = vld [vmem:[%s7 + $0x2c] sm:$0xf]
        %v2538 = vld [vmem:[%s7 + $0x30] sm:$0xf]
        %v2539 = vld [vmem:[%s7 + $0x34] sm:$0xf]
        %v2540 = vld [vmem:[%s7 + $0x38] sm:$0xf]
        %v2541 = vld [vmem:[%s7 + $0x3c] sm:$0xf]
        %v2542 = vld [vmem:[%s7 + $0x40] sm:$0xf]
        %v2543 = vld [vmem:[%s7 + $0x44] sm:$0xf]
        %v2544 = vld [vmem:[%s7 + $0x48] sm:$0xf]
        %v2545 = vld [vmem:[%s7 + $0x4c] sm:$0xf]
        %v2546 = vld [vmem:[%s7 + $0x50] sm:$0xf]
        %v2547 = vld [vmem:[%s7 + $0x54] sm:$0xf]
        %v2548 = vld [vmem:[%s7 + $0x58] sm:$0xf]
        %v2549 = vld [vmem:[%s7 + $0x5c] sm:$0xf]
        %v2550 = vld [vmem:[%s7 + $0x60] sm:$0xf]
        %v2551 = vld [vmem:[%s7 + $0x64] sm:$0xf]
        %v2552 = vld [vmem:[%s7 + $0x68] sm:$0xf]
        %v2553 = vld [vmem:[%s7 + $0x6c] sm:$0xf]
        %v2554 = vld [vmem:[%s7 + $0x70] sm:$0xf]
        %v2555 = vld [vmem:[%s7 + $0x74] sm:$0xf]
        %v2556 = vld [vmem:[%s7 + $0x78] sm:$0xf]
        %v2557 = vld [vmem:[%s7 + $0x7c] sm:$0xf]
        %v2558 = vld [vmem:[%s7 + $0x80] sm:$0xf]
        %v2559 = vld [vmem:[%s7 + $0x84] sm:$0xf]
        %v2560 = vld [vmem:[%s7 + $0x88] sm:$0xf]
        %v2561 = vld [vmem:[%s7 + $0x8c] sm:$0xf]
        %v2562 = vld [vmem:[%s7 + $0x90] sm:$0xf]
        %v2563 = vld [vmem:[%s7 + $0x94] sm:$0xf]
        %v2564 = vld [vmem:[%s7 + $0x98] sm:$0xf]
        %v2565 = vld [vmem:[%s7 + $0x9c] sm:$0xf]
        %v2566 = vld [vmem:[%s7 + $0xa0] sm:$0xf]
        %v2567 = vld [vmem:[%s7 + $0xa4] sm:$0xf]
        %v2568 = vld [vmem:[%s7 + $0xa8] sm:$0xf]
        %v2569 = vld [vmem:[%s7 + $0xac] sm:$0xf]
        %v2570 = vld [vmem:[%s7 + $0xb0] sm:$0xf]
        %v2571 = vld [vmem:[%s7 + $0xb4] sm:$0xf]
        %v2572 = vld [vmem:[%s7 + $0xb8] sm:$0xf]
        %v2573 = vld [vmem:[%s7 + $0xbc] sm:$0xf]
        %v2574 = vld [vmem:[%s7 + $0xc0] sm:$0xf]
        %v2575 = vld [vmem:[%s7 + $0xc4] sm:$0xf]
        %v2576 = vld [vmem:[%s7 + $0xc8] sm:$0xf]
        %v2577 = vld [vmem:[%s7 + $0xcc] sm:$0xf]
        %v2578 = vld [vmem:[%s7 + $0xd0] sm:$0xf]
        %v2579 = vld [vmem:[%s7 + $0xd4] sm:$0xf]
        %v2580 = vld [vmem:[%s7 + $0xd8] sm:$0xf]
        %v2581 = vld [vmem:[%s7 + $0xdc] sm:$0xf]
        %v2582 = vld [vmem:[%s7 + $0xe0] sm:$0xf]
        %v2583 = vld [vmem:[%s7 + $0xe4] sm:$0xf]
        %v2584 = vld [vmem:[%s7 + $0xe8] sm:$0xf]
        %v2585 = vld [vmem:[%s7 + $0xec] sm:$0xf]
        %v2586 = vld [vmem:[%s7 + $0xf0] sm:$0xf]
        %v2587 = vld [vmem:[%s7 + $0xf4] sm:$0xf]
        %v2588 = vld [vmem:[%s7 + $0xf8] sm:$0xf]
        %v2589 = vld [vmem:[%s7 + $0xfc] sm:$0xf]
        %v2590 = vld [vmem:[%s7 + $0x100] sm:$0xf]
        %v2591 = vld [vmem:[%s7 + $0x104] sm:$0xf]
        %v2592 = vld [vmem:[%s7 + $0x108] sm:$0xf]
        %v2593 = vld [vmem:[%s7 + $0x10c] sm:$0xf]
        %v2594 = vld [vmem:[%s7 + $0x110] sm:$0xf]
        %v2595 = vld [vmem:[%s7 + $0x114] sm:$0xf]
        %v2596 = vld [vmem:[%s7 + $0x118] sm:$0xf]
        %v2597 = vld [vmem:[%s7 + $0x11c] sm:$0xf]
        %v2670 = vunpack.c.l.b16 %v2526
        %v2671 = vunpack.c.l.b16 %v2527
        %v2672 = vunpack.c.l.b16 %v2528
        %v2673 = vunpack.c.l.b16 %v2529
        %v2674 = vunpack.c.l.b16 %v2530
        %v2675 = vunpack.c.l.b16 %v2531
        %v2676 = vunpack.c.l.b16 %v2532
        %v2677 = vunpack.c.l.b16 %v2533
        %v2678 = vunpack.c.l.b16 %v2534
        %v2679 = vunpack.c.l.b16 %v2535
        %v2680 = vunpack.c.l.b16 %v2536
        %v2681 = vunpack.c.l.b16 %v2537
        %v2682 = vunpack.c.l.b16 %v2538
        %v2683 = vunpack.c.l.b16 %v2539
        %v2684 = vunpack.c.l.b16 %v2540
        %v2685 = vunpack.c.l.b16 %v2541
        %v2686 = vunpack.c.l.b16 %v2542
        %v2687 = vunpack.c.l.b16 %v2543
        %v2688 = vunpack.c.l.b16 %v2544
        %v2689 = vunpack.c.l.b16 %v2545
        %v2690 = vunpack.c.l.b16 %v2546
        %v2691 = vunpack.c.l.b16 %v2547
        %v2692 = vunpack.c.l.b16 %v2548
        %v2693 = vunpack.c.l.b16 %v2549
        %v2694 = vunpack.c.l.b16 %v2550
        %v2695 = vunpack.c.l.b16 %v2551
        %v2696 = vunpack.c.l.b16 %v2552
        %v2697 = vunpack.c.l.b16 %v2553
        %v2698 = vunpack.c.l.b16 %v2554
        %v2699 = vunpack.c.l.b16 %v2555
        %v2700 = vunpack.c.l.b16 %v2556
        %v2701 = vunpack.c.l.b16 %v2557
        %v2702 = vunpack.c.l.b16 %v2558
        %v2703 = vunpack.c.l.b16 %v2559
        %v2704 = vunpack.c.l.b16 %v2560
        %v2705 = vunpack.c.l.b16 %v2561
        %v2706 = vunpack.c.l.b16 %v2562
        %v2707 = vunpack.c.l.b16 %v2563
        %v2708 = vunpack.c.l.b16 %v2564
        %v2709 = vunpack.c.l.b16 %v2565
        %v2710 = vunpack.c.l.b16 %v2566
        %v2711 = vunpack.c.l.b16 %v2567
        %v2712 = vunpack.c.l.b16 %v2568
        %v2713 = vunpack.c.l.b16 %v2569
        %v2714 = vunpack.c.l.b16 %v2570
        %v2715 = vunpack.c.l.b16 %v2571
        %v2716 = vunpack.c.l.b16 %v2572
        %v2717 = vunpack.c.l.b16 %v2573
        %v2718 = vunpack.c.l.b16 %v2574
        %v2719 = vunpack.c.l.b16 %v2575
        %v2720 = vunpack.c.l.b16 %v2576
        %v2721 = vunpack.c.l.b16 %v2577
        %v2722 = vunpack.c.l.b16 %v2578
        %v2723 = vunpack.c.l.b16 %v2579
        %v2724 = vunpack.c.l.b16 %v2580
        %v2725 = vunpack.c.l.b16 %v2581
        %v2726 = vunpack.c.l.b16 %v2582
        %v2727 = vunpack.c.l.b16 %v2583
        %v2728 = vunpack.c.l.b16 %v2584
        %v2729 = vunpack.c.l.b16 %v2585
        %v2730 = vunpack.c.l.b16 %v2586
        %v2731 = vunpack.c.l.b16 %v2587
        %v2732 = vunpack.c.l.b16 %v2588
        %v2733 = vunpack.c.l.b16 %v2589
        %v2734 = vunpack.c.l.b16 %v2590
        %v2735 = vunpack.c.l.b16 %v2591
        %v2736 = vunpack.c.l.b16 %v2592
        %v2737 = vunpack.c.l.b16 %v2593
        %v2738 = vunpack.c.l.b16 %v2594
        %v2739 = vunpack.c.l.b16 %v2595
        %v2740 = vunpack.c.l.b16 %v2596
        %v2741 = vunpack.c.l.b16 %v2597
        %v2742 = vpack.c.b16 %v2671, %v2670
        %v2743 = vpack.c.b16 %v2673, %v2672
        %v2744 = vpack.c.b16 %v2675, %v2674
        %v2745 = vpack.c.b16 %v2677, %v2676
        %v2746 = vpack.c.b16 %v2679, %v2678
        %v2747 = vpack.c.b16 %v2681, %v2680
        %v2748 = vpack.c.b16 %v2683, %v2682
        %v2749 = vpack.c.b16 %v2685, %v2684
        %v2750 = vpack.c.b16 %v2687, %v2686
        %v2751 = vpack.c.b16 %v2689, %v2688
        %v2752 = vpack.c.b16 %v2691, %v2690
        %v2753 = vpack.c.b16 %v2693, %v2692
        %v2754 = vpack.c.b16 %v2695, %v2694
        %v2755 = vpack.c.b16 %v2697, %v2696
        %v2756 = vpack.c.b16 %v2699, %v2698
        %v2757 = vpack.c.b16 %v2701, %v2700
        %v2758 = vpack.c.b16 %v2703, %v2702
        %v2759 = vpack.c.b16 %v2705, %v2704
        %v2760 = vpack.c.b16 %v2707, %v2706
        %v2761 = vpack.c.b16 %v2709, %v2708
        %v2762 = vpack.c.b16 %v2711, %v2710
        %v2763 = vpack.c.b16 %v2713, %v2712
        %v2764 = vpack.c.b16 %v2715, %v2714
        %v2765 = vpack.c.b16 %v2717, %v2716
        %v2766 = vpack.c.b16 %v2719, %v2718
        %v2767 = vpack.c.b16 %v2721, %v2720
        %v2768 = vpack.c.b16 %v2723, %v2722
        %v2769 = vpack.c.b16 %v2725, %v2724
        %v2770 = vpack.c.b16 %v2727, %v2726
        %v2771 = vpack.c.b16 %v2729, %v2728
        %v2772 = vpack.c.b16 %v2731, %v2730
        %v2773 = vpack.c.b16 %v2733, %v2732
        %v2774 = vpack.c.b16 %v2735, %v2734
        %v2775 = vpack.c.b16 %v2737, %v2736
        %v2776 = vpack.c.b16 %v2739, %v2738
        %v2777 = vpack.c.b16 %v2741, %v2740
        %v2815 = vsel %vm1583, %v2525, 0
        %2817 = vmatprep.subr.bf16.mxu0 0
        %2818 = vmatpush1.bf16.msra.mxu0 %v2742
        %2819 = vmatprep.subr.bf16.mxu0 0
        %2820 = vmatpush1.bf16.msra.mxu0 %v2743
        %2821 = vmatprep.subr.bf16.mxu0 0
        %2822 = vmatpush1.bf16.msra.mxu0 %v2744
        %2823 = vmatprep.subr.bf16.mxu0 0
        %2824 = vmatpush1.bf16.msra.mxu0 %v2745
        %2825 = vmatprep.subr.bf16.mxu0 0
        %2826 = vmatpush1.bf16.msra.mxu0 %v2746
        %2827 = vmatprep.subr.bf16.mxu0 0
        %2828 = vmatpush1.bf16.msra.mxu0 %v2747
        %2829 = vmatprep.subr.bf16.mxu0 0
        %2830 = vmatpush1.bf16.msra.mxu0 %v2748
        %2831 = vmatprep.subr.bf16.mxu0 0
        %2832 = vmatpush1.bf16.msra.mxu0 %v2749
        %2833 = vmatprep.subr.bf16.mxu0 0
        %2834 = vmatpush1.bf16.msra.mxu0 %v2750
        %2835 = vmatprep.subr.bf16.mxu0 0
        %2836 = vmatpush1.bf16.msra.mxu0 %v2751
        %2837 = vmatprep.subr.bf16.mxu0 0
        %2838 = vmatpush1.bf16.msra.mxu0 %v2752
        %2839 = vmatprep.subr.bf16.mxu0 0
        %2840 = vmatpush1.bf16.msra.mxu0 %v2753
        %2841 = vmatprep.subr.bf16.mxu0 0
        %2842 = vmatpush1.bf16.msra.mxu0 %v2754
        %2843 = vmatprep.subr.bf16.mxu0 0
        %2844 = vmatpush1.bf16.msra.mxu0 %v2755
        %2845 = vmatprep.subr.bf16.mxu0 0
        %2846 = vmatpush1.bf16.msra.mxu0 %v2756
        %2847 = vmatprep.subr.bf16.mxu0 0
        %2848 = vmatpush1.bf16.msra.mxu0 %v2757
        %2849 = vmatprep.mubr.bf16.mxu0 %v2522
        %2850 = vmatmul.mubr.bf16.gmra.mrb[0].mxu0 %v2521
        %v2851 = vpop.f32.mrb[0].mxu0
        %v2852 = vadd.f32 0.0, %v2851
        %v2853 = vpop.f32.mrb[0].mxu0
        %v2854 = vpop.f32.mrb[0].mxu0
        %v2855 = vpop.f32.mrb[0].mxu0
        %2856 = vdwg.mxu0
        %2857 = vmatprep.subr.bf16.mxu0 0
        %2858 = vmatpush1.bf16.msra.mxu0 %v2758
        %2859 = vmatprep.subr.bf16.mxu0 0
        %2860 = vmatpush1.bf16.msra.mxu0 %v2759
        %2861 = vmatprep.subr.bf16.mxu0 0
        %2862 = vmatpush1.bf16.msra.mxu0 %v2760
        %2863 = vmatprep.subr.bf16.mxu0 0
        %2864 = vmatpush1.bf16.msra.mxu0 %v2761
        %2865 = vmatprep.subr.bf16.mxu0 0
        %2866 = vmatpush1.bf16.msra.mxu0 %v2762
        %2867 = vmatprep.subr.bf16.mxu0 0
        %2868 = vmatpush1.bf16.msra.mxu0 %v2763
        %2869 = vmatprep.subr.bf16.mxu0 0
        %2870 = vmatpush1.bf16.msra.mxu0 %v2764
        %2871 = vmatprep.subr.bf16.mxu0 0
        %2872 = vmatpush1.bf16.msra.mxu0 %v2765
        %2873 = vmatprep.subr.bf16.mxu0 0
        %2874 = vmatpush1.bf16.msra.mxu0 %v2766
        %2875 = vmatprep.subr.bf16.mxu0 0
        %2876 = vmatpush1.bf16.msra.mxu0 %v2767
        %2877 = vmatprep.subr.bf16.mxu0 0
        %2878 = vmatpush1.bf16.msra.mxu0 %v2768
        %2879 = vmatprep.subr.bf16.mxu0 0
        %2880 = vmatpush1.bf16.msra.mxu0 %v2769
        %2881 = vmatprep.subr.bf16.mxu0 0
        %2882 = vmatpush1.bf16.msra.mxu0 %v2770
        %2883 = vmatprep.subr.bf16.mxu0 0
        %2884 = vmatpush1.bf16.msra.mxu0 %v2771
        %2885 = vmatprep.subr.bf16.mxu0 0
        %2886 = vmatpush1.bf16.msra.mxu0 %v2772
        %2887 = vmatprep.subr.bf16.mxu0 0
        %2888 = vmatpush1.bf16.msra.mxu0 %v2773
        %2889 = vmatprep.mubr.bf16.mxu0 %v2524
        %2890 = vmatmul.mubr.bf16.gmra.mrb[0].mxu0 %v2523
        %v2891 = vpop.f32.mrb[0].mxu0
        %v2892 = vadd.f32 %v2852, %v2891
        %v2893 = vpop.f32.mrb[0].mxu0
        %v2894 = vpop.f32.mrb[0].mxu0
        %v2895 = vpop.f32.mrb[0].mxu0
        %2896 = vdwg.mxu0
        %2897 = vmatprep.subr.bf16.mxu0 0
        %2898 = vmatpush1.bf16.msra.mxu0 %v2774
        %2899 = vmatprep.subr.bf16.mxu0 0
        %2900 = vmatpush1.bf16.msra.mxu0 %v2775
        %2901 = vmatprep.subr.bf16.mxu0 0
        %2902 = vmatpush1.bf16.msra.mxu0 %v2776
        %2903 = vmatprep.subr.bf16.mxu0 0
        %2904 = vmatpush1.bf16.msra.mxu0 %v2777
        %2905 = vmatprep.subr.bf16.mxu0 0
        %2906 = vmatpush1.bf16.msra.mxu0 0
        %2907 = vmatprep.subr.bf16.mxu0 0
        %2908 = vmatpush1.bf16.msra.mxu0 0
        %2909 = vmatprep.subr.bf16.mxu0 0
        %2910 = vmatpush1.bf16.msra.mxu0 0
        %2911 = vmatprep.subr.bf16.mxu0 0
        %2912 = vmatpush1.bf16.msra.mxu0 0
        %2913 = vmatprep.subr.bf16.mxu0 0
        %2914 = vmatpush1.bf16.msra.mxu0 0
        %2915 = vmatprep.subr.bf16.mxu0 0
        %2916 = vmatpush1.bf16.msra.mxu0 0
        %2917 = vmatprep.subr.bf16.mxu0 0
        %2918 = vmatpush1.bf16.msra.mxu0 0
        %2919 = vmatprep.subr.bf16.mxu0 0
        %2920 = vmatpush1.bf16.msra.mxu0 0
        %2921 = vmatprep.subr.bf16.mxu0 0
        %2922 = vmatpush1.bf16.msra.mxu0 0
        %2923 = vmatprep.subr.bf16.mxu0 0
        %2924 = vmatpush1.bf16.msra.mxu0 0
        %2925 = vmatprep.subr.bf16.mxu0 0
        %2926 = vmatpush1.bf16.msra.mxu0 0
        %2927 = vmatprep.subr.bf16.mxu0 0
        %2928 = vmatpush1.bf16.msra.mxu0 0
        %2929 = vmatprep.mubr.bf16.mxu0 0
        %2930 = vmatmul.mubr.bf16.gmra.mrb[0].mxu0 %v2815
        %v2931 = vpop.f32.mrb[0].mxu0
        %v2932 = vadd.f32 %v2892, %v2931
        %v2933 = vpop.f32.mrb[0].mxu0
        %v2934 = vpop.f32.mrb[0].mxu0
        %v2935 = vpop.f32.mrb[0].mxu0
        %2936 = vdwg.mxu0
        %v2937 = vld [vmem:[%s8] sm:$0x1]
        %v2938 = vlaneseq
        %v2939 = vshrl.u32 %v2938, 7
        %v2940 = vsub.s32 0, %v2939
        %v2941 = vrot.slane %v2937, %v2940
        %v2942 = vmul.f32 %v2932, %v2941
        %v2943 = vld [vmem:[%s8 + $0x1] sm:$0x1]
        %v2944 = vlaneseq
        %v2945 = vshrl.u32 %v2944, 7
        %v2946 = vsub.s32 0, %v2945
        %v2947 = vrot.slane %v2943, %v2946
        %v2948 = vadd.f32 %v2942, %v2947
        %v2949 = vxor.u32 %v2948, 2147483648
        %v2950 = vmul.f32 %v2949, 1.442695
        %v2951 = vpow.pop %v2950
        %v2952 = vadd.f32 %v2951, 1.0
        %v2953 = vrcp.pop %v2952
        %v2954 = vmul.f32 1.0, %v2953
        %v2955 = vmul.f32 %v2948, %v2954
        %v2956 = vpack.c.bf16 %v2955, %v2955
        %v2957 = vld [vmem:[%s9] sm:$0xff]
        %v2958 = vld [vmem:[%s9 + $0x8] sm:$0xff]
        %v2959 = vld [vmem:[%s9 + $0x10] sm:$0xff]
        %v2960 = vld [vmem:[%s9 + $0x18] sm:$0xff]
        %v2961 = vld [vmem:[%s9 + $0x20] sm:$0xff]
        %v2962 = vld [vmem:[%s9 + $0x28] sm:$0xff]
        %v2963 = vld [vmem:[%s9 + $0x30] sm:$0xff]
        %v2964 = vld [vmem:[%s9 + $0x38] sm:$0xff]
        %v2965 = vld [vmem:[%s9 + $0x40] sm:$0xff]
        %v2966 = vld [vmem:[%s9 + $0x48] sm:$0xff]
        %v2967 = vld [vmem:[%s9 + $0x50] sm:$0xff]
        %v2968 = vld [vmem:[%s9 + $0x58] sm:$0xff]
        %v2969 = vld [vmem:[%s9 + $0x60] sm:$0xff]
        %v2970 = vld [vmem:[%s9 + $0x68] sm:$0xff]
        %v2971 = vld [vmem:[%s9 + $0x70] sm:$0xff]
        %v2972 = vld [vmem:[%s9 + $0x78] sm:$0xff]
        %v2989 = vunpack.c.l.b16 %v2957
        %v2990 = vunpack.c.h.b16 %v2957
        %v2991 = vunpack.c.l.b16 %v2958
        %v2992 = vunpack.c.h.b16 %v2958
        %v2993 = vunpack.c.l.b16 %v2959
        %v2994 = vunpack.c.h.b16 %v2959
        %v2995 = vunpack.c.l.b16 %v2960
        %v2996 = vunpack.c.h.b16 %v2960
        %v2997 = vunpack.c.l.b16 %v2961
        %v2998 = vunpack.c.h.b16 %v2961
        %v2999 = vunpack.c.l.b16 %v2962
        %v3000 = vunpack.c.h.b16 %v2962
        %v3001 = vunpack.c.l.b16 %v2963
        %v3002 = vunpack.c.h.b16 %v2963
        %v3003 = vunpack.c.l.b16 %v2964
        %v3004 = vunpack.c.h.b16 %v2964
        %v3005 = vunpack.c.l.b16 %v2965
        %v3006 = vunpack.c.h.b16 %v2965
        %v3007 = vunpack.c.l.b16 %v2966
        %v3008 = vunpack.c.h.b16 %v2966
        %v3009 = vunpack.c.l.b16 %v2967
        %v3010 = vunpack.c.h.b16 %v2967
        %v3011 = vunpack.c.l.b16 %v2968
        %v3012 = vunpack.c.h.b16 %v2968
        %v3013 = vunpack.c.l.b16 %v2969
        %v3014 = vunpack.c.h.b16 %v2969
        %v3015 = vunpack.c.l.b16 %v2970
        %v3016 = vunpack.c.h.b16 %v2970
        %v3017 = vunpack.c.l.b16 %v2971
        %v3018 = vunpack.c.h.b16 %v2971
        %v3019 = vunpack.c.l.b16 %v2972
        %v3020 = vunpack.c.h.b16 %v2972
        %v3021 = vpack.c.b16 %v2991, %v2989
        %v3022 = vpack.c.b16 %v2992, %v2990
        %v3023 = vpack.c.b16 %v2995, %v2993
        %v3024 = vpack.c.b16 %v2996, %v2994
        %v3025 = vpack.c.b16 %v2999, %v2997
        %v3026 = vpack.c.b16 %v3000, %v2998
        %v3027 = vpack.c.b16 %v3003, %v3001
        %v3028 = vpack.c.b16 %v3004, %v3002
        %v3029 = vpack.c.b16 %v3007, %v3005
        %v3030 = vpack.c.b16 %v3008, %v3006
        %v3031 = vpack.c.b16 %v3011, %v3009
        %v3032 = vpack.c.b16 %v3012, %v3010
        %v3033 = vpack.c.b16 %v3015, %v3013
        %v3034 = vpack.c.b16 %v3016, %v3014
        %v3035 = vpack.c.b16 %v3019, %v3017
        %v3036 = vpack.c.b16 %v3020, %v3018
        %3053 = vmatprep.subr.bf16.mxu0 %v3022
        %3054 = vmatpush1.bf16.msra.mxu0 %v3021
        %3055 = vmatprep.subr.bf16.mxu0 %v3024
        %3056 = vmatpush1.bf16.msra.mxu0 %v3023
        %3057 = vmatprep.subr.bf16.mxu0 %v3026
        %3058 = vmatpush1.bf16.msra.mxu0 %v3025
        %3059 = vmatprep.subr.bf16.mxu0 %v3028
        %3060 = vmatpush1.bf16.msra.mxu0 %v3027
        %3061 = vmatprep.subr.bf16.mxu0 %v3030
        %3062 = vmatpush1.bf16.msra.mxu0 %v3029
        %3063 = vmatprep.subr.bf16.mxu0 %v3032
        %3064 = vmatpush1.bf16.msra.mxu0 %v3031
        %3065 = vmatprep.subr.bf16.mxu0 %v3034
        %3066 = vmatpush1.bf16.msra.mxu0 %v3033
        %3067 = vmatprep.subr.bf16.mxu0 %v3036
        %3068 = vmatpush1.bf16.msra.mxu0 %v3035
        %3069 = vmatprep.subr.bf16.mxu0 0
        %3070 = vmatpush1.bf16.msra.mxu0 0
        %3071 = vmatprep.subr.bf16.mxu0 0
        %3072 = vmatpush1.bf16.msra.mxu0 0
        %3073 = vmatprep.subr.bf16.mxu0 0
        %3074 = vmatpush1.bf16.msra.mxu0 0
        %3075 = vmatprep.subr.bf16.mxu0 0
        %3076 = vmatpush1.bf16.msra.mxu0 0
        %3077 = vmatprep.subr.bf16.mxu0 0
        %3078 = vmatpush1.bf16.msra.mxu0 0
        %3079 = vmatprep.subr.bf16.mxu0 0
        %3080 = vmatpush1.bf16.msra.mxu0 0
        %3081 = vmatprep.subr.bf16.mxu0 0
        %3082 = vmatpush1.bf16.msra.mxu0 0
        %3083 = vmatprep.subr.bf16.mxu0 0
        %3084 = vmatpush1.bf16.msra.mxu0 0
        %3085 = vmatprep.mubr.bf16.mxu0 0
        %3086 = vmatmul.mubr.bf16.gmra.mrb[0].mxu0 %v2956
        %v3087 = vpop.f32.mrb[0].mxu0
        %v3088 = vadd.f32 0.0, %v3087
        %v3089 = vpop.f32.mrb[0].mxu0
        %v3090 = vadd.f32 0.0, %v3089
        %v3091 = vpop.f32.mrb[0].mxu0
        %v3092 = vpop.f32.mrb[0].mxu0
        %3093 = vdwg.mxu0
        %v3094 = vld [vmem:[%s10] ss:$2 sm:$0x3]
        %v3096 = vlaneseq
        %v3097 = vshrl.u32 %v3096, 7
        %v3098 = vsub.s32 0, %v3097
        %v3099 = vrot.slane %v3094, %v3098
        %v3100 = vlaneseq
        %v3101 = vshrl.u32 %v3100, 7
        %v3102 = vsub.s32 1, %v3101
        %v3103 = vrot.slane %v3094, %v3102
        %v3106 = vmul.f32 %v3088, %v3099
        %v3107 = vmul.f32 %v3090, %v3103
        %s3108 = scalar_lea.vmem %s10, 1
        %v3109 = vld [vmem:[%s3108] ss:$2 sm:$0x3]
        %v3111 = vlaneseq
        %v3112 = vshrl.u32 %v3111, 7
        %v3113 = vsub.s32 0, %v3112
        %v3114 = vrot.slane %v3109, %v3113
        %v3115 = vlaneseq
        %v3116 = vshrl.u32 %v3115, 7
        %v3117 = vsub.s32 1, %v3116
        %v3118 = vrot.slane %v3109, %v3117
        %v3121 = vadd.f32 %v3106, %v3114
        %v3122 = vadd.f32 %v3107, %v3118
        %v3123 = vxor.u32 %v3121, 2147483648
        %v3124 = vxor.u32 %v3122, 2147483648
        %v3125 = vmul.f32 %v3123, 1.442695
        %v3126 = vpow.pop %v3125
        %v3127 = vmul.f32 %v3124, 1.442695
        %v3128 = vpow.pop %v3127
        %v3129 = vadd.f32 %v3126, 1.0
        %v3130 = vadd.f32 %v3128, 1.0
        %v3131 = vrcp.pop %v3129
        %v3132 = vmul.f32 1.0, %v3131
        %v3133 = vrcp.pop %v3130
        %v3134 = vmul.f32 1.0, %v3133
        %v3135 = vmul.f32 %v3121, %v3132
        %v3136 = vmul.f32 %v3122, %v3134
        %vm3137 = vcmask 1043456
        %v3138 = vsel %vm3137, %v3135, 0.0
        %v3139 = vrot.slane %v3138, 4
        %v3140 = vadd.f32 %v3138, %v3139
        %v3141 = vrot.slane %v3140, 2
        %v3142 = vadd.f32 %v3140, %v3141
        %v3143 = vrot.slane %v3142, 1
        %v3144 = vadd.f32 %v3142, %v3143
        %v3145 = vsel %vm3137, %v3136, 0.0
        %v3146 = vrot.slane %v3145, 4
        %v3147 = vadd.f32 %v3145, %v3146
        %v3148 = vrot.slane %v3147, 2
        %v3149 = vadd.f32 %v3147, %v3148
        %v3150 = vrot.slane %v3149, 1
        %v3151 = vadd.f32 %v3149, %v3150
        %v3152 = vrcp.pop 4.0
        %v3153 = vmul.f32 %v3144, %v3152
        %v3154 = vmul.f32 %v3151, %v3152
        %v3155 = vpack.c.bf16 %v3153, %v3153
        %v3156 = vpack.c.bf16 %v3154, %v3154
        %v3157 = vld [vmem:[%s11] sm:$0xf]
        %v3158 = vld [vmem:[%s11 + $0x4] sm:$0xf]
        %v3159 = vld [vmem:[%s11 + $0x8] sm:$0xf]
        %v3160 = vld [vmem:[%s11 + $0xc] sm:$0xf]
        %v3161 = vld [vmem:[%s11 + $0x10] sm:$0xf]
        %v3162 = vld [vmem:[%s11 + $0x14] sm:$0xf]
        %v3163 = vld [vmem:[%s11 + $0x18] sm:$0xf]
        %v3164 = vld [vmem:[%s11 + $0x1c] sm:$0xf]
        %v3165 = vld [vmem:[%s11 + $0x20] sm:$0xf]
        %v3166 = vld [vmem:[%s11 + $0x24] sm:$0xf]
        %v3167 = vld [vmem:[%s11 + $0x28] sm:$0xf]
        %v3168 = vld [vmem:[%s11 + $0x2c] sm:$0xf]
        %v3169 = vld [vmem:[%s11 + $0x30] sm:$0xf]
        %v3170 = vld [vmem:[%s11 + $0x34] sm:$0xf]
        %v3171 = vld [vmem:[%s11 + $0x38] sm:$0xf]
        %v3172 = vld [vmem:[%s11 + $0x3c] sm:$0xf]
        %v3173 = vld [vmem:[%s11 + $0x40] sm:$0xf]
        %v3174 = vld [vmem:[%s11 + $0x44] sm:$0xf]
        %v3175 = vld [vmem:[%s11 + $0x48] sm:$0xf]
        %v3176 = vld [vmem:[%s11 + $0x4c] sm:$0xf]
        %v3177 = vld [vmem:[%s11 + $0x50] sm:$0xf]
        %v3178 = vld [vmem:[%s11 + $0x54] sm:$0xf]
        %v3179 = vld [vmem:[%s11 + $0x58] sm:$0xf]
        %v3180 = vld [vmem:[%s11 + $0x5c] sm:$0xf]
        %v3181 = vld [vmem:[%s11 + $0x60] sm:$0xf]
        %v3182 = vld [vmem:[%s11 + $0x64] sm:$0xf]
        %v3183 = vld [vmem:[%s11 + $0x68] sm:$0xf]
        %v3184 = vld [vmem:[%s11 + $0x6c] sm:$0xf]
        %v3185 = vld [vmem:[%s11 + $0x70] sm:$0xf]
        %v3186 = vld [vmem:[%s11 + $0x74] sm:$0xf]
        %v3187 = vld [vmem:[%s11 + $0x78] sm:$0xf]
        %v3188 = vld [vmem:[%s11 + $0x7c] sm:$0xf]
        %v3189 = vld [vmem:[%s12] sm:$0x1]
        %v3222 = vunpack.c.l.b16 %v3157
        %v3223 = vunpack.c.l.b16 %v3158
        %v3224 = vunpack.c.l.b16 %v3159
        %v3225 = vunpack.c.l.b16 %v3160
        %v3226 = vunpack.c.l.b16 %v3161
        %v3227 = vunpack.c.l.b16 %v3162
        %v3228 = vunpack.c.l.b16 %v3163
        %v3229 = vunpack.c.l.b16 %v3164
        %v3230 = vunpack.c.l.b16 %v3165
        %v3231 = vunpack.c.l.b16 %v3166
        %v3232 = vunpack.c.l.b16 %v3167
        %v3233 = vunpack.c.l.b16 %v3168
        %v3234 = vunpack.c.l.b16 %v3169
        %v3235 = vunpack.c.l.b16 %v3170
        %v3236 = vunpack.c.l.b16 %v3171
        %v3237 = vunpack.c.l.b16 %v3172
        %v3238 = vunpack.c.l.b16 %v3173
        %v3239 = vunpack.c.l.b16 %v3174
        %v3240 = vunpack.c.l.b16 %v3175
        %v3241 = vunpack.c.l.b16 %v3176
        %v3242 = vunpack.c.l.b16 %v3177
        %v3243 = vunpack.c.l.b16 %v3178
        %v3244 = vunpack.c.l.b16 %v3179
        %v3245 = vunpack.c.l.b16 %v3180
        %v3246 = vunpack.c.l.b16 %v3181
        %v3247 = vunpack.c.l.b16 %v3182
        %v3248 = vunpack.c.l.b16 %v3183
        %v3249 = vunpack.c.l.b16 %v3184
        %v3250 = vunpack.c.l.b16 %v3185
        %v3251 = vunpack.c.l.b16 %v3186
        %v3252 = vunpack.c.l.b16 %v3187
        %v3253 = vunpack.c.l.b16 %v3188
        %v3254 = vpack.c.b16 %v3223, %v3222
        %v3255 = vpack.c.b16 %v3225, %v3224
        %v3256 = vpack.c.b16 %v3227, %v3226
        %v3257 = vpack.c.b16 %v3229, %v3228
        %v3258 = vpack.c.b16 %v3231, %v3230
        %v3259 = vpack.c.b16 %v3233, %v3232
        %v3260 = vpack.c.b16 %v3235, %v3234
        %v3261 = vpack.c.b16 %v3237, %v3236
        %v3262 = vpack.c.b16 %v3239, %v3238
        %v3263 = vpack.c.b16 %v3241, %v3240
        %v3264 = vpack.c.b16 %v3243, %v3242
        %v3265 = vpack.c.b16 %v3245, %v3244
        %v3266 = vpack.c.b16 %v3247, %v3246
        %v3267 = vpack.c.b16 %v3249, %v3248
        %v3268 = vpack.c.b16 %v3251, %v3250
        %v3269 = vpack.c.b16 %v3253, %v3252
        %3286 = vmatprep.subr.bf16.mxu0 0
        %3287 = vmatpush1.bf16.msra.mxu0 %v3254
        %3288 = vmatprep.subr.bf16.mxu0 0
        %3289 = vmatpush1.bf16.msra.mxu0 %v3255
        %3290 = vmatprep.subr.bf16.mxu0 0
        %3291 = vmatpush1.bf16.msra.mxu0 %v3256
        %3292 = vmatprep.subr.bf16.mxu0 0
        %3293 = vmatpush1.bf16.msra.mxu0 %v3257
        %3294 = vmatprep.subr.bf16.mxu0 0
        %3295 = vmatpush1.bf16.msra.mxu0 %v3258
        %3296 = vmatprep.subr.bf16.mxu0 0
        %3297 = vmatpush1.bf16.msra.mxu0 %v3259
        %3298 = vmatprep.subr.bf16.mxu0 0
        %3299 = vmatpush1.bf16.msra.mxu0 %v3260
        %3300 = vmatprep.subr.bf16.mxu0 0
        %3301 = vmatpush1.bf16.msra.mxu0 %v3261
        %3302 = vmatprep.subr.bf16.mxu0 0
        %3303 = vmatpush1.bf16.msra.mxu0 %v3262
        %3304 = vmatprep.subr.bf16.mxu0 0
        %3305 = vmatpush1.bf16.msra.mxu0 %v3263
        %3306 = vmatprep.subr.bf16.mxu0 0
        %3307 = vmatpush1.bf16.msra.mxu0 %v3264
        %3308 = vmatprep.subr.bf16.mxu0 0
        %3309 = vmatpush1.bf16.msra.mxu0 %v3265
        %3310 = vmatprep.subr.bf16.mxu0 0
        %3311 = vmatpush1.bf16.msra.mxu0 %v3266
        %3312 = vmatprep.subr.bf16.mxu0 0
        %3313 = vmatpush1.bf16.msra.mxu0 %v3267
        %3314 = vmatprep.subr.bf16.mxu0 0
        %3315 = vmatpush1.bf16.msra.mxu0 %v3268
        %3316 = vmatprep.subr.bf16.mxu0 0
        %3317 = vmatpush1.bf16.msra.mxu0 %v3269
        %3318 = vmatprep.mubr.bf16.mxu0 %v3156
        %3319 = vmatmul.mubr.bf16.gmra.mrb[0].mxu0 %v3155
        %v3320 = vpop.f32.mrb[0].mxu0
        %v3321 = vadd.f32 %v3189, %v3320
        %v3322 = vpop.f32.mrb[0].mxu0
        %v3323 = vpop.f32.mrb[0].mxu0
        %v3324 = vpop.f32.mrb[0].mxu0
        %3325 = vdwg.mxu0
        %v3326 = vmax.f32 %v3321, 0.0
        %v3327 = vld [vmem:[%s12 + $0x1] sm:$0x1]
        %v3328 = vmul.f32 %v3326, %v3327
        %v3329 = vld [vmem:[%s12 + $0x2] sm:$0x1]
        %v3330 = vadd.f32 %v3328, %v3329
        %v3331 = vpack.c.bf16 %v3330, %v3330
        %v3332 = vld [vmem:[%s13] sm:$0xf]
        %v3333 = vld [vmem:[%s13 + $0x4] sm:$0xf]
        %v3334 = vld [vmem:[%s13 + $0x8] sm:$0xf]
        %v3335 = vld [vmem:[%s13 + $0xc] sm:$0xf]
        %v3336 = vld [vmem:[%s13 + $0x10] sm:$0xf]
        %v3337 = vld [vmem:[%s13 + $0x14] sm:$0xf]
        %v3338 = vld [vmem:[%s13 + $0x18] sm:$0xf]
        %v3339 = vld [vmem:[%s13 + $0x1c] sm:$0xf]
        %v3340 = vld [vmem:[%s14] sm:$0x1]
        %v3349 = vunpack.c.l.b16 %v3332
        %v3350 = vunpack.c.l.b16 %v3333
        %v3351 = vunpack.c.l.b16 %v3334
        %v3352 = vunpack.c.l.b16 %v3335
        %v3353 = vunpack.c.l.b16 %v3336
        %v3354 = vunpack.c.l.b16 %v3337
        %v3355 = vunpack.c.l.b16 %v3338
        %v3356 = vunpack.c.l.b16 %v3339
        %v3357 = vpack.c.b16 %v3350, %v3349
        %v3358 = vpack.c.b16 %v3352, %v3351
        %v3359 = vpack.c.b16 %v3354, %v3353
        %v3360 = vpack.c.b16 %v3356, %v3355
        %v3366 = vsel %vm1583, %v3331, 0
        %3368 = vmatprep.subr.bf16.mxu0 0
        %3369 = vmatpush1.bf16.msra.mxu0 %v3357
        %3370 = vmatprep.subr.bf16.mxu0 0
        %3371 = vmatpush1.bf16.msra.mxu0 %v3358
        %3372 = vmatprep.subr.bf16.mxu0 0
        %3373 = vmatpush1.bf16.msra.mxu0 %v3359
        %3374 = vmatprep.subr.bf16.mxu0 0
        %3375 = vmatpush1.bf16.msra.mxu0 %v3360
        %3376 = vmatprep.subr.bf16.mxu0 0
        %3377 = vmatpush1.bf16.msra.mxu0 0
        %3378 = vmatprep.subr.bf16.mxu0 0
        %3379 = vmatpush1.bf16.msra.mxu0 0
        %3380 = vmatprep.subr.bf16.mxu0 0
        %3381 = vmatpush1.bf16.msra.mxu0 0
        %3382 = vmatprep.subr.bf16.mxu0 0
        %3383 = vmatpush1.bf16.msra.mxu0 0
        %3384 = vmatprep.subr.bf16.mxu0 0
        %3385 = vmatpush1.bf16.msra.mxu0 0
        %3386 = vmatprep.subr.bf16.mxu0 0
        %3387 = vmatpush1.bf16.msra.mxu0 0
        %3388 = vmatprep.subr.bf16.mxu0 0
        %3389 = vmatpush1.bf16.msra.mxu0 0
        %3390 = vmatprep.subr.bf16.mxu0 0
        %3391 = vmatpush1.bf16.msra.mxu0 0
        %3392 = vmatprep.subr.bf16.mxu0 0
        %3393 = vmatpush1.bf16.msra.mxu0 0
        %3394 = vmatprep.subr.bf16.mxu0 0
        %3395 = vmatpush1.bf16.msra.mxu0 0
        %3396 = vmatprep.subr.bf16.mxu0 0
        %3397 = vmatpush1.bf16.msra.mxu0 0
        %3398 = vmatprep.subr.bf16.mxu0 0
        %3399 = vmatpush1.bf16.msra.mxu0 0
        %3400 = vmatprep.mubr.bf16.mxu0 0
        %3401 = vmatmul.mubr.bf16.gmra.mrb[0].mxu0 %v3366
        %v3402 = vpop.f32.mrb[0].mxu0
        %v3403 = vadd.f32 %v3340, %v3402
        %v3404 = vpop.f32.mrb[0].mxu0
        %v3405 = vpop.f32.mrb[0].mxu0
        %v3406 = vpop.f32.mrb[0].mxu0
        %3407 = vdwg.mxu0
        %vm3408 = vcmask 73728
        %3409 = vst.msk [vmem:[%s486] sm:$0x1] %vm3408, %v3403
        %s3410 = sand.u32 %s357, 1
        %s3411 = scalar_lea.sflag [#allocation6], %s3410
        %s3412 = sand.u32 %s357, 1
        %s3413 = scalar_lea.vmem [#allocation5], %s3412
        // Predicated region
        $region81: #{net_forward.1} parent=79 // pred_check
          %p3414 = pneg %p367
        $region82: #{net_forward.1} parent=79 // pred_check_branch
          %3416 = sbr.rel (%p3414) target = $region84
        $region83: #{net_forward.1} parent=79 // pred_region
          %s3418 = ssub.s32 16, 16
          %3419 = vsyncadd %s3411, %s3418
          %s3420 = smul.addr %s29, 16
          %s3421 = scalar_lea.hbm %s15, %s3420
          %s3423 = sshll.u32 %s3413, 4
          %s3424 = int_to_ptr.vmem [resolvable:$true] %s3423
          %3426 = dma.vmem_to_hbm [thread:$0]  %s3424, 16, %s3421, %s3411
        $region84: #{net_forward.1} parent=79 // pred_fallthru
          _
      $region80: #{net_forward.1} parent=5 // pred_fallthru
        _
      %p3427 = scmp.le.s32.totalorder 2, %s24
      // Predicated region
      $region85: #{net_forward.1} parent=5 // pred_check
        %p3428 = pneg %p3427
      $region86: #{net_forward.1} parent=5 // pred_check_branch
        %3430 = sbr.rel (%p3428) target = $region88
      $region87: #{net_forward.1} parent=5 // pred_region
        %s3431 = ssub.s32 %s24, 2
        // Predicated region
        $region89: #{net_forward.1} parent=87 // pred_check
          %p3432 = pneg %p373
        $region90: #{net_forward.1} parent=87 // pred_check_branch
          %3434 = sbr.rel (%p3432) target = $region92
        $region91: #{net_forward.1} parent=87 // pred_region
          %s3435 = sand.u32 %s358, 1
          %s3436 = scalar_lea.sflag [#allocation6], %s3435
          %s3437 = sand.u32 %s358, 1
          %s3438 = scalar_lea.vmem [#allocation5], %s3437
          %3439 = dma.done %s3436, 16
        $region92: #{net_forward.1} parent=87 // pred_fallthru
          _
      $region88: #{net_forward.1} parent=5 // pred_fallthru
        _
    $region6: #{net_forward.1} parent=1 // loop_footer
      %s28 = sadd.s32 1, %s24
    $region7: #{net_forward.1} parent=1 // loop_footer_branch
      %23 = sbr.rel target = $region3
    $region8: #{net_forward.1} parent=1 // loop_exit
      _
    %3440 = vsyncpa [#allocation6], 1
    %s3441 = scalar_lea.sflag [#allocation6], 1
    %3442 = vsyncpa %s3441, 1

</llo_original>
